<compile_context>
chip_gen: v5e
topology: v5e:2x2
jax: 0.10.0
libtpu: 0.0.40
codegen_flags: <defaults>
</compile_context>

<pallas_src>
import numpy as np
import jax
import jax.numpy as jnp
from jax.experimental import pallas as pl
from jax.experimental.pallas import tpu as pltpu

# ----------------------------------------------------------------------------
# Small synthetic geometry constants (the originals come from the Beijing config)
# ----------------------------------------------------------------------------
ANGLES = 8                      # beijingAngleNum
PLANES = 2                      # beijingPlanes
DET_W, DET_H = 8, 8             # beijingSubDetectorSize = [width, height]
VX, VY, VZ = 16, 16, 8          # beijingVolumeSize
SDD = 500.0                     # beijingSDD

W_TOTAL = DET_W * PLANES        # projWidth (conv width)   = 16
K_TAPS = W_TOTAL + 1            # ramp kernel taps         = 17
PAD = W_TOTAL // 2              # conv2d padding           = 8
ROWS = ANGLES * DET_H           # conv2d input height      = 64
NSINO = ANGLES * PLANES * DET_H * DET_W     # 1024
NVOX = VX * VY * VZ                         # 2048
SINO_SUB, SINO_LANE = 8, 128    # NSINO == 8 * 128 -> one f32 vreg
TN = 1024                       # volume tile (lanes) -> grid = (NVOX // TN,) = (2,)


# ----------------------------------------------------------------------------
# Deterministic parameter construction (mirrors the torch module __init__)
# ----------------------------------------------------------------------------
def _ramp_filter() -> np.ndarray:
    """Exact replica of BeijingGeometryWithFBP.__conv__ (1-D taps)."""
    proj_width = W_TOTAL
    filt = np.ones((proj_width + 1,), dtype=np.float32)
    mid = np.floor(proj_width / 2)
    for i in range(proj_width + 1):
        if (i - mid) % 2 == 0:
            filt[i] = 0.0
        else:
            filt[i] = -0.5 / (np.pi * np.pi * (i - mid) * (i - mid))
        if i == mid:
            filt[i] = 1.0 / 8.0
    return filt


def _cos_weight() -> np.ndarray:
    """Exact replica of __cosWeight__ (constructed but, as in the torch forward,
    never applied)."""
    h, w = DET_H, W_TOTAL
    mid = np.array([h, w], dtype=np.float64) / 2.0
    i = np.arange(h, dtype=np.float64)[:, None]
    j = np.arange(w, dtype=np.float64)[None, :]
    # index/mid pairing reproduced exactly as in the reference code
    cosine = SDD / np.sqrt(SDD ** 2 + (i - mid[1]) ** 2 + (j - mid[0]) ** 2)
    return np.broadcast_to(cosine, (1, 1, ANGLES, h, w)).astype(np.float32)


def _backprojection_operator() -> np.ndarray:
    """Deterministic dense linear operator A^T of shape (NSINO, NVOX).

    Rows are indexed in the (ANGLES, PLANES, DET_H, DET_W) order that
    projector.backward consumes.
    """
    # TODO(synk): projector.backward is an external CUDA extension (cone-beam
    # voxel-driven back-projection driven by per-view projection matrices);
    # modeled here as a deterministic dense linear operator applied on the MXU.
    s = np.arange(NSINO, dtype=np.float64) + 1.0
    v = np.arange(NVOX, dtype=np.float64) + 1.0
    a_t = np.cos(0.01 * np.outer(s, v)) / float(NSINO)
    return a_t.astype(np.float32)


def _ramp_toeplitz_blockdiag(ramp: np.ndarray) -> np.ndarray:
    """(128, 128) block-diagonal matrix implementing the zero-padded ramp conv on
    the flat sinogram layout: F = X @ Tbig convolves every contiguous 16-lane
    detector row independently (conv2d boundary zero padding folded in)."""
    t = np.zeros((W_TOTAL, W_TOTAL), dtype=np.float32)
    for c_in in range(W_TOTAL):
        for c_out in range(W_TOTAL):
            k = c_in - c_out + PAD
            if 0 <= k < K_TAPS:
                t[c_in, c_out] = ramp[k]
    return np.kron(np.eye(SINO_LANE // W_TOTAL, dtype=np.float32), t)


RAMP_NP = _ramp_filter()                 # (17,)
COS_WEIGHT_NP = _cos_weight()            # (1,1,ANGLES,DET_H,W_TOTAL) -- unused in forward
A_T_NP = _backprojection_operator()      # (NSINO, NVOX), rows in (A,P,H,W) order
LAMB_NP = np.array([1.0], dtype=np.float32)

T_BIG_NP = _ramp_toeplitz_blockdiag(RAMP_NP)        # (128, 128) f32

# Fold BackProjection's reshape(A,H,P,W).permute(0,2,1,3) into the constant
# operator's row order, so the kernel consumes the filtered sinogram in its
# natural flat order (A, H, W_TOTAL) == (A, H, P, W):
A_PERM_NP = (A_T_NP.reshape(ANGLES, PLANES, DET_H, DET_W, NVOX)
             .transpose(0, 2, 1, 3, 4)
             .reshape(NSINO, NVOX))
# First two axes are the (sublane, lane) split of the flat sinogram index.
A4_NP = A_PERM_NP.reshape(SINO_SUB, SINO_LANE, NVOX)      # (8, 128, 2048)


# ----------------------------------------------------------------------------
# Fused Pallas kernel: ramp filter (Toeplitz MXU matmul) + back-projection + lamb
# ----------------------------------------------------------------------------
def fused_fbp_kernel(lamb_ref, x_ref, t_ref, a_ref, out_ref):
    """One NVOX tile of:  lamb * backproject(ramp_filter(x)).

    lamb_ref: (1,)             f32  SMEM
    x_ref   : (8, 128)         f32  VMEM  flat sinogram, index i = s*128 + l
    t_ref   : (128, 128)       f32  VMEM  block-diagonal ramp Toeplitz matrix
    a_ref   : (8, 128, TN)     bf16 VMEM  row-permuted back-projection operator tile
    out_ref : (1, TN)          f32  VMEM  volume tile (lane-dense)
    """
    # ramp convolution (conv2d, stride 1, zero padding W/2): one MXU matmul on the
    # flat layout; 16-lane detector rows never mix (block-diagonal Toeplitz).
    filt = jnp.dot(x_ref[...], t_ref[...], preferred_element_type=jnp.float32)
    filt_bf16 = filt.astype(jnp.bfloat16)                       # (8, 128)

    # back-projection: vol = filt_flat @ A_perm, as 8 (1,128)@(128,TN) bf16
    # MXU matmuls with f32 accumulation (contraction split along sublanes).
    acc = jnp.zeros((1, TN), jnp.float32)
    for s in range(SINO_SUB):                                   # static, 8 rows
        acc = acc + jnp.dot(filt_bf16[s:s + 1, :], a_ref[s],
                            preferred_element_type=jnp.float32)

    out_ref[...] = lamb_ref[0] * acc                            # lamb * volume


def _fbp_pallas(lamb, x_flat, t_big, a4_bf16):
    return pl.pallas_call(
        fused_fbp_kernel,
        out_shape=jax.ShapeDtypeStruct((1, NVOX), jnp.float32),
        grid=(NVOX // TN,),
        in_specs=[
            pl.BlockSpec(memory_space=pltpu.MemorySpace.SMEM),            # lamb
            pl.BlockSpec((SINO_SUB, SINO_LANE), lambda j: (0, 0)),        # sinogram
            pl.BlockSpec((SINO_LANE, SINO_LANE), lambda j: (0, 0)),       # Toeplitz
            pl.BlockSpec((SINO_SUB, SINO_LANE, TN), lambda j: (0, 0, j)), # operator tile
        ],
        out_specs=pl.BlockSpec((1, TN), lambda j: (0, j)),
        compiler_params=pltpu.CompilerParams(
            dimension_semantics=("parallel",)),
    )(lamb, x_flat, t_big, a4_bf16)


@jax.jit
def beijing_geometry_with_fbp_forward(x, lamb, t_big, a4_bf16):
    """Forward pass of BeijingGeometryWithFBP.

    x: any shape holding ANGLES*DET_H*DET_W*PLANES f32 elements (canonically
       (1, 1, ANGLES*PLANES, DET_H, DET_W)), row-major, interpreted (as in the
       torch .view chain) as (ANGLES, DET_H, DET_W*PLANES).
    returns: volume of shape (1, 1, VZ, VY, VX) f32.
    """
    x_flat = x.astype(jnp.float32).reshape(SINO_SUB, SINO_LANE)  # free metadata reshape
    vol_row = _fbp_pallas(lamb, x_flat, t_big, a4_bf16)
    return vol_row.reshape(1, 1, VZ, VY, VX)


# ----------------------------------------------------------------------------
# Pure-numpy float32 reference (unfused, unfolded path) for validation
# ----------------------------------------------------------------------------
def _reference_forward_f32(x_np: np.ndarray) -> np.ndarray:
    residual = x_np.astype(np.float32).reshape(ROWS, W_TOTAL)
    padded = np.pad(residual, ((0, 0), (PAD, PAD)))
    filt = np.zeros_like(residual)
    for k in range(K_TAPS):
        filt += RAMP_NP[k] * padded[:, k:k + W_TOTAL]
    sino = (filt.reshape(ANGLES, DET_H, PLANES, DET_W)
            .transpose(0, 2, 1, 3).reshape(1, NSINO))
    vol = LAMB_NP[0] * (sino @ A_T_NP)
    return vol.reshape(1, 1, VZ, VY, VX)


# ----------------------------------------------------------------------------
# Demo
# ----------------------------------------------------------------------------
if __name__ == "__main__":
    key = jax.random.PRNGKey(0)
    # input sinogram in the split-plane layout: (1, 1, ANGLES*PLANES, DET_H, DET_W)
    x = jax.random.normal(key, (1, 1, ANGLES * PLANES, DET_H, DET_W), dtype=jnp.float32)

    lamb = jnp.asarray(LAMB_NP)
    t_big = jnp.asarray(T_BIG_NP)
    a4_bf16 = jnp.asarray(A4_NP).astype(jnp.bfloat16)   # 4 MiB streamed per call

    volume = beijing_geometry_with_fbp_forward(x, lamb, t_big, a4_bf16)
    volume = jax.block_until_ready(volume)

    assert volume.shape == (1, 1, VZ, VY, VX)
    assert volume.dtype == jnp.float32
    out_np = np.asarray(volume)
    assert np.all(np.isfinite(out_np))

    # validate the fused bf16 kernel against the unfused float32 reference
    ref = _reference_forward_f32(np.asarray(x))
    err = float(np.max(np.abs(out_np - ref)))
    scale = float(np.max(np.abs(ref)))
    assert err <= 1e-3 + 5e-2 * scale, f"mismatch: max|err|={err:.3e}, scale={scale:.3e}"

    print("KERNEL_OK")
</pallas_src>

<mosaic_0001>
module attributes {stable_mosaic.version = 11 : i64} {
  func.func @fused_fbp_kernel(%arg0: i32, %arg1: memref<1xf32, #tpu.memory_space<smem>>, %arg2: memref<8x128xf32, #tpu.memory_space<vmem>>, %arg3: memref<128x128xf32, #tpu.memory_space<vmem>>, %arg4: memref<8x128x1024xbf16, #tpu.memory_space<vmem>>, %arg5: memref<1x1024xf32, #tpu.memory_space<vmem>>) attributes {dimension_semantics = [#tpu.dimension_semantics<parallel>], iteration_bounds = array<i64: 2>, scalar_prefetch = 0 : i64, scratch_operands = 0 : i64, tpu.core_type = #tpu.core_type<tc>, window_params = [{transform_indices = @transform_0, window_bounds = array<i64: 1>}, {pipeline_mode = #tpu.pipeline_mode<synchronous>, transform_indices = @transform_1, window_bounds = array<i64: 8, 128>}, {pipeline_mode = #tpu.pipeline_mode<synchronous>, transform_indices = @transform_2, window_bounds = array<i64: 128, 128>}, {transform_indices = @transform_3, window_bounds = array<i64: 8, 128, 1024>}, {transform_indices = @transform_4, window_bounds = array<i64: 1, 1024>}]} {
    %c0 = arith.constant 0 : index
    %c0_0 = arith.constant 0 : index
    %0 = vector.load %arg2[%c0, %c0_0] : memref<8x128xf32, #tpu.memory_space<vmem>>, vector<8x128xf32>
    %c0_1 = arith.constant 0 : index
    %c0_2 = arith.constant 0 : index
    %1 = vector.load %arg3[%c0_1, %c0_2] : memref<128x128xf32, #tpu.memory_space<vmem>>, vector<128x128xf32>
    %cst = arith.constant dense<0.000000e+00> : vector<8x128xf32>
    %2 = tpu.matmul %0, %1, %cst {dimension_numbers = #tpu.dot_dimension_numbers<[1], [0], [0], [1], [0, 0, 1, 1], [], []>} : vector<8x128xf32>, vector<128x128xf32>, vector<8x128xf32> -> vector<8x128xf32>
    %3 = arith.truncf %2 : vector<8x128xf32> to vector<8x128xbf16>
    %cst_3 = arith.constant 0.000000e+00 : f32
    %4 = vector.broadcast %cst_3 : f32 to vector<1x1024xf32>
    %5 = vector.extract_strided_slice %3 {offsets = [0, 0], sizes = [1, 128], strides = [1, 1]} : vector<8x128xbf16> to vector<1x128xbf16>
    %c0_4 = arith.constant 0 : index
    %c0_5 = arith.constant 0 : index
    %c0_6 = arith.constant 0 : index
    %6 = vector.load %arg4[%c0_4, %c0_5, %c0_6] : memref<8x128x1024xbf16, #tpu.memory_space<vmem>>, vector<1x128x1024xbf16>
    %7 = vector.shape_cast %6 : vector<1x128x1024xbf16> to vector<128x1024xbf16>
    %cst_7 = arith.constant dense<0.000000e+00> : vector<1x1024xf32>
    %8 = tpu.matmul %5, %7, %cst_7 {dimension_numbers = #tpu.dot_dimension_numbers<[1], [0], [0], [1], [0, 0, 1, 1], [], []>} : vector<1x128xbf16>, vector<128x1024xbf16>, vector<1x1024xf32> -> vector<1x1024xf32>
    %9 = arith.addf %4, %8 : vector<1x1024xf32>
    %10 = vector.extract_strided_slice %3 {offsets = [1, 0], sizes = [1, 128], strides = [1, 1]} : vector<8x128xbf16> to vector<1x128xbf16>
    %c1 = arith.constant 1 : index
    %c0_8 = arith.constant 0 : index
    %c0_9 = arith.constant 0 : index
    %11 = vector.load %arg4[%c1, %c0_8, %c0_9] : memref<8x128x1024xbf16, #tpu.memory_space<vmem>>, vector<1x128x1024xbf16>
    %12 = vector.shape_cast %11 : vector<1x128x1024xbf16> to vector<128x1024xbf16>
    %cst_10 = arith.constant dense<0.000000e+00> : vector<1x1024xf32>
    %13 = tpu.matmul %10, %12, %cst_10 {dimension_numbers = #tpu.dot_dimension_numbers<[1], [0], [0], [1], [0, 0, 1, 1], [], []>} : vector<1x128xbf16>, vector<128x1024xbf16>, vector<1x1024xf32> -> vector<1x1024xf32>
    %14 = arith.addf %9, %13 : vector<1x1024xf32>
    %15 = vector.extract_strided_slice %3 {offsets = [2, 0], sizes = [1, 128], strides = [1, 1]} : vector<8x128xbf16> to vector<1x128xbf16>
    %c2 = arith.constant 2 : index
    %c0_11 = arith.constant 0 : index
    %c0_12 = arith.constant 0 : index
    %16 = vector.load %arg4[%c2, %c0_11, %c0_12] : memref<8x128x1024xbf16, #tpu.memory_space<vmem>>, vector<1x128x1024xbf16>
    %17 = vector.shape_cast %16 : vector<1x128x1024xbf16> to vector<128x1024xbf16>
    %cst_13 = arith.constant dense<0.000000e+00> : vector<1x1024xf32>
    %18 = tpu.matmul %15, %17, %cst_13 {dimension_numbers = #tpu.dot_dimension_numbers<[1], [0], [0], [1], [0, 0, 1, 1], [], []>} : vector<1x128xbf16>, vector<128x1024xbf16>, vector<1x1024xf32> -> vector<1x1024xf32>
    %19 = arith.addf %14, %18 : vector<1x1024xf32>
    %20 = vector.extract_strided_slice %3 {offsets = [3, 0], sizes = [1, 128], strides = [1, 1]} : vector<8x128xbf16> to vector<1x128xbf16>
    %c3 = arith.constant 3 : index
    %c0_14 = arith.constant 0 : index
    %c0_15 = arith.constant 0 : index
    %21 = vector.load %arg4[%c3, %c0_14, %c0_15] : memref<8x128x1024xbf16, #tpu.memory_space<vmem>>, vector<1x128x1024xbf16>
    %22 = vector.shape_cast %21 : vector<1x128x1024xbf16> to vector<128x1024xbf16>
    %cst_16 = arith.constant dense<0.000000e+00> : vector<1x1024xf32>
    %23 = tpu.matmul %20, %22, %cst_16 {dimension_numbers = #tpu.dot_dimension_numbers<[1], [0], [0], [1], [0, 0, 1, 1], [], []>} : vector<1x128xbf16>, vector<128x1024xbf16>, vector<1x1024xf32> -> vector<1x1024xf32>
    %24 = arith.addf %19, %23 : vector<1x1024xf32>
    %25 = vector.extract_strided_slice %3 {offsets = [4, 0], sizes = [1, 128], strides = [1, 1]} : vector<8x128xbf16> to vector<1x128xbf16>
    %c4 = arith.constant 4 : index
    %c0_17 = arith.constant 0 : index
    %c0_18 = arith.constant 0 : index
    %26 = vector.load %arg4[%c4, %c0_17, %c0_18] : memref<8x128x1024xbf16, #tpu.memory_space<vmem>>, vector<1x128x1024xbf16>
    %27 = vector.shape_cast %26 : vector<1x128x1024xbf16> to vector<128x1024xbf16>
    %cst_19 = arith.constant dense<0.000000e+00> : vector<1x1024xf32>
    %28 = tpu.matmul %25, %27, %cst_19 {dimension_numbers = #tpu.dot_dimension_numbers<[1], [0], [0], [1], [0, 0, 1, 1], [], []>} : vector<1x128xbf16>, vector<128x1024xbf16>, vector<1x1024xf32> -> vector<1x1024xf32>
    %29 = arith.addf %24, %28 : vector<1x1024xf32>
    %30 = vector.extract_strided_slice %3 {offsets = [5, 0], sizes = [1, 128], strides = [1, 1]} : vector<8x128xbf16> to vector<1x128xbf16>
    %c5 = arith.constant 5 : index
    %c0_20 = arith.constant 0 : index
    %c0_21 = arith.constant 0 : index
    %31 = vector.load %arg4[%c5, %c0_20, %c0_21] : memref<8x128x1024xbf16, #tpu.memory_space<vmem>>, vector<1x128x1024xbf16>
    %32 = vector.shape_cast %31 : vector<1x128x1024xbf16> to vector<128x1024xbf16>
    %cst_22 = arith.constant dense<0.000000e+00> : vector<1x1024xf32>
    %33 = tpu.matmul %30, %32, %cst_22 {dimension_numbers = #tpu.dot_dimension_numbers<[1], [0], [0], [1], [0, 0, 1, 1], [], []>} : vector<1x128xbf16>, vector<128x1024xbf16>, vector<1x1024xf32> -> vector<1x1024xf32>
    %34 = arith.addf %29, %33 : vector<1x1024xf32>
    %35 = vector.extract_strided_slice %3 {offsets = [6, 0], sizes = [1, 128], strides = [1, 1]} : vector<8x128xbf16> to vector<1x128xbf16>
    %c6 = arith.constant 6 : index
    %c0_23 = arith.constant 0 : index
    %c0_24 = arith.constant 0 : index
    %36 = vector.load %arg4[%c6, %c0_23, %c0_24] : memref<8x128x1024xbf16, #tpu.memory_space<vmem>>, vector<1x128x1024xbf16>
    %37 = vector.shape_cast %36 : vector<1x128x1024xbf16> to vector<128x1024xbf16>
    %cst_25 = arith.constant dense<0.000000e+00> : vector<1x1024xf32>
    %38 = tpu.matmul %35, %37, %cst_25 {dimension_numbers = #tpu.dot_dimension_numbers<[1], [0], [0], [1], [0, 0, 1, 1], [], []>} : vector<1x128xbf16>, vector<128x1024xbf16>, vector<1x1024xf32> -> vector<1x1024xf32>
    %39 = arith.addf %34, %38 : vector<1x1024xf32>
    %40 = vector.extract_strided_slice %3 {offsets = [7, 0], sizes = [1, 128], strides = [1, 1]} : vector<8x128xbf16> to vector<1x128xbf16>
    %c7 = arith.constant 7 : index
    %c0_26 = arith.constant 0 : index
    %c0_27 = arith.constant 0 : index
    %41 = vector.load %arg4[%c7, %c0_26, %c0_27] : memref<8x128x1024xbf16, #tpu.memory_space<vmem>>, vector<1x128x1024xbf16>
    %42 = vector.shape_cast %41 : vector<1x128x1024xbf16> to vector<128x1024xbf16>
    %cst_28 = arith.constant dense<0.000000e+00> : vector<1x1024xf32>
    %43 = tpu.matmul %40, %42, %cst_28 {dimension_numbers = #tpu.dot_dimension_numbers<[1], [0], [0], [1], [0, 0, 1, 1], [], []>} : vector<1x128xbf16>, vector<128x1024xbf16>, vector<1x1024xf32> -> vector<1x1024xf32>
    %44 = arith.addf %39, %43 : vector<1x1024xf32>
    %c0_29 = arith.constant 0 : index
    %45 = memref.load %arg1[%c0_29] : memref<1xf32, #tpu.memory_space<smem>>
    %46 = vector.broadcast %45 : f32 to vector<1x1024xf32>
    %47 = arith.mulf %46, %44 : vector<1x1024xf32>
    %c0_30 = arith.constant 0 : index
    %c0_31 = arith.constant 0 : index
    %48 = vector.load %arg5[%c0_30, %c0_31] : memref<1x1024xf32, #tpu.memory_space<vmem>>, vector<1x1024xf32>
    tpu.vector_store %arg5[%c0_30, %c0_31], %47 {strides = array<i32>} : memref<1x1024xf32, #tpu.memory_space<vmem>>, vector<1x1024xf32>,
    return
  }
  func.func @transform_0(%arg0: i32) -> i32 {
    %c0_i32 = arith.constant 0 : i32
    %c0_i32_0 = arith.constant 0 : i32
    return %c0_i32 : i32
  }
  func.func @transform_1(%arg0: i32) -> (i32, i32) {
    %c0_i32 = arith.constant 0 : i32
    %c0_i32_0 = arith.constant 0 : i32
    %c0_i32_1 = arith.constant 0 : i32
    return %c0_i32, %c0_i32_0 : i32, i32
  }
  func.func @transform_2(%arg0: i32) -> (i32, i32) {
    %c0_i32 = arith.constant 0 : i32
    %c0_i32_0 = arith.constant 0 : i32
    %c0_i32_1 = arith.constant 0 : i32
    return %c0_i32, %c0_i32_0 : i32, i32
  }
  func.func @transform_3(%arg0: i32) -> (i32, i32, i32) {
    %c0_i32 = arith.constant 0 : i32
    %c0_i32_0 = arith.constant 0 : i32
    %c0_i32_1 = arith.constant 0 : i32
    return %c0_i32, %c0_i32_0, %arg0 : i32, i32, i32
  }
  func.func @transform_4(%arg0: i32) -> (i32, i32) {
    %c0_i32 = arith.constant 0 : i32
    %c0_i32_0 = arith.constant 0 : i32
    return %c0_i32, %arg0 : i32, i32
  }
}

</mosaic_0001>

<llo_original>
// kernel: beijing_geometry_with_fbp_forward.1
$region0: #{beijing_geometry_with_fbp_forward.1}
  #allocation0 [shape = 'u32[]', space=smem, size = 0x4, offset = 0x4, fixed_abs, tag = 'smem constant byte address 0x4 - core index']
  #allocation1 [shape = 'u32[72,128]{1,0:T(1,128)}', space=vmem, size = 0x9000, scoped, tag = 'internal scratch']
  #allocation2 [shape = 'f32[1]{0:T(128)S(6)}', space=smem, size = 0x200, scoped, tag = 'scoped memory for beijing_geometry_with_fbp_forward.1']
  %s0 = inlined_call_operand.<no memory space> [shape: f32[1], index: 0, kind: input, shape index: {}]
  %s1 = inlined_call_operand.vmem [shape: f32[8,128], index: 1, kind: input, shape index: {}]
  %s2 = inlined_call_operand.hbm [shape: f32[128,128], index: 2, kind: input, shape index: {}]
  %s3 = inlined_call_operand.hbm [shape: bf16[8,128,2048], index: 3, kind: input, shape index: {}]
  %s4 = inlined_call_operand.vmem [shape: f32[1,2048], index: 4, kind: output, shape index: {}]
  %s5 = sld [smem:[#allocation0]]
  $region57: #{beijing_geometry_with_fbp_forward.1} parent=0
    _
  %s7 = ssub.s32 1, %s5
  %s8 = scalar_select 0, %s7, %s5
  %9 = sst [smem:[#allocation2]] %s0
  $region1: #{beijing_geometry_with_fbp_forward.1} parent=0
    #allocation3 [shape = 'u8[65536]{0}', space=vmem, size = 0x10000, scoped, tag = 'input window, operand 2, single buffered']
    #allocation4 [shape = 's32[2]{0}', space=sflag, size = 0x8, scoped, tag = 'scoped memory for beijing_geometry_with_fbp_forward.1']
    #allocation5 [shape = 'u8[4194304]{0}', space=vmem, size = 0x400000, scoped, tag = 'input window, operand 3']
    #allocation6 [shape = 's32[2]{0}', space=sflag, size = 0x8, scoped, tag = 'scoped memory for beijing_geometry_with_fbp_forward.1']
    %10 = vsyncpa [#allocation4], 0
    %11 = vsyncpa [#allocation6], 0
    %s12 = scalar_lea.sflag [#allocation6], 1
    %13 = vsyncpa %s12, 0
    loop: start=0, step=1, limit=4
    $region2: #{beijing_geometry_with_fbp_forward.1} parent=1 // loop_pre_header
      _
    $region3: #{beijing_geometry_with_fbp_forward.1} parent=1 // loop_header
      %s15 = sphi 0, %s19
      %p16 = scmp.ge.s32.totalorder %s15, 4
      %s23 = sphi 0, %s23
      %s25 = sphi 0, %s23
      %s26 = sphi 0, %s25
      %s40 = sphi 0, %s26
      %s44 = sphi 0, %s44
      %s46 = sphi 0, %s44
      %s47 = sphi 0, %s46
      %s61 = sphi 0, %s47
      %s65 = sphi 0, %s65
      %s67 = sphi 0, %s65
      %s68 = sphi 0, %s67
      %s82 = sphi 0, %s68
      %s88 = sphi 0, %s90
      %s91 = sphi 0, %s88
      %s92 = sphi 0, %s91
      %s108 = sphi 0, %s92
      %s114 = sphi 0, %s116
      %s117 = sphi 0, %s114
      %s118 = sphi 0, %s117
      %s134 = sphi 0, %s118
    $region4: #{beijing_geometry_with_fbp_forward.1} parent=1 // loop_header_branch
      %18 = sbr.rel (%p16) target = $region8
    $region5: #{beijing_geometry_with_fbp_forward.1} parent=1 // loop_body
      %s20 = ssub.s32 %s15, 1
      %s21 = ssub.s32 %s15, 2
      %s22 = sadd.s32 %s15, 1
      %s24 = sadd.s32 %s23, 1
      %p27 = scmp.eq.s32.totalorder %s15, 1
      %p28 = scmp.ne.s32.totalorder %s23, %s25
      %p29 = scmp.eq.s32.totalorder %s15, 0
      %p30 = por %p28, %p29
      %p31 = scmp.ne.s32.totalorder %s23, %s25
      %p32 = scmp.eq.s32.totalorder %s20, 1
      %p33 = por %p31, %p32
      %p34 = scmp.ne.s32.totalorder %s25, %s26
      %p35 = scmp.eq.s32.totalorder %s20, 0
      %p36 = por %p34, %p35
      %p37 = scmp.ne.s32.totalorder %s25, %s26
      %p38 = scmp.eq.s32.totalorder %s21, 1
      %p39 = por %p37, %p38
      %p41 = scmp.ne.s32.totalorder %s26, %s40
      %p42 = scmp.eq.s32.totalorder %s21, 0
      %p43 = por %p41, %p42
      %s45 = sadd.s32 %s44, 1
      %p48 = scmp.eq.s32.totalorder %s15, 1
      %p49 = scmp.ne.s32.totalorder %s44, %s46
      %p50 = scmp.eq.s32.totalorder %s15, 0
      %p51 = por %p49, %p50
      %p52 = scmp.ne.s32.totalorder %s44, %s46
      %p53 = scmp.eq.s32.totalorder %s20, 1
      %p54 = por %p52, %p53
      %p55 = scmp.ne.s32.totalorder %s46, %s47
      %p56 = scmp.eq.s32.totalorder %s20, 0
      %p57 = por %p55, %p56
      %p58 = scmp.ne.s32.totalorder %s46, %s47
      %p59 = scmp.eq.s32.totalorder %s21, 1
      %p60 = por %p58, %p59
      %p62 = scmp.ne.s32.totalorder %s47, %s61
      %p63 = scmp.eq.s32.totalorder %s21, 0
      %p64 = por %p62, %p63
      %s66 = sadd.s32 %s65, 1
      %p69 = scmp.eq.s32.totalorder %s15, 1
      %p70 = scmp.ne.s32.totalorder %s65, %s67
      %p71 = scmp.eq.s32.totalorder %s15, 0
      %p72 = por %p70, %p71
      %p73 = scmp.ne.s32.totalorder %s65, %s67
      %p74 = scmp.eq.s32.totalorder %s20, 1
      %p75 = por %p73, %p74
      %p76 = scmp.ne.s32.totalorder %s67, %s68
      %p77 = scmp.eq.s32.totalorder %s20, 0
      %p78 = por %p76, %p77
      %p79 = scmp.ne.s32.totalorder %s67, %s68
      %p80 = scmp.eq.s32.totalorder %s21, 1
      %p81 = por %p79, %p80
      %p83 = scmp.ne.s32.totalorder %s68, %s82
      %p84 = scmp.eq.s32.totalorder %s21, 0
      %p85 = por %p83, %p84
      %s86 = ssub.s32 %s15, %s22
      %p87 = scmp.eq.s32.totalorder %s86, 0
      %s89 = sadd.s32 %s88, 1
      %s90 = scalar_select %p87, %s88, %s89
      %p93 = pneg %p87
      %p94 = scmp.eq.s32.totalorder %s15, 1
      %p95 = por %p93, %p94
      %p96 = scmp.ne.s32.totalorder %s88, %s91
      %p97 = scmp.eq.s32.totalorder %s15, 0
      %p98 = por %p96, %p97
      %p99 = scmp.ne.s32.totalorder %s88, %s91
      %p100 = scmp.eq.s32.totalorder %s20, 1
      %p101 = por %p99, %p100
      %p102 = scmp.ne.s32.totalorder %s91, %s92
      %p103 = scmp.eq.s32.totalorder %s20, 0
      %p104 = por %p102, %p103
      %p105 = scmp.ne.s32.totalorder %s91, %s92
      %p106 = scmp.eq.s32.totalorder %s21, 1
      %p107 = por %p105, %p106
      %p109 = scmp.ne.s32.totalorder %s92, %s108
      %p110 = scmp.eq.s32.totalorder %s21, 0
      %p111 = por %p109, %p110
      %s112 = ssub.s32 %s15, %s22
      %p113 = scmp.eq.s32.totalorder %s112, 0
      %s115 = sadd.s32 %s114, 1
      %s116 = scalar_select %p113, %s114, %s115
      %p119 = pneg %p113
      %p120 = scmp.eq.s32.totalorder %s15, 1
      %p121 = por %p119, %p120
      %p122 = scmp.ne.s32.totalorder %s114, %s117
      %p123 = scmp.eq.s32.totalorder %s15, 0
      %p124 = por %p122, %p123
      %p125 = scmp.ne.s32.totalorder %s114, %s117
      %p126 = scmp.eq.s32.totalorder %s20, 1
      %p127 = por %p125, %p126
      %p128 = scmp.ne.s32.totalorder %s117, %s118
      %p129 = scmp.eq.s32.totalorder %s20, 0
      %p130 = por %p128, %p129
      %p131 = scmp.ne.s32.totalorder %s117, %s118
      %p132 = scmp.eq.s32.totalorder %s21, 1
      %p133 = por %p131, %p132
      %p135 = scmp.ne.s32.totalorder %s118, %s134
      %p136 = scmp.eq.s32.totalorder %s21, 0
      %p137 = por %p135, %p136
      %p138 = scmp.le.s32.totalorder 1, %s15
      %p139 = scmp.lt.s32.totalorder %s15, 3
      %p140 = pnand %p138, %p139
      %p141 = pneg %p140
      // Predicated region
      $region9: #{beijing_geometry_with_fbp_forward.1} parent=5 // pred_check
        _
      $region10: #{beijing_geometry_with_fbp_forward.1} parent=5 // pred_check_branch
        %143 = sbr.rel (%p140) target = $region12
      $region11: #{beijing_geometry_with_fbp_forward.1} parent=5 // pred_region
        %s144 = ssub.s32 %s15, 1
        // Predicated region
        $region13: #{beijing_geometry_with_fbp_forward.1} parent=11 // pred_check
          %p145 = pneg %p36
        $region14: #{beijing_geometry_with_fbp_forward.1} parent=11 // pred_check_branch
          %147 = sbr.rel (%p145) target = $region16
        $region15: #{beijing_geometry_with_fbp_forward.1} parent=11 // pred_region
          _
        $region16: #{beijing_geometry_with_fbp_forward.1} parent=11 // pred_fallthru
          _
        // Predicated region
        $region17: #{beijing_geometry_with_fbp_forward.1} parent=11 // pred_check
          %p148 = pneg %p57
        $region18: #{beijing_geometry_with_fbp_forward.1} parent=11 // pred_check_branch
          %150 = sbr.rel (%p148) target = $region20
        $region19: #{beijing_geometry_with_fbp_forward.1} parent=11 // pred_region
          _
        $region20: #{beijing_geometry_with_fbp_forward.1} parent=11 // pred_fallthru
          _
        // Predicated region
        $region21: #{beijing_geometry_with_fbp_forward.1} parent=11 // pred_check
          %p151 = pneg %p78
        $region22: #{beijing_geometry_with_fbp_forward.1} parent=11 // pred_check_branch
          %153 = sbr.rel (%p151) target = $region24
        $region23: #{beijing_geometry_with_fbp_forward.1} parent=11 // pred_region
          %155 = vsyncadd [#allocation4], 0
          %s156 = sshll.u32 %s2, 4
          %s157 = int_to_ptr.hbm [resolvable:$true] %s156
          %s158 = sshll.u32 [#allocation3], 4
          %s159 = int_to_ptr.vmem [resolvable:$true] %s158
          %164 = dma.hbm_to_vmem [thread:$0]  %s157, 2048, %s159, [#allocation4], 128, 128, 8
        $region24: #{beijing_geometry_with_fbp_forward.1} parent=11 // pred_fallthru
          _
      $region12: #{beijing_geometry_with_fbp_forward.1} parent=5 // pred_fallthru
        _
      %p165 = scmp.lt.s32.totalorder %s15, 2
      // Predicated region
      $region25: #{beijing_geometry_with_fbp_forward.1} parent=5 // pred_check
        %p166 = pneg %p165
      $region26: #{beijing_geometry_with_fbp_forward.1} parent=5 // pred_check_branch
        %168 = sbr.rel (%p166) target = $region28
      $region27: #{beijing_geometry_with_fbp_forward.1} parent=5 // pred_region
        // Predicated region
        $region29: #{beijing_geometry_with_fbp_forward.1} parent=27 // pred_check
          %p169 = pneg %p98
        $region30: #{beijing_geometry_with_fbp_forward.1} parent=27 // pred_check_branch
          %171 = sbr.rel (%p169) target = $region32
        $region31: #{beijing_geometry_with_fbp_forward.1} parent=27 // pred_region
          %s172 = sand.u32 %s88, 1
          %s173 = scalar_lea.sflag [#allocation6], %s172
          %s174 = sand.u32 %s88, 1
          %s175 = smul.addr %s174, 4096
          %s176 = scalar_lea.vmem [#allocation5], %s175
          %s177 = smul.u32 8, %s15
          %179 = vsyncadd %s173, 0
          %s180 = smul.addr %s177, 4
          %s181 = scalar_lea.hbm %s3, %s180
          %s182 = sshll.u32 %s181, 4
          %s183 = int_to_ptr.hbm [resolvable:$true] %s182
          %s184 = sshll.u32 %s176, 4
          %s185 = int_to_ptr.vmem [resolvable:$true] %s184
          %190 = dma.hbm_to_vmem [thread:$0]  %s183, 65536, %s185, %s173, 1024, 512, 32
        $region32: #{beijing_geometry_with_fbp_forward.1} parent=27 // pred_fallthru
          _
      $region28: #{beijing_geometry_with_fbp_forward.1} parent=5 // pred_fallthru
        _
      %p191 = scmp.le.s32.totalorder 1, %s15
      %p192 = scmp.lt.s32.totalorder %s15, 3
      %p193 = pnand %p191, %p192
      %p194 = pneg %p193
      // Predicated region
      $region33: #{beijing_geometry_with_fbp_forward.1} parent=5 // pred_check
        _
      $region34: #{beijing_geometry_with_fbp_forward.1} parent=5 // pred_check_branch
        %196 = sbr.rel (%p193) target = $region36
      $region35: #{beijing_geometry_with_fbp_forward.1} parent=5 // pred_region
        %s197 = ssub.s32 %s15, 1
        // Predicated region
        $region37: #{beijing_geometry_with_fbp_forward.1} parent=35 // pred_check
          %p198 = pneg %p78
        $region38: #{beijing_geometry_with_fbp_forward.1} parent=35 // pred_check_branch
          %200 = sbr.rel (%p198) target = $region40
        $region39: #{beijing_geometry_with_fbp_forward.1} parent=35 // pred_region
          %202 = dma.done [#allocation4], 2048
        $region40: #{beijing_geometry_with_fbp_forward.1} parent=35 // pred_fallthru
          _
        %s203 = sand.u32 %s91, 1
        %s204 = scalar_lea.sflag [#allocation6], %s203
        %s205 = sand.u32 %s91, 1
        %s206 = smul.addr %s205, 4096
        %s207 = scalar_lea.vmem [#allocation5], %s206
        // Predicated region
        $region41: #{beijing_geometry_with_fbp_forward.1} parent=35 // pred_check
          %p208 = pneg %p104
        $region42: #{beijing_geometry_with_fbp_forward.1} parent=35 // pred_check_branch
          %210 = sbr.rel (%p208) target = $region44
        $region43: #{beijing_geometry_with_fbp_forward.1} parent=35 // pred_region
          %212 = dma.done %s204, 65536
        $region44: #{beijing_geometry_with_fbp_forward.1} parent=35 // pred_fallthru
          _
        %p213 = pneg %p36
        %p214 = pneg %p33
        %p215 = pneg %p57
        %p216 = pneg %p54
        %p217 = pneg %p78
        %p218 = pneg %p75
        %s219 = sand.u32 %s91, 1
        %s220 = scalar_lea.sflag [#allocation6], %s219
        %s221 = sand.u32 %s91, 1
        %s222 = smul.addr %s221, 4096
        %s223 = scalar_lea.vmem [#allocation5], %s222
        %p224 = pneg %p104
        %p225 = pneg %p101
        %p226 = pneg %p130
        %p227 = pneg %p127
        %s228 = smul.u32 8, %s20
        %p229 = scmp.lt.s32.totalorder %s228, 15
        %s230 = scalar_select %p229, %s228, 15
        %s231 = scalar_lea.vmem %s4, %s230
        %s232 = smul.u32 8, %s20
        %s233 = smul.u32 8, %s20
        %p234 = scmp.lt.s32.totalorder %s233, 15
        %s235 = scalar_select %p234, %s233, 15
        %s236 = scalar_lea.vmem %s4, %s235
        %s237 = smul.u32 8, %s20
        %v238 = vld [vmem:[%s1] sm:$0xff]
        %v239 = vld [vmem:[#allocation3] sm:$0xff]
        %v240 = vld [vmem:[#allocation3 + $0x8] sm:$0xff]
        %v241 = vld [vmem:[#allocation3 + $0x10] sm:$0xff]
        %v242 = vld [vmem:[#allocation3 + $0x18] sm:$0xff]
        %v243 = vld [vmem:[#allocation3 + $0x20] sm:$0xff]
        %v244 = vld [vmem:[#allocation3 + $0x28] sm:$0xff]
        %v245 = vld [vmem:[#allocation3 + $0x30] sm:$0xff]
        %v246 = vld [vmem:[#allocation3 + $0x38] sm:$0xff]
        %v247 = vld [vmem:[#allocation3 + $0x40] sm:$0xff]
        %v248 = vld [vmem:[#allocation3 + $0x48] sm:$0xff]
        %v249 = vld [vmem:[#allocation3 + $0x50] sm:$0xff]
        %v250 = vld [vmem:[#allocation3 + $0x58] sm:$0xff]
        %v251 = vld [vmem:[#allocation3 + $0x60] sm:$0xff]
        %v252 = vld [vmem:[#allocation3 + $0x68] sm:$0xff]
        %v253 = vld [vmem:[#allocation3 + $0x70] sm:$0xff]
        %v254 = vld [vmem:[#allocation3 + $0x78] sm:$0xff]
        %255 = vmatpush.msra.mxu0 %v254
        %256 = vmatpush.msra.mxu0 %v253
        %257 = vmatpush.msra.mxu0 %v252
        %258 = vmatpush.msra.mxu0 %v251
        %259 = vmatpush.msra.mxu0 %v250
        %260 = vmatpush.msra.mxu0 %v249
        %261 = vmatpush.msra.mxu0 %v248
        %262 = vmatpush.msra.mxu0 %v247
        %263 = vmatpush.msra.mxu0 %v246
        %264 = vmatpush.msra.mxu0 %v245
        %265 = vmatpush.msra.mxu0 %v244
        %266 = vmatpush.msra.mxu0 %v243
        %267 = vmatpush.msra.mxu0 %v242
        %268 = vmatpush.msra.mxu0 %v241
        %269 = vmatpush.msra.mxu0 %v240
        %270 = vmatpush.msra.mxu0 %v239
        %271 = vmatmul.f32.gmra.mxu0 %v238
        %v272 = vpop.f32.mrf.mxu0
        %v273 = vadd.f32 0.0, %v272
        %274 = vdwg.mxu0
        %v275 = vpack.c.bf16 %v273, %v273
        %v276 = vld [vmem:[%s207] sm:$0xff]
        %v277 = vld [vmem:[%s207 + $0x8] sm:$0xff]
        %v278 = vld [vmem:[%s207 + $0x10] sm:$0xff]
        %v279 = vld [vmem:[%s207 + $0x18] sm:$0xff]
        %v280 = vld [vmem:[%s207 + $0x20] sm:$0xff]
        %v281 = vld [vmem:[%s207 + $0x28] sm:$0xff]
        %v282 = vld [vmem:[%s207 + $0x30] sm:$0xff]
        %v283 = vld [vmem:[%s207 + $0x38] sm:$0xff]
        %v284 = vld [vmem:[%s207 + $0x40] sm:$0xff]
        %v285 = vld [vmem:[%s207 + $0x48] sm:$0xff]
        %v286 = vld [vmem:[%s207 + $0x50] sm:$0xff]
        %v287 = vld [vmem:[%s207 + $0x58] sm:$0xff]
        %v288 = vld [vmem:[%s207 + $0x60] sm:$0xff]
        %v289 = vld [vmem:[%s207 + $0x68] sm:$0xff]
        %v290 = vld [vmem:[%s207 + $0x70] sm:$0xff]
        %v291 = vld [vmem:[%s207 + $0x78] sm:$0xff]
        %v292 = vld [vmem:[%s207 + $0x80] sm:$0xff]
        %v293 = vld [vmem:[%s207 + $0x88] sm:$0xff]
        %v294 = vld [vmem:[%s207 + $0x90] sm:$0xff]
        %v295 = vld [vmem:[%s207 + $0x98] sm:$0xff]
        %v296 = vld [vmem:[%s207 + $0xa0] sm:$0xff]
        %v297 = vld [vmem:[%s207 + $0xa8] sm:$0xff]
        %v298 = vld [vmem:[%s207 + $0xb0] sm:$0xff]
        %v299 = vld [vmem:[%s207 + $0xb8] sm:$0xff]
        %v300 = vld [vmem:[%s207 + $0xc0] sm:$0xff]
        %v301 = vld [vmem:[%s207 + $0xc8] sm:$0xff]
        %v302 = vld [vmem:[%s207 + $0xd0] sm:$0xff]
        %v303 = vld [vmem:[%s207 + $0xd8] sm:$0xff]
        %v304 = vld [vmem:[%s207 + $0xe0] sm:$0xff]
        %v305 = vld [vmem:[%s207 + $0xe8] sm:$0xff]
        %v306 = vld [vmem:[%s207 + $0xf0] sm:$0xff]
        %v307 = vld [vmem:[%s207 + $0xf8] sm:$0xff]
        %v308 = vld [vmem:[%s207 + $0x100] sm:$0xff]
        %v309 = vld [vmem:[%s207 + $0x108] sm:$0xff]
        %v310 = vld [vmem:[%s207 + $0x110] sm:$0xff]
        %v311 = vld [vmem:[%s207 + $0x118] sm:$0xff]
        %v312 = vld [vmem:[%s207 + $0x120] sm:$0xff]
        %v313 = vld [vmem:[%s207 + $0x128] sm:$0xff]
        %v314 = vld [vmem:[%s207 + $0x130] sm:$0xff]
        %v315 = vld [vmem:[%s207 + $0x138] sm:$0xff]
        %v316 = vld [vmem:[%s207 + $0x140] sm:$0xff]
        %v317 = vld [vmem:[%s207 + $0x148] sm:$0xff]
        %v318 = vld [vmem:[%s207 + $0x150] sm:$0xff]
        %v319 = vld [vmem:[%s207 + $0x158] sm:$0xff]
        %v320 = vld [vmem:[%s207 + $0x160] sm:$0xff]
        %v321 = vld [vmem:[%s207 + $0x168] sm:$0xff]
        %v322 = vld [vmem:[%s207 + $0x170] sm:$0xff]
        %v323 = vld [vmem:[%s207 + $0x178] sm:$0xff]
        %v324 = vld [vmem:[%s207 + $0x180] sm:$0xff]
        %v325 = vld [vmem:[%s207 + $0x188] sm:$0xff]
        %v326 = vld [vmem:[%s207 + $0x190] sm:$0xff]
        %v327 = vld [vmem:[%s207 + $0x198] sm:$0xff]
        %v328 = vld [vmem:[%s207 + $0x1a0] sm:$0xff]
        %v329 = vld [vmem:[%s207 + $0x1a8] sm:$0xff]
        %v330 = vld [vmem:[%s207 + $0x1b0] sm:$0xff]
        %v331 = vld [vmem:[%s207 + $0x1b8] sm:$0xff]
        %v332 = vld [vmem:[%s207 + $0x1c0] sm:$0xff]
        %v333 = vld [vmem:[%s207 + $0x1c8] sm:$0xff]
        %v334 = vld [vmem:[%s207 + $0x1d0] sm:$0xff]
        %v335 = vld [vmem:[%s207 + $0x1d8] sm:$0xff]
        %v336 = vld [vmem:[%s207 + $0x1e0] sm:$0xff]
        %v337 = vld [vmem:[%s207 + $0x1e8] sm:$0xff]
        %v338 = vld [vmem:[%s207 + $0x1f0] sm:$0xff]
        %v339 = vld [vmem:[%s207 + $0x1f8] sm:$0xff]
        %s340 = scalar_lea.vmem %s207, 512 [#allocation5]
        %v341 = vld [vmem:[%s340] sm:$0xff]
        %v342 = vld [vmem:[%s340 + $0x8] sm:$0xff]
        %v343 = vld [vmem:[%s340 + $0x10] sm:$0xff]
        %v344 = vld [vmem:[%s340 + $0x18] sm:$0xff]
        %v345 = vld [vmem:[%s340 + $0x20] sm:$0xff]
        %v346 = vld [vmem:[%s340 + $0x28] sm:$0xff]
        %v347 = vld [vmem:[%s340 + $0x30] sm:$0xff]
        %v348 = vld [vmem:[%s340 + $0x38] sm:$0xff]
        %v349 = vld [vmem:[%s340 + $0x40] sm:$0xff]
        %v350 = vld [vmem:[%s340 + $0x48] sm:$0xff]
        %v351 = vld [vmem:[%s340 + $0x50] sm:$0xff]
        %v352 = vld [vmem:[%s340 + $0x58] sm:$0xff]
        %v353 = vld [vmem:[%s340 + $0x60] sm:$0xff]
        %v354 = vld [vmem:[%s340 + $0x68] sm:$0xff]
        %v355 = vld [vmem:[%s340 + $0x70] sm:$0xff]
        %v356 = vld [vmem:[%s340 + $0x78] sm:$0xff]
        %v357 = vld [vmem:[%s340 + $0x80] sm:$0xff]
        %v358 = vld [vmem:[%s340 + $0x88] sm:$0xff]
        %v359 = vld [vmem:[%s340 + $0x90] sm:$0xff]
        %v360 = vld [vmem:[%s340 + $0x98] sm:$0xff]
        %v361 = vld [vmem:[%s340 + $0xa0] sm:$0xff]
        %v362 = vld [vmem:[%s340 + $0xa8] sm:$0xff]
        %v363 = vld [vmem:[%s340 + $0xb0] sm:$0xff]
        %v364 = vld [vmem:[%s340 + $0xb8] sm:$0xff]
        %v365 = vld [vmem:[%s340 + $0xc0] sm:$0xff]
        %v366 = vld [vmem:[%s340 + $0xc8] sm:$0xff]
        %v367 = vld [vmem:[%s340 + $0xd0] sm:$0xff]
        %v368 = vld [vmem:[%s340 + $0xd8] sm:$0xff]
        %v369 = vld [vmem:[%s340 + $0xe0] sm:$0xff]
        %v370 = vld [vmem:[%s340 + $0xe8] sm:$0xff]
        %v371 = vld [vmem:[%s340 + $0xf0] sm:$0xff]
        %v372 = vld [vmem:[%s340 + $0xf8] sm:$0xff]
        %v373 = vld [vmem:[%s340 + $0x100] sm:$0xff]
        %v374 = vld [vmem:[%s340 + $0x108] sm:$0xff]
        %v375 = vld [vmem:[%s340 + $0x110] sm:$0xff]
        %v376 = vld [vmem:[%s340 + $0x118] sm:$0xff]
        %v377 = vld [vmem:[%s340 + $0x120] sm:$0xff]
        %v378 = vld [vmem:[%s340 + $0x128] sm:$0xff]
        %v379 = vld [vmem:[%s340 + $0x130] sm:$0xff]
        %v380 = vld [vmem:[%s340 + $0x138] sm:$0xff]
        %v381 = vld [vmem:[%s340 + $0x140] sm:$0xff]
        %v382 = vld [vmem:[%s340 + $0x148] sm:$0xff]
        %v383 = vld [vmem:[%s340 + $0x150] sm:$0xff]
        %v384 = vld [vmem:[%s340 + $0x158] sm:$0xff]
        %v385 = vld [vmem:[%s340 + $0x160] sm:$0xff]
        %v386 = vld [vmem:[%s340 + $0x168] sm:$0xff]
        %v387 = vld [vmem:[%s340 + $0x170] sm:$0xff]
        %v388 = vld [vmem:[%s340 + $0x178] sm:$0xff]
        %v389 = vld [vmem:[%s340 + $0x180] sm:$0xff]
        %v390 = vld [vmem:[%s340 + $0x188] sm:$0xff]
        %v391 = vld [vmem:[%s340 + $0x190] sm:$0xff]
        %v392 = vld [vmem:[%s340 + $0x198] sm:$0xff]
        %v393 = vld [vmem:[%s340 + $0x1a0] sm:$0xff]
        %v394 = vld [vmem:[%s340 + $0x1a8] sm:$0xff]
        %v395 = vld [vmem:[%s340 + $0x1b0] sm:$0xff]
        %v396 = vld [vmem:[%s340 + $0x1b8] sm:$0xff]
        %v397 = vld [vmem:[%s340 + $0x1c0] sm:$0xff]
        %v398 = vld [vmem:[%s340 + $0x1c8] sm:$0xff]
        %v399 = vld [vmem:[%s340 + $0x1d0] sm:$0xff]
        %v400 = vld [vmem:[%s340 + $0x1d8] sm:$0xff]
        %v401 = vld [vmem:[%s340 + $0x1e0] sm:$0xff]
        %v402 = vld [vmem:[%s340 + $0x1e8] sm:$0xff]
        %v403 = vld [vmem:[%s340 + $0x1f0] sm:$0xff]
        %v404 = vld [vmem:[%s340 + $0x1f8] sm:$0xff]
        %v406 = vunpack.c.l.b16 %v275
        %v407 = vpack.c.b16 %v406, %v406
        %v409 = vshrl.u32 %v407, 16
        %v476 = vunpack.c.l.b16 %v341
        %v477 = vunpack.c.h.b16 %v341
        %v478 = vunpack.c.l.b16 %v342
        %v479 = vunpack.c.h.b16 %v342
        %v480 = vunpack.c.l.b16 %v343
        %v481 = vunpack.c.h.b16 %v343
        %v482 = vunpack.c.l.b16 %v344
        %v483 = vunpack.c.h.b16 %v344
        %v484 = vunpack.c.l.b16 %v345
        %v485 = vunpack.c.h.b16 %v345
        %v486 = vunpack.c.l.b16 %v346
        %v487 = vunpack.c.h.b16 %v346
        %v488 = vunpack.c.l.b16 %v347
        %v489 = vunpack.c.h.b16 %v347
        %v490 = vunpack.c.l.b16 %v348
        %v491 = vunpack.c.h.b16 %v348
        %v492 = vunpack.c.l.b16 %v349
        %v493 = vunpack.c.h.b16 %v349
        %v494 = vunpack.c.l.b16 %v350
        %v495 = vunpack.c.h.b16 %v350
        %v496 = vunpack.c.l.b16 %v351
        %v497 = vunpack.c.h.b16 %v351
        %v498 = vunpack.c.l.b16 %v352
        %v499 = vunpack.c.h.b16 %v352
        %v500 = vunpack.c.l.b16 %v353
        %v501 = vunpack.c.h.b16 %v353
        %v502 = vunpack.c.l.b16 %v354
        %v503 = vunpack.c.h.b16 %v354
        %v504 = vunpack.c.l.b16 %v355
        %v505 = vunpack.c.h.b16 %v355
        %v506 = vunpack.c.l.b16 %v356
        %v507 = vunpack.c.h.b16 %v356
        %v508 = vunpack.c.l.b16 %v357
        %v509 = vunpack.c.h.b16 %v357
        %v510 = vunpack.c.l.b16 %v358
        %v511 = vunpack.c.h.b16 %v358
        %v512 = vunpack.c.l.b16 %v359
        %v513 = vunpack.c.h.b16 %v359
        %v514 = vunpack.c.l.b16 %v360
        %v515 = vunpack.c.h.b16 %v360
        %v516 = vunpack.c.l.b16 %v361
        %v517 = vunpack.c.h.b16 %v361
        %v518 = vunpack.c.l.b16 %v362
        %v519 = vunpack.c.h.b16 %v362
        %v520 = vunpack.c.l.b16 %v363
        %v521 = vunpack.c.h.b16 %v363
        %v522 = vunpack.c.l.b16 %v364
        %v523 = vunpack.c.h.b16 %v364
        %v524 = vunpack.c.l.b16 %v365
        %v525 = vunpack.c.h.b16 %v365
        %v526 = vunpack.c.l.b16 %v366
        %v527 = vunpack.c.h.b16 %v366
        %v528 = vunpack.c.l.b16 %v367
        %v529 = vunpack.c.h.b16 %v367
        %v530 = vunpack.c.l.b16 %v368
        %v531 = vunpack.c.h.b16 %v368
        %v532 = vunpack.c.l.b16 %v369
        %v533 = vunpack.c.h.b16 %v369
        %v534 = vunpack.c.l.b16 %v370
        %v535 = vunpack.c.h.b16 %v370
        %v536 = vunpack.c.l.b16 %v371
        %v537 = vunpack.c.h.b16 %v371
        %v538 = vunpack.c.l.b16 %v372
        %v539 = vunpack.c.h.b16 %v372
        %v540 = vunpack.c.l.b16 %v373
        %v541 = vunpack.c.h.b16 %v373
        %v542 = vunpack.c.l.b16 %v374
        %v543 = vunpack.c.h.b16 %v374
        %v544 = vunpack.c.l.b16 %v375
        %v545 = vunpack.c.h.b16 %v375
        %v546 = vunpack.c.l.b16 %v376
        %v547 = vunpack.c.h.b16 %v376
        %v548 = vunpack.c.l.b16 %v377
        %v549 = vunpack.c.h.b16 %v377
        %v550 = vunpack.c.l.b16 %v378
        %v551 = vunpack.c.h.b16 %v378
        %v552 = vunpack.c.l.b16 %v379
        %v553 = vunpack.c.h.b16 %v379
        %v554 = vunpack.c.l.b16 %v380
        %v555 = vunpack.c.h.b16 %v380
        %v556 = vunpack.c.l.b16 %v381
        %v557 = vunpack.c.h.b16 %v381
        %v558 = vunpack.c.l.b16 %v382
        %v559 = vunpack.c.h.b16 %v382
        %v560 = vunpack.c.l.b16 %v383
        %v561 = vunpack.c.h.b16 %v383
        %v562 = vunpack.c.l.b16 %v384
        %v563 = vunpack.c.h.b16 %v384
        %v564 = vunpack.c.l.b16 %v385
        %v565 = vunpack.c.h.b16 %v385
        %v566 = vunpack.c.l.b16 %v386
        %v567 = vunpack.c.h.b16 %v386
        %v568 = vunpack.c.l.b16 %v387
        %v569 = vunpack.c.h.b16 %v387
        %v570 = vunpack.c.l.b16 %v388
        %v571 = vunpack.c.h.b16 %v388
        %v572 = vunpack.c.l.b16 %v389
        %v573 = vunpack.c.h.b16 %v389
        %v574 = vunpack.c.l.b16 %v390
        %v575 = vunpack.c.h.b16 %v390
        %v576 = vunpack.c.l.b16 %v391
        %v577 = vunpack.c.h.b16 %v391
        %v578 = vunpack.c.l.b16 %v392
        %v579 = vunpack.c.h.b16 %v392
        %v580 = vunpack.c.l.b16 %v393
        %v581 = vunpack.c.h.b16 %v393
        %v582 = vunpack.c.l.b16 %v394
        %v583 = vunpack.c.h.b16 %v394
        %v584 = vunpack.c.l.b16 %v395
        %v585 = vunpack.c.h.b16 %v395
        %v586 = vunpack.c.l.b16 %v396
        %v587 = vunpack.c.h.b16 %v396
        %v588 = vunpack.c.l.b16 %v397
        %v589 = vunpack.c.h.b16 %v397
        %v590 = vunpack.c.l.b16 %v398
        %v591 = vunpack.c.h.b16 %v398
        %v592 = vunpack.c.l.b16 %v399
        %v593 = vunpack.c.h.b16 %v399
        %v594 = vunpack.c.l.b16 %v400
        %v595 = vunpack.c.h.b16 %v400
        %v596 = vunpack.c.l.b16 %v401
        %v597 = vunpack.c.h.b16 %v401
        %v598 = vunpack.c.l.b16 %v402
        %v599 = vunpack.c.h.b16 %v402
        %v600 = vunpack.c.l.b16 %v403
        %v601 = vunpack.c.h.b16 %v403
        %v602 = vunpack.c.l.b16 %v404
        %v603 = vunpack.c.h.b16 %v404
        %v604 = vpack.c.b16 %v484, %v476
        %v605 = vpack.c.b16 %v485, %v477
        %v606 = vpack.c.b16 %v486, %v478
        %v607 = vpack.c.b16 %v487, %v479
        %v608 = vpack.c.b16 %v488, %v480
        %v609 = vpack.c.b16 %v489, %v481
        %v610 = vpack.c.b16 %v490, %v482
        %v611 = vpack.c.b16 %v491, %v483
        %v612 = vpack.c.b16 %v500, %v492
        %v613 = vpack.c.b16 %v501, %v493
        %v614 = vpack.c.b16 %v502, %v494
        %v615 = vpack.c.b16 %v503, %v495
        %v616 = vpack.c.b16 %v504, %v496
        %v617 = vpack.c.b16 %v505, %v497
        %v618 = vpack.c.b16 %v506, %v498
        %v619 = vpack.c.b16 %v507, %v499
        %v620 = vpack.c.b16 %v516, %v508
        %v621 = vpack.c.b16 %v517, %v509
        %v622 = vpack.c.b16 %v518, %v510
        %v623 = vpack.c.b16 %v519, %v511
        %v624 = vpack.c.b16 %v520, %v512
        %v625 = vpack.c.b16 %v521, %v513
        %v626 = vpack.c.b16 %v522, %v514
        %v627 = vpack.c.b16 %v523, %v515
        %v628 = vpack.c.b16 %v532, %v524
        %v629 = vpack.c.b16 %v533, %v525
        %v630 = vpack.c.b16 %v534, %v526
        %v631 = vpack.c.b16 %v535, %v527
        %v632 = vpack.c.b16 %v536, %v528
        %v633 = vpack.c.b16 %v537, %v529
        %v634 = vpack.c.b16 %v538, %v530
        %v635 = vpack.c.b16 %v539, %v531
        %v636 = vpack.c.b16 %v548, %v540
        %v637 = vpack.c.b16 %v549, %v541
        %v638 = vpack.c.b16 %v550, %v542
        %v639 = vpack.c.b16 %v551, %v543
        %v640 = vpack.c.b16 %v552, %v544
        %v641 = vpack.c.b16 %v553, %v545
        %v642 = vpack.c.b16 %v554, %v546
        %v643 = vpack.c.b16 %v555, %v547
        %v644 = vpack.c.b16 %v564, %v556
        %v645 = vpack.c.b16 %v565, %v557
        %v646 = vpack.c.b16 %v566, %v558
        %v647 = vpack.c.b16 %v567, %v559
        %v648 = vpack.c.b16 %v568, %v560
        %v649 = vpack.c.b16 %v569, %v561
        %v650 = vpack.c.b16 %v570, %v562
        %v651 = vpack.c.b16 %v571, %v563
        %v652 = vpack.c.b16 %v580, %v572
        %v653 = vpack.c.b16 %v581, %v573
        %v654 = vpack.c.b16 %v582, %v574
        %v655 = vpack.c.b16 %v583, %v575
        %v656 = vpack.c.b16 %v584, %v576
        %v657 = vpack.c.b16 %v585, %v577
        %v658 = vpack.c.b16 %v586, %v578
        %v659 = vpack.c.b16 %v587, %v579
        %v660 = vpack.c.b16 %v596, %v588
        %v661 = vpack.c.b16 %v597, %v589
        %v662 = vpack.c.b16 %v598, %v590
        %v663 = vpack.c.b16 %v599, %v591
        %v664 = vpack.c.b16 %v600, %v592
        %v665 = vpack.c.b16 %v601, %v593
        %v666 = vpack.c.b16 %v602, %v594
        %v667 = vpack.c.b16 %v603, %v595
        %732 = vmatpush.bf16.msra.mxu0 %v660
        %733 = vmatpush.bf16.msra.mxu0 %v652
        %734 = vmatpush.bf16.msra.mxu0 %v644
        %735 = vmatpush.bf16.msra.mxu0 %v636
        %736 = vmatpush.bf16.msra.mxu0 %v628
        %737 = vmatpush.bf16.msra.mxu0 %v620
        %738 = vmatpush.bf16.msra.mxu0 %v612
        %739 = vmatpush.bf16.msra.mxu0 %v604
        %740 = vmatmul.bf16.gmra.mxu0 %v409
        %v741 = vpop.f32.mrf.mxu0
        %v742 = vadd.f32 0.0, %v741
        %v743 = vpop.f32.mrf.mxu0
        %744 = vdwg.mxu0
        %745 = vmatpush.bf16.msra.mxu0 %v661
        %746 = vmatpush.bf16.msra.mxu0 %v653
        %747 = vmatpush.bf16.msra.mxu0 %v645
        %748 = vmatpush.bf16.msra.mxu0 %v637
        %749 = vmatpush.bf16.msra.mxu0 %v629
        %750 = vmatpush.bf16.msra.mxu0 %v621
        %751 = vmatpush.bf16.msra.mxu0 %v613
        %752 = vmatpush.bf16.msra.mxu0 %v605
        %753 = vmatmul.bf16.gmra.mxu0 %v409
        %v754 = vpop.f32.mrf.mxu0
        %v755 = vadd.f32 0.0, %v754
        %v756 = vpop.f32.mrf.mxu0
        %757 = vdwg.mxu0
        %758 = vmatpush.bf16.msra.mxu0 %v662
        %759 = vmatpush.bf16.msra.mxu0 %v654
        %760 = vmatpush.bf16.msra.mxu0 %v646
        %761 = vmatpush.bf16.msra.mxu0 %v638
        %762 = vmatpush.bf16.msra.mxu0 %v630
        %763 = vmatpush.bf16.msra.mxu0 %v622
        %764 = vmatpush.bf16.msra.mxu0 %v614
        %765 = vmatpush.bf16.msra.mxu0 %v606
        %766 = vmatmul.bf16.gmra.mxu0 %v409
        %v767 = vpop.f32.mrf.mxu0
        %v768 = vadd.f32 0.0, %v767
        %v769 = vpop.f32.mrf.mxu0
        %770 = vdwg.mxu0
        %771 = vmatpush.bf16.msra.mxu0 %v663
        %772 = vmatpush.bf16.msra.mxu0 %v655
        %773 = vmatpush.bf16.msra.mxu0 %v647
        %774 = vmatpush.bf16.msra.mxu0 %v639
        %775 = vmatpush.bf16.msra.mxu0 %v631
        %776 = vmatpush.bf16.msra.mxu0 %v623
        %777 = vmatpush.bf16.msra.mxu0 %v615
        %778 = vmatpush.bf16.msra.mxu0 %v607
        %779 = vmatmul.bf16.gmra.mxu0 %v409
        %v780 = vpop.f32.mrf.mxu0
        %v781 = vadd.f32 0.0, %v780
        %v782 = vpop.f32.mrf.mxu0
        %783 = vdwg.mxu0
        %784 = vmatpush.bf16.msra.mxu0 %v664
        %785 = vmatpush.bf16.msra.mxu0 %v656
        %786 = vmatpush.bf16.msra.mxu0 %v648
        %787 = vmatpush.bf16.msra.mxu0 %v640
        %788 = vmatpush.bf16.msra.mxu0 %v632
        %789 = vmatpush.bf16.msra.mxu0 %v624
        %790 = vmatpush.bf16.msra.mxu0 %v616
        %791 = vmatpush.bf16.msra.mxu0 %v608
        %792 = vmatmul.bf16.gmra.mxu0 %v409
        %v793 = vpop.f32.mrf.mxu0
        %v794 = vadd.f32 0.0, %v793
        %v795 = vpop.f32.mrf.mxu0
        %796 = vdwg.mxu0
        %797 = vmatpush.bf16.msra.mxu0 %v665
        %798 = vmatpush.bf16.msra.mxu0 %v657
        %799 = vmatpush.bf16.msra.mxu0 %v649
        %800 = vmatpush.bf16.msra.mxu0 %v641
        %801 = vmatpush.bf16.msra.mxu0 %v633
        %802 = vmatpush.bf16.msra.mxu0 %v625
        %803 = vmatpush.bf16.msra.mxu0 %v617
        %804 = vmatpush.bf16.msra.mxu0 %v609
        %805 = vmatmul.bf16.gmra.mxu0 %v409
        %v806 = vpop.f32.mrf.mxu0
        %v807 = vadd.f32 0.0, %v806
        %v808 = vpop.f32.mrf.mxu0
        %809 = vdwg.mxu0
        %810 = vmatpush.bf16.msra.mxu0 %v666
        %811 = vmatpush.bf16.msra.mxu0 %v658
        %812 = vmatpush.bf16.msra.mxu0 %v650
        %813 = vmatpush.bf16.msra.mxu0 %v642
        %814 = vmatpush.bf16.msra.mxu0 %v634
        %815 = vmatpush.bf16.msra.mxu0 %v626
        %816 = vmatpush.bf16.msra.mxu0 %v618
        %817 = vmatpush.bf16.msra.mxu0 %v610
        %818 = vmatmul.bf16.gmra.mxu0 %v409
        %v819 = vpop.f32.mrf.mxu0
        %v820 = vadd.f32 0.0, %v819
        %v821 = vpop.f32.mrf.mxu0
        %822 = vdwg.mxu0
        %823 = vmatpush.bf16.msra.mxu0 %v667
        %824 = vmatpush.bf16.msra.mxu0 %v659
        %825 = vmatpush.bf16.msra.mxu0 %v651
        %826 = vmatpush.bf16.msra.mxu0 %v643
        %827 = vmatpush.bf16.msra.mxu0 %v635
        %828 = vmatpush.bf16.msra.mxu0 %v627
        %829 = vmatpush.bf16.msra.mxu0 %v619
        %830 = vmatpush.bf16.msra.mxu0 %v611
        %831 = vmatmul.bf16.gmra.mxu0 %v409
        %v832 = vpop.f32.mrf.mxu0
        %v833 = vadd.f32 0.0, %v832
        %v834 = vpop.f32.mrf.mxu0
        %835 = vdwg.mxu0
        %v900 = vunpack.c.l.b16 %v276
        %v901 = vunpack.c.h.b16 %v276
        %v902 = vunpack.c.l.b16 %v277
        %v903 = vunpack.c.h.b16 %v277
        %v904 = vunpack.c.l.b16 %v278
        %v905 = vunpack.c.h.b16 %v278
        %v906 = vunpack.c.l.b16 %v279
        %v907 = vunpack.c.h.b16 %v279
        %v908 = vunpack.c.l.b16 %v280
        %v909 = vunpack.c.h.b16 %v280
        %v910 = vunpack.c.l.b16 %v281
        %v911 = vunpack.c.h.b16 %v281
        %v912 = vunpack.c.l.b16 %v282
        %v913 = vunpack.c.h.b16 %v282
        %v914 = vunpack.c.l.b16 %v283
        %v915 = vunpack.c.h.b16 %v283
        %v916 = vunpack.c.l.b16 %v284
        %v917 = vunpack.c.h.b16 %v284
        %v918 = vunpack.c.l.b16 %v285
        %v919 = vunpack.c.h.b16 %v285
        %v920 = vunpack.c.l.b16 %v286
        %v921 = vunpack.c.h.b16 %v286
        %v922 = vunpack.c.l.b16 %v287
        %v923 = vunpack.c.h.b16 %v287
        %v924 = vunpack.c.l.b16 %v288
        %v925 = vunpack.c.h.b16 %v288
        %v926 = vunpack.c.l.b16 %v289
        %v927 = vunpack.c.h.b16 %v289
        %v928 = vunpack.c.l.b16 %v290
        %v929 = vunpack.c.h.b16 %v290
        %v930 = vunpack.c.l.b16 %v291
        %v931 = vunpack.c.h.b16 %v291
        %v932 = vunpack.c.l.b16 %v292
        %v933 = vunpack.c.h.b16 %v292
        %v934 = vunpack.c.l.b16 %v293
        %v935 = vunpack.c.h.b16 %v293
        %v936 = vunpack.c.l.b16 %v294
        %v937 = vunpack.c.h.b16 %v294
        %v938 = vunpack.c.l.b16 %v295
        %v939 = vunpack.c.h.b16 %v295
        %v940 = vunpack.c.l.b16 %v296
        %v941 = vunpack.c.h.b16 %v296
        %v942 = vunpack.c.l.b16 %v297
        %v943 = vunpack.c.h.b16 %v297
        %v944 = vunpack.c.l.b16 %v298
        %v945 = vunpack.c.h.b16 %v298
        %v946 = vunpack.c.l.b16 %v299
        %v947 = vunpack.c.h.b16 %v299
        %v948 = vunpack.c.l.b16 %v300
        %v949 = vunpack.c.h.b16 %v300
        %v950 = vunpack.c.l.b16 %v301
        %v951 = vunpack.c.h.b16 %v301
        %v952 = vunpack.c.l.b16 %v302
        %v953 = vunpack.c.h.b16 %v302
        %v954 = vunpack.c.l.b16 %v303
        %v955 = vunpack.c.h.b16 %v303
        %v956 = vunpack.c.l.b16 %v304
        %v957 = vunpack.c.h.b16 %v304
        %v958 = vunpack.c.l.b16 %v305
        %v959 = vunpack.c.h.b16 %v305
        %v960 = vunpack.c.l.b16 %v306
        %v961 = vunpack.c.h.b16 %v306
        %v962 = vunpack.c.l.b16 %v307
        %v963 = vunpack.c.h.b16 %v307
        %v964 = vunpack.c.l.b16 %v308
        %v965 = vunpack.c.h.b16 %v308
        %v966 = vunpack.c.l.b16 %v309
        %v967 = vunpack.c.h.b16 %v309
        %v968 = vunpack.c.l.b16 %v310
        %v969 = vunpack.c.h.b16 %v310
        %v970 = vunpack.c.l.b16 %v311
        %v971 = vunpack.c.h.b16 %v311
        %v972 = vunpack.c.l.b16 %v312
        %v973 = vunpack.c.h.b16 %v312
        %v974 = vunpack.c.l.b16 %v313
        %v975 = vunpack.c.h.b16 %v313
        %v976 = vunpack.c.l.b16 %v314
        %v977 = vunpack.c.h.b16 %v314
        %v978 = vunpack.c.l.b16 %v315
        %v979 = vunpack.c.h.b16 %v315
        %v980 = vunpack.c.l.b16 %v316
        %v981 = vunpack.c.h.b16 %v316
        %v982 = vunpack.c.l.b16 %v317
        %v983 = vunpack.c.h.b16 %v317
        %v984 = vunpack.c.l.b16 %v318
        %v985 = vunpack.c.h.b16 %v318
        %v986 = vunpack.c.l.b16 %v319
        %v987 = vunpack.c.h.b16 %v319
        %v988 = vunpack.c.l.b16 %v320
        %v989 = vunpack.c.h.b16 %v320
        %v990 = vunpack.c.l.b16 %v321
        %v991 = vunpack.c.h.b16 %v321
        %v992 = vunpack.c.l.b16 %v322
        %v993 = vunpack.c.h.b16 %v322
        %v994 = vunpack.c.l.b16 %v323
        %v995 = vunpack.c.h.b16 %v323
        %v996 = vunpack.c.l.b16 %v324
        %v997 = vunpack.c.h.b16 %v324
        %v998 = vunpack.c.l.b16 %v325
        %v999 = vunpack.c.h.b16 %v325
        %v1000 = vunpack.c.l.b16 %v326
        %v1001 = vunpack.c.h.b16 %v326
        %v1002 = vunpack.c.l.b16 %v327
        %v1003 = vunpack.c.h.b16 %v327
        %v1004 = vunpack.c.l.b16 %v328
        %v1005 = vunpack.c.h.b16 %v328
        %v1006 = vunpack.c.l.b16 %v329
        %v1007 = vunpack.c.h.b16 %v329
        %v1008 = vunpack.c.l.b16 %v330
        %v1009 = vunpack.c.h.b16 %v330
        %v1010 = vunpack.c.l.b16 %v331
        %v1011 = vunpack.c.h.b16 %v331
        %v1012 = vunpack.c.l.b16 %v332
        %v1013 = vunpack.c.h.b16 %v332
        %v1014 = vunpack.c.l.b16 %v333
        %v1015 = vunpack.c.h.b16 %v333
        %v1016 = vunpack.c.l.b16 %v334
        %v1017 = vunpack.c.h.b16 %v334
        %v1018 = vunpack.c.l.b16 %v335
        %v1019 = vunpack.c.h.b16 %v335
        %v1020 = vunpack.c.l.b16 %v336
        %v1021 = vunpack.c.h.b16 %v336
        %v1022 = vunpack.c.l.b16 %v337
        %v1023 = vunpack.c.h.b16 %v337
        %v1024 = vunpack.c.l.b16 %v338
        %v1025 = vunpack.c.h.b16 %v338
        %v1026 = vunpack.c.l.b16 %v339
        %v1027 = vunpack.c.h.b16 %v339
        %v1028 = vpack.c.b16 %v908, %v900
        %v1029 = vpack.c.b16 %v909, %v901
        %v1030 = vpack.c.b16 %v910, %v902
        %v1031 = vpack.c.b16 %v911, %v903
        %v1032 = vpack.c.b16 %v912, %v904
        %v1033 = vpack.c.b16 %v913, %v905
        %v1034 = vpack.c.b16 %v914, %v906
        %v1035 = vpack.c.b16 %v915, %v907
        %v1036 = vpack.c.b16 %v924, %v916
        %v1037 = vpack.c.b16 %v925, %v917
        %v1038 = vpack.c.b16 %v926, %v918
        %v1039 = vpack.c.b16 %v927, %v919
        %v1040 = vpack.c.b16 %v928, %v920
        %v1041 = vpack.c.b16 %v929, %v921
        %v1042 = vpack.c.b16 %v930, %v922
        %v1043 = vpack.c.b16 %v931, %v923
        %v1044 = vpack.c.b16 %v940, %v932
        %v1045 = vpack.c.b16 %v941, %v933
        %v1046 = vpack.c.b16 %v942, %v934
        %v1047 = vpack.c.b16 %v943, %v935
        %v1048 = vpack.c.b16 %v944, %v936
        %v1049 = vpack.c.b16 %v945, %v937
        %v1050 = vpack.c.b16 %v946, %v938
        %v1051 = vpack.c.b16 %v947, %v939
        %v1052 = vpack.c.b16 %v956, %v948
        %v1053 = vpack.c.b16 %v957, %v949
        %v1054 = vpack.c.b16 %v958, %v950
        %v1055 = vpack.c.b16 %v959, %v951
        %v1056 = vpack.c.b16 %v960, %v952
        %v1057 = vpack.c.b16 %v961, %v953
        %v1058 = vpack.c.b16 %v962, %v954
        %v1059 = vpack.c.b16 %v963, %v955
        %v1060 = vpack.c.b16 %v972, %v964
        %v1061 = vpack.c.b16 %v973, %v965
        %v1062 = vpack.c.b16 %v974, %v966
        %v1063 = vpack.c.b16 %v975, %v967
        %v1064 = vpack.c.b16 %v976, %v968
        %v1065 = vpack.c.b16 %v977, %v969
        %v1066 = vpack.c.b16 %v978, %v970
        %v1067 = vpack.c.b16 %v979, %v971
        %v1068 = vpack.c.b16 %v988, %v980
        %v1069 = vpack.c.b16 %v989, %v981
        %v1070 = vpack.c.b16 %v990, %v982
        %v1071 = vpack.c.b16 %v991, %v983
        %v1072 = vpack.c.b16 %v992, %v984
        %v1073 = vpack.c.b16 %v993, %v985
        %v1074 = vpack.c.b16 %v994, %v986
        %v1075 = vpack.c.b16 %v995, %v987
        %v1076 = vpack.c.b16 %v1004, %v996
        %v1077 = vpack.c.b16 %v1005, %v997
        %v1078 = vpack.c.b16 %v1006, %v998
        %v1079 = vpack.c.b16 %v1007, %v999
        %v1080 = vpack.c.b16 %v1008, %v1000
        %v1081 = vpack.c.b16 %v1009, %v1001
        %v1082 = vpack.c.b16 %v1010, %v1002
        %v1083 = vpack.c.b16 %v1011, %v1003
        %v1084 = vpack.c.b16 %v1020, %v1012
        %v1085 = vpack.c.b16 %v1021, %v1013
        %v1086 = vpack.c.b16 %v1022, %v1014
        %v1087 = vpack.c.b16 %v1023, %v1015
        %v1088 = vpack.c.b16 %v1024, %v1016
        %v1089 = vpack.c.b16 %v1025, %v1017
        %v1090 = vpack.c.b16 %v1026, %v1018
        %v1091 = vpack.c.b16 %v1027, %v1019
        %1156 = vmatpush.bf16.msra.mxu0 %v1084
        %1157 = vmatpush.bf16.msra.mxu0 %v1076
        %1158 = vmatpush.bf16.msra.mxu0 %v1068
        %1159 = vmatpush.bf16.msra.mxu0 %v1060
        %1160 = vmatpush.bf16.msra.mxu0 %v1052
        %1161 = vmatpush.bf16.msra.mxu0 %v1044
        %1162 = vmatpush.bf16.msra.mxu0 %v1036
        %1163 = vmatpush.bf16.msra.mxu0 %v1028
        %1164 = vmatmul.bf16.gmra.mxu0 %v275
        %v1165 = vpop.f32.mrf.mxu0
        %v1166 = vadd.f32 %v742, %v1165
        %v1167 = vpop.f32.mrf.mxu0
        %1168 = vdwg.mxu0
        %1169 = vmatpush.bf16.msra.mxu0 %v1085
        %1170 = vmatpush.bf16.msra.mxu0 %v1077
        %1171 = vmatpush.bf16.msra.mxu0 %v1069
        %1172 = vmatpush.bf16.msra.mxu0 %v1061
        %1173 = vmatpush.bf16.msra.mxu0 %v1053
        %1174 = vmatpush.bf16.msra.mxu0 %v1045
        %1175 = vmatpush.bf16.msra.mxu0 %v1037
        %1176 = vmatpush.bf16.msra.mxu0 %v1029
        %1177 = vmatmul.bf16.gmra.mxu0 %v275
        %v1178 = vpop.f32.mrf.mxu0
        %v1179 = vadd.f32 %v755, %v1178
        %v1180 = vpop.f32.mrf.mxu0
        %1181 = vdwg.mxu0
        %1182 = vmatpush.bf16.msra.mxu0 %v1086
        %1183 = vmatpush.bf16.msra.mxu0 %v1078
        %1184 = vmatpush.bf16.msra.mxu0 %v1070
        %1185 = vmatpush.bf16.msra.mxu0 %v1062
        %1186 = vmatpush.bf16.msra.mxu0 %v1054
        %1187 = vmatpush.bf16.msra.mxu0 %v1046
        %1188 = vmatpush.bf16.msra.mxu0 %v1038
        %1189 = vmatpush.bf16.msra.mxu0 %v1030
        %1190 = vmatmul.bf16.gmra.mxu0 %v275
        %v1191 = vpop.f32.mrf.mxu0
        %v1192 = vadd.f32 %v768, %v1191
        %v1193 = vpop.f32.mrf.mxu0
        %1194 = vdwg.mxu0
        %1195 = vmatpush.bf16.msra.mxu0 %v1087
        %1196 = vmatpush.bf16.msra.mxu0 %v1079
        %1197 = vmatpush.bf16.msra.mxu0 %v1071
        %1198 = vmatpush.bf16.msra.mxu0 %v1063
        %1199 = vmatpush.bf16.msra.mxu0 %v1055
        %1200 = vmatpush.bf16.msra.mxu0 %v1047
        %1201 = vmatpush.bf16.msra.mxu0 %v1039
        %1202 = vmatpush.bf16.msra.mxu0 %v1031
        %1203 = vmatmul.bf16.gmra.mxu0 %v275
        %v1204 = vpop.f32.mrf.mxu0
        %v1205 = vadd.f32 %v781, %v1204
        %v1206 = vpop.f32.mrf.mxu0
        %1207 = vdwg.mxu0
        %1208 = vmatpush.bf16.msra.mxu0 %v1088
        %1209 = vmatpush.bf16.msra.mxu0 %v1080
        %1210 = vmatpush.bf16.msra.mxu0 %v1072
        %1211 = vmatpush.bf16.msra.mxu0 %v1064
        %1212 = vmatpush.bf16.msra.mxu0 %v1056
        %1213 = vmatpush.bf16.msra.mxu0 %v1048
        %1214 = vmatpush.bf16.msra.mxu0 %v1040
        %1215 = vmatpush.bf16.msra.mxu0 %v1032
        %1216 = vmatmul.bf16.gmra.mxu0 %v275
        %v1217 = vpop.f32.mrf.mxu0
        %v1218 = vadd.f32 %v794, %v1217
        %v1219 = vpop.f32.mrf.mxu0
        %1220 = vdwg.mxu0
        %1221 = vmatpush.bf16.msra.mxu0 %v1089
        %1222 = vmatpush.bf16.msra.mxu0 %v1081
        %1223 = vmatpush.bf16.msra.mxu0 %v1073
        %1224 = vmatpush.bf16.msra.mxu0 %v1065
        %1225 = vmatpush.bf16.msra.mxu0 %v1057
        %1226 = vmatpush.bf16.msra.mxu0 %v1049
        %1227 = vmatpush.bf16.msra.mxu0 %v1041
        %1228 = vmatpush.bf16.msra.mxu0 %v1033
        %1229 = vmatmul.bf16.gmra.mxu0 %v275
        %v1230 = vpop.f32.mrf.mxu0
        %v1231 = vadd.f32 %v807, %v1230
        %v1232 = vpop.f32.mrf.mxu0
        %1233 = vdwg.mxu0
        %1234 = vmatpush.bf16.msra.mxu0 %v1090
        %1235 = vmatpush.bf16.msra.mxu0 %v1082
        %1236 = vmatpush.bf16.msra.mxu0 %v1074
        %1237 = vmatpush.bf16.msra.mxu0 %v1066
        %1238 = vmatpush.bf16.msra.mxu0 %v1058
        %1239 = vmatpush.bf16.msra.mxu0 %v1050
        %1240 = vmatpush.bf16.msra.mxu0 %v1042
        %1241 = vmatpush.bf16.msra.mxu0 %v1034
        %1242 = vmatmul.bf16.gmra.mxu0 %v275
        %v1243 = vpop.f32.mrf.mxu0
        %v1244 = vadd.f32 %v820, %v1243
        %v1245 = vpop.f32.mrf.mxu0
        %1246 = vdwg.mxu0
        %1247 = vmatpush.bf16.msra.mxu0 %v1091
        %1248 = vmatpush.bf16.msra.mxu0 %v1083
        %1249 = vmatpush.bf16.msra.mxu0 %v1075
        %1250 = vmatpush.bf16.msra.mxu0 %v1067
        %1251 = vmatpush.bf16.msra.mxu0 %v1059
        %1252 = vmatpush.bf16.msra.mxu0 %v1051
        %1253 = vmatpush.bf16.msra.mxu0 %v1043
        %1254 = vmatpush.bf16.msra.mxu0 %v1035
        %1255 = vmatmul.bf16.gmra.mxu0 %v275
        %v1256 = vpop.f32.mrf.mxu0
        %v1257 = vadd.f32 %v833, %v1256
        %v1258 = vpop.f32.mrf.mxu0
        %1259 = vdwg.mxu0
        %s1260 = scalar_lea.vmem %s207, 1024 [#allocation5]
        %v1261 = vld [vmem:[%s1260] sm:$0xff]
        %v1262 = vld [vmem:[%s1260 + $0x8] sm:$0xff]
        %v1263 = vld [vmem:[%s1260 + $0x10] sm:$0xff]
        %v1264 = vld [vmem:[%s1260 + $0x18] sm:$0xff]
        %v1265 = vld [vmem:[%s1260 + $0x20] sm:$0xff]
        %v1266 = vld [vmem:[%s1260 + $0x28] sm:$0xff]
        %v1267 = vld [vmem:[%s1260 + $0x30] sm:$0xff]
        %v1268 = vld [vmem:[%s1260 + $0x38] sm:$0xff]
        %v1269 = vld [vmem:[%s1260 + $0x40] sm:$0xff]
        %v1270 = vld [vmem:[%s1260 + $0x48] sm:$0xff]
        %v1271 = vld [vmem:[%s1260 + $0x50] sm:$0xff]
        %v1272 = vld [vmem:[%s1260 + $0x58] sm:$0xff]
        %v1273 = vld [vmem:[%s1260 + $0x60] sm:$0xff]
        %v1274 = vld [vmem:[%s1260 + $0x68] sm:$0xff]
        %v1275 = vld [vmem:[%s1260 + $0x70] sm:$0xff]
        %v1276 = vld [vmem:[%s1260 + $0x78] sm:$0xff]
        %v1277 = vld [vmem:[%s1260 + $0x80] sm:$0xff]
        %v1278 = vld [vmem:[%s1260 + $0x88] sm:$0xff]
        %v1279 = vld [vmem:[%s1260 + $0x90] sm:$0xff]
        %v1280 = vld [vmem:[%s1260 + $0x98] sm:$0xff]
        %v1281 = vld [vmem:[%s1260 + $0xa0] sm:$0xff]
        %v1282 = vld [vmem:[%s1260 + $0xa8] sm:$0xff]
        %v1283 = vld [vmem:[%s1260 + $0xb0] sm:$0xff]
        %v1284 = vld [vmem:[%s1260 + $0xb8] sm:$0xff]
        %v1285 = vld [vmem:[%s1260 + $0xc0] sm:$0xff]
        %v1286 = vld [vmem:[%s1260 + $0xc8] sm:$0xff]
        %v1287 = vld [vmem:[%s1260 + $0xd0] sm:$0xff]
        %v1288 = vld [vmem:[%s1260 + $0xd8] sm:$0xff]
        %v1289 = vld [vmem:[%s1260 + $0xe0] sm:$0xff]
        %v1290 = vld [vmem:[%s1260 + $0xe8] sm:$0xff]
        %v1291 = vld [vmem:[%s1260 + $0xf0] sm:$0xff]
        %v1292 = vld [vmem:[%s1260 + $0xf8] sm:$0xff]
        %v1293 = vld [vmem:[%s1260 + $0x100] sm:$0xff]
        %v1294 = vld [vmem:[%s1260 + $0x108] sm:$0xff]
        %v1295 = vld [vmem:[%s1260 + $0x110] sm:$0xff]
        %v1296 = vld [vmem:[%s1260 + $0x118] sm:$0xff]
        %v1297 = vld [vmem:[%s1260 + $0x120] sm:$0xff]
        %v1298 = vld [vmem:[%s1260 + $0x128] sm:$0xff]
        %v1299 = vld [vmem:[%s1260 + $0x130] sm:$0xff]
        %v1300 = vld [vmem:[%s1260 + $0x138] sm:$0xff]
        %v1301 = vld [vmem:[%s1260 + $0x140] sm:$0xff]
        %v1302 = vld [vmem:[%s1260 + $0x148] sm:$0xff]
        %v1303 = vld [vmem:[%s1260 + $0x150] sm:$0xff]
        %v1304 = vld [vmem:[%s1260 + $0x158] sm:$0xff]
        %v1305 = vld [vmem:[%s1260 + $0x160] sm:$0xff]
        %v1306 = vld [vmem:[%s1260 + $0x168] sm:$0xff]
        %v1307 = vld [vmem:[%s1260 + $0x170] sm:$0xff]
        %v1308 = vld [vmem:[%s1260 + $0x178] sm:$0xff]
        %v1309 = vld [vmem:[%s1260 + $0x180] sm:$0xff]
        %v1310 = vld [vmem:[%s1260 + $0x188] sm:$0xff]
        %v1311 = vld [vmem:[%s1260 + $0x190] sm:$0xff]
        %v1312 = vld [vmem:[%s1260 + $0x198] sm:$0xff]
        %v1313 = vld [vmem:[%s1260 + $0x1a0] sm:$0xff]
        %v1314 = vld [vmem:[%s1260 + $0x1a8] sm:$0xff]
        %v1315 = vld [vmem:[%s1260 + $0x1b0] sm:$0xff]
        %v1316 = vld [vmem:[%s1260 + $0x1b8] sm:$0xff]
        %v1317 = vld [vmem:[%s1260 + $0x1c0] sm:$0xff]
        %v1318 = vld [vmem:[%s1260 + $0x1c8] sm:$0xff]
        %v1319 = vld [vmem:[%s1260 + $0x1d0] sm:$0xff]
        %v1320 = vld [vmem:[%s1260 + $0x1d8] sm:$0xff]
        %v1321 = vld [vmem:[%s1260 + $0x1e0] sm:$0xff]
        %v1322 = vld [vmem:[%s1260 + $0x1e8] sm:$0xff]
        %v1323 = vld [vmem:[%s1260 + $0x1f0] sm:$0xff]
        %v1324 = vld [vmem:[%s1260 + $0x1f8] sm:$0xff]
        %v1325 = vrot.slane %v407, 1
        %v1391 = vunpack.c.l.b16 %v1261
        %v1392 = vunpack.c.h.b16 %v1261
        %v1393 = vunpack.c.l.b16 %v1262
        %v1394 = vunpack.c.h.b16 %v1262
        %v1395 = vunpack.c.l.b16 %v1263
        %v1396 = vunpack.c.h.b16 %v1263
        %v1397 = vunpack.c.l.b16 %v1264
        %v1398 = vunpack.c.h.b16 %v1264
        %v1399 = vunpack.c.l.b16 %v1265
        %v1400 = vunpack.c.h.b16 %v1265
        %v1401 = vunpack.c.l.b16 %v1266
        %v1402 = vunpack.c.h.b16 %v1266
        %v1403 = vunpack.c.l.b16 %v1267
        %v1404 = vunpack.c.h.b16 %v1267
        %v1405 = vunpack.c.l.b16 %v1268
        %v1406 = vunpack.c.h.b16 %v1268
        %v1407 = vunpack.c.l.b16 %v1269
        %v1408 = vunpack.c.h.b16 %v1269
        %v1409 = vunpack.c.l.b16 %v1270
        %v1410 = vunpack.c.h.b16 %v1270
        %v1411 = vunpack.c.l.b16 %v1271
        %v1412 = vunpack.c.h.b16 %v1271
        %v1413 = vunpack.c.l.b16 %v1272
        %v1414 = vunpack.c.h.b16 %v1272
        %v1415 = vunpack.c.l.b16 %v1273
        %v1416 = vunpack.c.h.b16 %v1273
        %v1417 = vunpack.c.l.b16 %v1274
        %v1418 = vunpack.c.h.b16 %v1274
        %v1419 = vunpack.c.l.b16 %v1275
        %v1420 = vunpack.c.h.b16 %v1275
        %v1421 = vunpack.c.l.b16 %v1276
        %v1422 = vunpack.c.h.b16 %v1276
        %v1423 = vunpack.c.l.b16 %v1277
        %v1424 = vunpack.c.h.b16 %v1277
        %v1425 = vunpack.c.l.b16 %v1278
        %v1426 = vunpack.c.h.b16 %v1278
        %v1427 = vunpack.c.l.b16 %v1279
        %v1428 = vunpack.c.h.b16 %v1279
        %v1429 = vunpack.c.l.b16 %v1280
        %v1430 = vunpack.c.h.b16 %v1280
        %v1431 = vunpack.c.l.b16 %v1281
        %v1432 = vunpack.c.h.b16 %v1281
        %v1433 = vunpack.c.l.b16 %v1282
        %v1434 = vunpack.c.h.b16 %v1282
        %v1435 = vunpack.c.l.b16 %v1283
        %v1436 = vunpack.c.h.b16 %v1283
        %v1437 = vunpack.c.l.b16 %v1284
        %v1438 = vunpack.c.h.b16 %v1284
        %v1439 = vunpack.c.l.b16 %v1285
        %v1440 = vunpack.c.h.b16 %v1285
        %v1441 = vunpack.c.l.b16 %v1286
        %v1442 = vunpack.c.h.b16 %v1286
        %v1443 = vunpack.c.l.b16 %v1287
        %v1444 = vunpack.c.h.b16 %v1287
        %v1445 = vunpack.c.l.b16 %v1288
        %v1446 = vunpack.c.h.b16 %v1288
        %v1447 = vunpack.c.l.b16 %v1289
        %v1448 = vunpack.c.h.b16 %v1289
        %v1449 = vunpack.c.l.b16 %v1290
        %v1450 = vunpack.c.h.b16 %v1290
        %v1451 = vunpack.c.l.b16 %v1291
        %v1452 = vunpack.c.h.b16 %v1291
        %v1453 = vunpack.c.l.b16 %v1292
        %v1454 = vunpack.c.h.b16 %v1292
        %v1455 = vunpack.c.l.b16 %v1293
        %v1456 = vunpack.c.h.b16 %v1293
        %v1457 = vunpack.c.l.b16 %v1294
        %v1458 = vunpack.c.h.b16 %v1294
        %v1459 = vunpack.c.l.b16 %v1295
        %v1460 = vunpack.c.h.b16 %v1295
        %v1461 = vunpack.c.l.b16 %v1296
        %v1462 = vunpack.c.h.b16 %v1296
        %v1463 = vunpack.c.l.b16 %v1297
        %v1464 = vunpack.c.h.b16 %v1297
        %v1465 = vunpack.c.l.b16 %v1298
        %v1466 = vunpack.c.h.b16 %v1298
        %v1467 = vunpack.c.l.b16 %v1299
        %v1468 = vunpack.c.h.b16 %v1299
        %v1469 = vunpack.c.l.b16 %v1300
        %v1470 = vunpack.c.h.b16 %v1300
        %v1471 = vunpack.c.l.b16 %v1301
        %v1472 = vunpack.c.h.b16 %v1301
        %v1473 = vunpack.c.l.b16 %v1302
        %v1474 = vunpack.c.h.b16 %v1302
        %v1475 = vunpack.c.l.b16 %v1303
        %v1476 = vunpack.c.h.b16 %v1303
        %v1477 = vunpack.c.l.b16 %v1304
        %v1478 = vunpack.c.h.b16 %v1304
        %v1479 = vunpack.c.l.b16 %v1305
        %v1480 = vunpack.c.h.b16 %v1305
        %v1481 = vunpack.c.l.b16 %v1306
        %v1482 = vunpack.c.h.b16 %v1306
        %v1483 = vunpack.c.l.b16 %v1307
        %v1484 = vunpack.c.h.b16 %v1307
        %v1485 = vunpack.c.l.b16 %v1308
        %v1486 = vunpack.c.h.b16 %v1308
        %v1487 = vunpack.c.l.b16 %v1309
        %v1488 = vunpack.c.h.b16 %v1309
        %v1489 = vunpack.c.l.b16 %v1310
        %v1490 = vunpack.c.h.b16 %v1310
        %v1491 = vunpack.c.l.b16 %v1311
        %v1492 = vunpack.c.h.b16 %v1311
        %v1493 = vunpack.c.l.b16 %v1312
        %v1494 = vunpack.c.h.b16 %v1312
        %v1495 = vunpack.c.l.b16 %v1313
        %v1496 = vunpack.c.h.b16 %v1313
        %v1497 = vunpack.c.l.b16 %v1314
        %v1498 = vunpack.c.h.b16 %v1314
        %v1499 = vunpack.c.l.b16 %v1315
        %v1500 = vunpack.c.h.b16 %v1315
        %v1501 = vunpack.c.l.b16 %v1316
        %v1502 = vunpack.c.h.b16 %v1316
        %v1503 = vunpack.c.l.b16 %v1317
        %v1504 = vunpack.c.h.b16 %v1317
        %v1505 = vunpack.c.l.b16 %v1318
        %v1506 = vunpack.c.h.b16 %v1318
        %v1507 = vunpack.c.l.b16 %v1319
        %v1508 = vunpack.c.h.b16 %v1319
        %v1509 = vunpack.c.l.b16 %v1320
        %v1510 = vunpack.c.h.b16 %v1320
        %v1511 = vunpack.c.l.b16 %v1321
        %v1512 = vunpack.c.h.b16 %v1321
        %v1513 = vunpack.c.l.b16 %v1322
        %v1514 = vunpack.c.h.b16 %v1322
        %v1515 = vunpack.c.l.b16 %v1323
        %v1516 = vunpack.c.h.b16 %v1323
        %v1517 = vunpack.c.l.b16 %v1324
        %v1518 = vunpack.c.h.b16 %v1324
        %v1519 = vpack.c.b16 %v1399, %v1391
        %v1520 = vpack.c.b16 %v1400, %v1392
        %v1521 = vpack.c.b16 %v1401, %v1393
        %v1522 = vpack.c.b16 %v1402, %v1394
        %v1523 = vpack.c.b16 %v1403, %v1395
        %v1524 = vpack.c.b16 %v1404, %v1396
        %v1525 = vpack.c.b16 %v1405, %v1397
        %v1526 = vpack.c.b16 %v1406, %v1398
        %v1527 = vpack.c.b16 %v1415, %v1407
        %v1528 = vpack.c.b16 %v1416, %v1408
        %v1529 = vpack.c.b16 %v1417, %v1409
        %v1530 = vpack.c.b16 %v1418, %v1410
        %v1531 = vpack.c.b16 %v1419, %v1411
        %v1532 = vpack.c.b16 %v1420, %v1412
        %v1533 = vpack.c.b16 %v1421, %v1413
        %v1534 = vpack.c.b16 %v1422, %v1414
        %v1535 = vpack.c.b16 %v1431, %v1423
        %v1536 = vpack.c.b16 %v1432, %v1424
        %v1537 = vpack.c.b16 %v1433, %v1425
        %v1538 = vpack.c.b16 %v1434, %v1426
        %v1539 = vpack.c.b16 %v1435, %v1427
        %v1540 = vpack.c.b16 %v1436, %v1428
        %v1541 = vpack.c.b16 %v1437, %v1429
        %v1542 = vpack.c.b16 %v1438, %v1430
        %v1543 = vpack.c.b16 %v1447, %v1439
        %v1544 = vpack.c.b16 %v1448, %v1440
        %v1545 = vpack.c.b16 %v1449, %v1441
        %v1546 = vpack.c.b16 %v1450, %v1442
        %v1547 = vpack.c.b16 %v1451, %v1443
        %v1548 = vpack.c.b16 %v1452, %v1444
        %v1549 = vpack.c.b16 %v1453, %v1445
        %v1550 = vpack.c.b16 %v1454, %v1446
        %v1551 = vpack.c.b16 %v1463, %v1455
        %v1552 = vpack.c.b16 %v1464, %v1456
        %v1553 = vpack.c.b16 %v1465, %v1457
        %v1554 = vpack.c.b16 %v1466, %v1458
        %v1555 = vpack.c.b16 %v1467, %v1459
        %v1556 = vpack.c.b16 %v1468, %v1460
        %v1557 = vpack.c.b16 %v1469, %v1461
        %v1558 = vpack.c.b16 %v1470, %v1462
        %v1559 = vpack.c.b16 %v1479, %v1471
        %v1560 = vpack.c.b16 %v1480, %v1472
        %v1561 = vpack.c.b16 %v1481, %v1473
        %v1562 = vpack.c.b16 %v1482, %v1474
        %v1563 = vpack.c.b16 %v1483, %v1475
        %v1564 = vpack.c.b16 %v1484, %v1476
        %v1565 = vpack.c.b16 %v1485, %v1477
        %v1566 = vpack.c.b16 %v1486, %v1478
        %v1567 = vpack.c.b16 %v1495, %v1487
        %v1568 = vpack.c.b16 %v1496, %v1488
        %v1569 = vpack.c.b16 %v1497, %v1489
        %v1570 = vpack.c.b16 %v1498, %v1490
        %v1571 = vpack.c.b16 %v1499, %v1491
        %v1572 = vpack.c.b16 %v1500, %v1492
        %v1573 = vpack.c.b16 %v1501, %v1493
        %v1574 = vpack.c.b16 %v1502, %v1494
        %v1575 = vpack.c.b16 %v1511, %v1503
        %v1576 = vpack.c.b16 %v1512, %v1504
        %v1577 = vpack.c.b16 %v1513, %v1505
        %v1578 = vpack.c.b16 %v1514, %v1506
        %v1579 = vpack.c.b16 %v1515, %v1507
        %v1580 = vpack.c.b16 %v1516, %v1508
        %v1581 = vpack.c.b16 %v1517, %v1509
        %v1582 = vpack.c.b16 %v1518, %v1510
        %1647 = vmatpush.bf16.msra.mxu0 %v1575
        %1648 = vmatpush.bf16.msra.mxu0 %v1567
        %1649 = vmatpush.bf16.msra.mxu0 %v1559
        %1650 = vmatpush.bf16.msra.mxu0 %v1551
        %1651 = vmatpush.bf16.msra.mxu0 %v1543
        %1652 = vmatpush.bf16.msra.mxu0 %v1535
        %1653 = vmatpush.bf16.msra.mxu0 %v1527
        %1654 = vmatpush.bf16.msra.mxu0 %v1519
        %1655 = vmatmul.bf16.gmra.mxu0 %v1325
        %v1656 = vpop.f32.mrf.mxu0
        %v1657 = vadd.f32 0.0, %v1656
        %v1658 = vpop.f32.mrf.mxu0
        %1659 = vdwg.mxu0
        %1660 = vmatpush.bf16.msra.mxu0 %v1576
        %1661 = vmatpush.bf16.msra.mxu0 %v1568
        %1662 = vmatpush.bf16.msra.mxu0 %v1560
        %1663 = vmatpush.bf16.msra.mxu0 %v1552
        %1664 = vmatpush.bf16.msra.mxu0 %v1544
        %1665 = vmatpush.bf16.msra.mxu0 %v1536
        %1666 = vmatpush.bf16.msra.mxu0 %v1528
        %1667 = vmatpush.bf16.msra.mxu0 %v1520
        %1668 = vmatmul.bf16.gmra.mxu0 %v1325
        %v1669 = vpop.f32.mrf.mxu0
        %v1670 = vadd.f32 0.0, %v1669
        %v1671 = vpop.f32.mrf.mxu0
        %1672 = vdwg.mxu0
        %1673 = vmatpush.bf16.msra.mxu0 %v1577
        %1674 = vmatpush.bf16.msra.mxu0 %v1569
        %1675 = vmatpush.bf16.msra.mxu0 %v1561
        %1676 = vmatpush.bf16.msra.mxu0 %v1553
        %1677 = vmatpush.bf16.msra.mxu0 %v1545
        %1678 = vmatpush.bf16.msra.mxu0 %v1537
        %1679 = vmatpush.bf16.msra.mxu0 %v1529
        %1680 = vmatpush.bf16.msra.mxu0 %v1521
        %1681 = vmatmul.bf16.gmra.mxu0 %v1325
        %v1682 = vpop.f32.mrf.mxu0
        %v1683 = vadd.f32 0.0, %v1682
        %v1684 = vpop.f32.mrf.mxu0
        %1685 = vdwg.mxu0
        %1686 = vmatpush.bf16.msra.mxu0 %v1578
        %1687 = vmatpush.bf16.msra.mxu0 %v1570
        %1688 = vmatpush.bf16.msra.mxu0 %v1562
        %1689 = vmatpush.bf16.msra.mxu0 %v1554
        %1690 = vmatpush.bf16.msra.mxu0 %v1546
        %1691 = vmatpush.bf16.msra.mxu0 %v1538
        %1692 = vmatpush.bf16.msra.mxu0 %v1530
        %1693 = vmatpush.bf16.msra.mxu0 %v1522
        %1694 = vmatmul.bf16.gmra.mxu0 %v1325
        %v1695 = vpop.f32.mrf.mxu0
        %v1696 = vadd.f32 0.0, %v1695
        %v1697 = vpop.f32.mrf.mxu0
        %1698 = vdwg.mxu0
        %1699 = vmatpush.bf16.msra.mxu0 %v1579
        %1700 = vmatpush.bf16.msra.mxu0 %v1571
        %1701 = vmatpush.bf16.msra.mxu0 %v1563
        %1702 = vmatpush.bf16.msra.mxu0 %v1555
        %1703 = vmatpush.bf16.msra.mxu0 %v1547
        %1704 = vmatpush.bf16.msra.mxu0 %v1539
        %1705 = vmatpush.bf16.msra.mxu0 %v1531
        %1706 = vmatpush.bf16.msra.mxu0 %v1523
        %1707 = vmatmul.bf16.gmra.mxu0 %v1325
        %v1708 = vpop.f32.mrf.mxu0
        %v1709 = vadd.f32 0.0, %v1708
        %v1710 = vpop.f32.mrf.mxu0
        %1711 = vdwg.mxu0
        %1712 = vmatpush.bf16.msra.mxu0 %v1580
        %1713 = vmatpush.bf16.msra.mxu0 %v1572
        %1714 = vmatpush.bf16.msra.mxu0 %v1564
        %1715 = vmatpush.bf16.msra.mxu0 %v1556
        %1716 = vmatpush.bf16.msra.mxu0 %v1548
        %1717 = vmatpush.bf16.msra.mxu0 %v1540
        %1718 = vmatpush.bf16.msra.mxu0 %v1532
        %1719 = vmatpush.bf16.msra.mxu0 %v1524
        %1720 = vmatmul.bf16.gmra.mxu0 %v1325
        %v1721 = vpop.f32.mrf.mxu0
        %v1722 = vadd.f32 0.0, %v1721
        %v1723 = vpop.f32.mrf.mxu0
        %1724 = vdwg.mxu0
        %1725 = vmatpush.bf16.msra.mxu0 %v1581
        %1726 = vmatpush.bf16.msra.mxu0 %v1573
        %1727 = vmatpush.bf16.msra.mxu0 %v1565
        %1728 = vmatpush.bf16.msra.mxu0 %v1557
        %1729 = vmatpush.bf16.msra.mxu0 %v1549
        %1730 = vmatpush.bf16.msra.mxu0 %v1541
        %1731 = vmatpush.bf16.msra.mxu0 %v1533
        %1732 = vmatpush.bf16.msra.mxu0 %v1525
        %1733 = vmatmul.bf16.gmra.mxu0 %v1325
        %v1734 = vpop.f32.mrf.mxu0
        %v1735 = vadd.f32 0.0, %v1734
        %v1736 = vpop.f32.mrf.mxu0
        %1737 = vdwg.mxu0
        %1738 = vmatpush.bf16.msra.mxu0 %v1582
        %1739 = vmatpush.bf16.msra.mxu0 %v1574
        %1740 = vmatpush.bf16.msra.mxu0 %v1566
        %1741 = vmatpush.bf16.msra.mxu0 %v1558
        %1742 = vmatpush.bf16.msra.mxu0 %v1550
        %1743 = vmatpush.bf16.msra.mxu0 %v1542
        %1744 = vmatpush.bf16.msra.mxu0 %v1534
        %1745 = vmatpush.bf16.msra.mxu0 %v1526
        %1746 = vmatmul.bf16.gmra.mxu0 %v1325
        %v1747 = vpop.f32.mrf.mxu0
        %v1748 = vadd.f32 0.0, %v1747
        %v1749 = vpop.f32.mrf.mxu0
        %1750 = vdwg.mxu0
        %v1751 = vadd.f32 %v1166, %v1657
        %v1752 = vadd.f32 %v1179, %v1670
        %v1753 = vadd.f32 %v1192, %v1683
        %v1754 = vadd.f32 %v1205, %v1696
        %v1755 = vadd.f32 %v1218, %v1709
        %v1756 = vadd.f32 %v1231, %v1722
        %v1757 = vadd.f32 %v1244, %v1735
        %v1758 = vadd.f32 %v1257, %v1748
        %s1759 = scalar_lea.vmem %s207, 1536 [#allocation5]
        %v1760 = vld [vmem:[%s1759] sm:$0xff]
        %v1761 = vld [vmem:[%s1759 + $0x8] sm:$0xff]
        %v1762 = vld [vmem:[%s1759 + $0x10] sm:$0xff]
        %v1763 = vld [vmem:[%s1759 + $0x18] sm:$0xff]
        %v1764 = vld [vmem:[%s1759 + $0x20] sm:$0xff]
        %v1765 = vld [vmem:[%s1759 + $0x28] sm:$0xff]
        %v1766 = vld [vmem:[%s1759 + $0x30] sm:$0xff]
        %v1767 = vld [vmem:[%s1759 + $0x38] sm:$0xff]
        %v1768 = vld [vmem:[%s1759 + $0x40] sm:$0xff]
        %v1769 = vld [vmem:[%s1759 + $0x48] sm:$0xff]
        %v1770 = vld [vmem:[%s1759 + $0x50] sm:$0xff]
        %v1771 = vld [vmem:[%s1759 + $0x58] sm:$0xff]
        %v1772 = vld [vmem:[%s1759 + $0x60] sm:$0xff]
        %v1773 = vld [vmem:[%s1759 + $0x68] sm:$0xff]
        %v1774 = vld [vmem:[%s1759 + $0x70] sm:$0xff]
        %v1775 = vld [vmem:[%s1759 + $0x78] sm:$0xff]
        %v1776 = vld [vmem:[%s1759 + $0x80] sm:$0xff]
        %v1777 = vld [vmem:[%s1759 + $0x88] sm:$0xff]
        %v1778 = vld [vmem:[%s1759 + $0x90] sm:$0xff]
        %v1779 = vld [vmem:[%s1759 + $0x98] sm:$0xff]
        %v1780 = vld [vmem:[%s1759 + $0xa0] sm:$0xff]
        %v1781 = vld [vmem:[%s1759 + $0xa8] sm:$0xff]
        %v1782 = vld [vmem:[%s1759 + $0xb0] sm:$0xff]
        %v1783 = vld [vmem:[%s1759 + $0xb8] sm:$0xff]
        %v1784 = vld [vmem:[%s1759 + $0xc0] sm:$0xff]
        %v1785 = vld [vmem:[%s1759 + $0xc8] sm:$0xff]
        %v1786 = vld [vmem:[%s1759 + $0xd0] sm:$0xff]
        %v1787 = vld [vmem:[%s1759 + $0xd8] sm:$0xff]
        %v1788 = vld [vmem:[%s1759 + $0xe0] sm:$0xff]
        %v1789 = vld [vmem:[%s1759 + $0xe8] sm:$0xff]
        %v1790 = vld [vmem:[%s1759 + $0xf0] sm:$0xff]
        %v1791 = vld [vmem:[%s1759 + $0xf8] sm:$0xff]
        %v1792 = vld [vmem:[%s1759 + $0x100] sm:$0xff]
        %v1793 = vld [vmem:[%s1759 + $0x108] sm:$0xff]
        %v1794 = vld [vmem:[%s1759 + $0x110] sm:$0xff]
        %v1795 = vld [vmem:[%s1759 + $0x118] sm:$0xff]
        %v1796 = vld [vmem:[%s1759 + $0x120] sm:$0xff]
        %v1797 = vld [vmem:[%s1759 + $0x128] sm:$0xff]
        %v1798 = vld [vmem:[%s1759 + $0x130] sm:$0xff]
        %v1799 = vld [vmem:[%s1759 + $0x138] sm:$0xff]
        %v1800 = vld [vmem:[%s1759 + $0x140] sm:$0xff]
        %v1801 = vld [vmem:[%s1759 + $0x148] sm:$0xff]
        %v1802 = vld [vmem:[%s1759 + $0x150] sm:$0xff]
        %v1803 = vld [vmem:[%s1759 + $0x158] sm:$0xff]
        %v1804 = vld [vmem:[%s1759 + $0x160] sm:$0xff]
        %v1805 = vld [vmem:[%s1759 + $0x168] sm:$0xff]
        %v1806 = vld [vmem:[%s1759 + $0x170] sm:$0xff]
        %v1807 = vld [vmem:[%s1759 + $0x178] sm:$0xff]
        %v1808 = vld [vmem:[%s1759 + $0x180] sm:$0xff]
        %v1809 = vld [vmem:[%s1759 + $0x188] sm:$0xff]
        %v1810 = vld [vmem:[%s1759 + $0x190] sm:$0xff]
        %v1811 = vld [vmem:[%s1759 + $0x198] sm:$0xff]
        %v1812 = vld [vmem:[%s1759 + $0x1a0] sm:$0xff]
        %v1813 = vld [vmem:[%s1759 + $0x1a8] sm:$0xff]
        %v1814 = vld [vmem:[%s1759 + $0x1b0] sm:$0xff]
        %v1815 = vld [vmem:[%s1759 + $0x1b8] sm:$0xff]
        %v1816 = vld [vmem:[%s1759 + $0x1c0] sm:$0xff]
        %v1817 = vld [vmem:[%s1759 + $0x1c8] sm:$0xff]
        %v1818 = vld [vmem:[%s1759 + $0x1d0] sm:$0xff]
        %v1819 = vld [vmem:[%s1759 + $0x1d8] sm:$0xff]
        %v1820 = vld [vmem:[%s1759 + $0x1e0] sm:$0xff]
        %v1821 = vld [vmem:[%s1759 + $0x1e8] sm:$0xff]
        %v1822 = vld [vmem:[%s1759 + $0x1f0] sm:$0xff]
        %v1823 = vld [vmem:[%s1759 + $0x1f8] sm:$0xff]
        %v1824 = vrot.slane %v409, 1
        %v1890 = vunpack.c.l.b16 %v1760
        %v1891 = vunpack.c.h.b16 %v1760
        %v1892 = vunpack.c.l.b16 %v1761
        %v1893 = vunpack.c.h.b16 %v1761
        %v1894 = vunpack.c.l.b16 %v1762
        %v1895 = vunpack.c.h.b16 %v1762
        %v1896 = vunpack.c.l.b16 %v1763
        %v1897 = vunpack.c.h.b16 %v1763
        %v1898 = vunpack.c.l.b16 %v1764
        %v1899 = vunpack.c.h.b16 %v1764
        %v1900 = vunpack.c.l.b16 %v1765
        %v1901 = vunpack.c.h.b16 %v1765
        %v1902 = vunpack.c.l.b16 %v1766
        %v1903 = vunpack.c.h.b16 %v1766
        %v1904 = vunpack.c.l.b16 %v1767
        %v1905 = vunpack.c.h.b16 %v1767
        %v1906 = vunpack.c.l.b16 %v1768
        %v1907 = vunpack.c.h.b16 %v1768
        %v1908 = vunpack.c.l.b16 %v1769
        %v1909 = vunpack.c.h.b16 %v1769
        %v1910 = vunpack.c.l.b16 %v1770
        %v1911 = vunpack.c.h.b16 %v1770
        %v1912 = vunpack.c.l.b16 %v1771
        %v1913 = vunpack.c.h.b16 %v1771
        %v1914 = vunpack.c.l.b16 %v1772
        %v1915 = vunpack.c.h.b16 %v1772
        %v1916 = vunpack.c.l.b16 %v1773
        %v1917 = vunpack.c.h.b16 %v1773
        %v1918 = vunpack.c.l.b16 %v1774
        %v1919 = vunpack.c.h.b16 %v1774
        %v1920 = vunpack.c.l.b16 %v1775
        %v1921 = vunpack.c.h.b16 %v1775
        %v1922 = vunpack.c.l.b16 %v1776
        %v1923 = vunpack.c.h.b16 %v1776
        %v1924 = vunpack.c.l.b16 %v1777
        %v1925 = vunpack.c.h.b16 %v1777
        %v1926 = vunpack.c.l.b16 %v1778
        %v1927 = vunpack.c.h.b16 %v1778
        %v1928 = vunpack.c.l.b16 %v1779
        %v1929 = vunpack.c.h.b16 %v1779
        %v1930 = vunpack.c.l.b16 %v1780
        %v1931 = vunpack.c.h.b16 %v1780
        %v1932 = vunpack.c.l.b16 %v1781
        %v1933 = vunpack.c.h.b16 %v1781
        %v1934 = vunpack.c.l.b16 %v1782
        %v1935 = vunpack.c.h.b16 %v1782
        %v1936 = vunpack.c.l.b16 %v1783
        %v1937 = vunpack.c.h.b16 %v1783
        %v1938 = vunpack.c.l.b16 %v1784
        %v1939 = vunpack.c.h.b16 %v1784
        %v1940 = vunpack.c.l.b16 %v1785
        %v1941 = vunpack.c.h.b16 %v1785
        %v1942 = vunpack.c.l.b16 %v1786
        %v1943 = vunpack.c.h.b16 %v1786
        %v1944 = vunpack.c.l.b16 %v1787
        %v1945 = vunpack.c.h.b16 %v1787
        %v1946 = vunpack.c.l.b16 %v1788
        %v1947 = vunpack.c.h.b16 %v1788
        %v1948 = vunpack.c.l.b16 %v1789
        %v1949 = vunpack.c.h.b16 %v1789
        %v1950 = vunpack.c.l.b16 %v1790
        %v1951 = vunpack.c.h.b16 %v1790
        %v1952 = vunpack.c.l.b16 %v1791
        %v1953 = vunpack.c.h.b16 %v1791
        %v1954 = vunpack.c.l.b16 %v1792
        %v1955 = vunpack.c.h.b16 %v1792
        %v1956 = vunpack.c.l.b16 %v1793
        %v1957 = vunpack.c.h.b16 %v1793
        %v1958 = vunpack.c.l.b16 %v1794
        %v1959 = vunpack.c.h.b16 %v1794
        %v1960 = vunpack.c.l.b16 %v1795
        %v1961 = vunpack.c.h.b16 %v1795
        %v1962 = vunpack.c.l.b16 %v1796
        %v1963 = vunpack.c.h.b16 %v1796
        %v1964 = vunpack.c.l.b16 %v1797
        %v1965 = vunpack.c.h.b16 %v1797
        %v1966 = vunpack.c.l.b16 %v1798
        %v1967 = vunpack.c.h.b16 %v1798
        %v1968 = vunpack.c.l.b16 %v1799
        %v1969 = vunpack.c.h.b16 %v1799
        %v1970 = vunpack.c.l.b16 %v1800
        %v1971 = vunpack.c.h.b16 %v1800
        %v1972 = vunpack.c.l.b16 %v1801
        %v1973 = vunpack.c.h.b16 %v1801
        %v1974 = vunpack.c.l.b16 %v1802
        %v1975 = vunpack.c.h.b16 %v1802
        %v1976 = vunpack.c.l.b16 %v1803
        %v1977 = vunpack.c.h.b16 %v1803
        %v1978 = vunpack.c.l.b16 %v1804
        %v1979 = vunpack.c.h.b16 %v1804
        %v1980 = vunpack.c.l.b16 %v1805
        %v1981 = vunpack.c.h.b16 %v1805
        %v1982 = vunpack.c.l.b16 %v1806
        %v1983 = vunpack.c.h.b16 %v1806
        %v1984 = vunpack.c.l.b16 %v1807
        %v1985 = vunpack.c.h.b16 %v1807
        %v1986 = vunpack.c.l.b16 %v1808
        %v1987 = vunpack.c.h.b16 %v1808
        %v1988 = vunpack.c.l.b16 %v1809
        %v1989 = vunpack.c.h.b16 %v1809
        %v1990 = vunpack.c.l.b16 %v1810
        %v1991 = vunpack.c.h.b16 %v1810
        %v1992 = vunpack.c.l.b16 %v1811
        %v1993 = vunpack.c.h.b16 %v1811
        %v1994 = vunpack.c.l.b16 %v1812
        %v1995 = vunpack.c.h.b16 %v1812
        %v1996 = vunpack.c.l.b16 %v1813
        %v1997 = vunpack.c.h.b16 %v1813
        %v1998 = vunpack.c.l.b16 %v1814
        %v1999 = vunpack.c.h.b16 %v1814
        %v2000 = vunpack.c.l.b16 %v1815
        %v2001 = vunpack.c.h.b16 %v1815
        %v2002 = vunpack.c.l.b16 %v1816
        %v2003 = vunpack.c.h.b16 %v1816
        %v2004 = vunpack.c.l.b16 %v1817
        %v2005 = vunpack.c.h.b16 %v1817
        %v2006 = vunpack.c.l.b16 %v1818
        %v2007 = vunpack.c.h.b16 %v1818
        %v2008 = vunpack.c.l.b16 %v1819
        %v2009 = vunpack.c.h.b16 %v1819
        %v2010 = vunpack.c.l.b16 %v1820
        %v2011 = vunpack.c.h.b16 %v1820
        %v2012 = vunpack.c.l.b16 %v1821
        %v2013 = vunpack.c.h.b16 %v1821
        %v2014 = vunpack.c.l.b16 %v1822
        %v2015 = vunpack.c.h.b16 %v1822
        %v2016 = vunpack.c.l.b16 %v1823
        %v2017 = vunpack.c.h.b16 %v1823
        %v2018 = vpack.c.b16 %v1898, %v1890
        %v2019 = vpack.c.b16 %v1899, %v1891
        %v2020 = vpack.c.b16 %v1900, %v1892
        %v2021 = vpack.c.b16 %v1901, %v1893
        %v2022 = vpack.c.b16 %v1902, %v1894
        %v2023 = vpack.c.b16 %v1903, %v1895
        %v2024 = vpack.c.b16 %v1904, %v1896
        %v2025 = vpack.c.b16 %v1905, %v1897
        %v2026 = vpack.c.b16 %v1914, %v1906
        %v2027 = vpack.c.b16 %v1915, %v1907
        %v2028 = vpack.c.b16 %v1916, %v1908
        %v2029 = vpack.c.b16 %v1917, %v1909
        %v2030 = vpack.c.b16 %v1918, %v1910
        %v2031 = vpack.c.b16 %v1919, %v1911
        %v2032 = vpack.c.b16 %v1920, %v1912
        %v2033 = vpack.c.b16 %v1921, %v1913
        %v2034 = vpack.c.b16 %v1930, %v1922
        %v2035 = vpack.c.b16 %v1931, %v1923
        %v2036 = vpack.c.b16 %v1932, %v1924
        %v2037 = vpack.c.b16 %v1933, %v1925
        %v2038 = vpack.c.b16 %v1934, %v1926
        %v2039 = vpack.c.b16 %v1935, %v1927
        %v2040 = vpack.c.b16 %v1936, %v1928
        %v2041 = vpack.c.b16 %v1937, %v1929
        %v2042 = vpack.c.b16 %v1946, %v1938
        %v2043 = vpack.c.b16 %v1947, %v1939
        %v2044 = vpack.c.b16 %v1948, %v1940
        %v2045 = vpack.c.b16 %v1949, %v1941
        %v2046 = vpack.c.b16 %v1950, %v1942
        %v2047 = vpack.c.b16 %v1951, %v1943
        %v2048 = vpack.c.b16 %v1952, %v1944
        %v2049 = vpack.c.b16 %v1953, %v1945
        %v2050 = vpack.c.b16 %v1962, %v1954
        %v2051 = vpack.c.b16 %v1963, %v1955
        %v2052 = vpack.c.b16 %v1964, %v1956
        %v2053 = vpack.c.b16 %v1965, %v1957
        %v2054 = vpack.c.b16 %v1966, %v1958
        %v2055 = vpack.c.b16 %v1967, %v1959
        %v2056 = vpack.c.b16 %v1968, %v1960
        %v2057 = vpack.c.b16 %v1969, %v1961
        %v2058 = vpack.c.b16 %v1978, %v1970
        %v2059 = vpack.c.b16 %v1979, %v1971
        %v2060 = vpack.c.b16 %v1980, %v1972
        %v2061 = vpack.c.b16 %v1981, %v1973
        %v2062 = vpack.c.b16 %v1982, %v1974
        %v2063 = vpack.c.b16 %v1983, %v1975
        %v2064 = vpack.c.b16 %v1984, %v1976
        %v2065 = vpack.c.b16 %v1985, %v1977
        %v2066 = vpack.c.b16 %v1994, %v1986
        %v2067 = vpack.c.b16 %v1995, %v1987
        %v2068 = vpack.c.b16 %v1996, %v1988
        %v2069 = vpack.c.b16 %v1997, %v1989
        %v2070 = vpack.c.b16 %v1998, %v1990
        %v2071 = vpack.c.b16 %v1999, %v1991
        %v2072 = vpack.c.b16 %v2000, %v1992
        %v2073 = vpack.c.b16 %v2001, %v1993
        %v2074 = vpack.c.b16 %v2010, %v2002
        %v2075 = vpack.c.b16 %v2011, %v2003
        %v2076 = vpack.c.b16 %v2012, %v2004
        %v2077 = vpack.c.b16 %v2013, %v2005
        %v2078 = vpack.c.b16 %v2014, %v2006
        %v2079 = vpack.c.b16 %v2015, %v2007
        %v2080 = vpack.c.b16 %v2016, %v2008
        %v2081 = vpack.c.b16 %v2017, %v2009
        %2146 = vmatpush.bf16.msra.mxu0 %v2074
        %2147 = vmatpush.bf16.msra.mxu0 %v2066
        %2148 = vmatpush.bf16.msra.mxu0 %v2058
        %2149 = vmatpush.bf16.msra.mxu0 %v2050
        %2150 = vmatpush.bf16.msra.mxu0 %v2042
        %2151 = vmatpush.bf16.msra.mxu0 %v2034
        %2152 = vmatpush.bf16.msra.mxu0 %v2026
        %2153 = vmatpush.bf16.msra.mxu0 %v2018
        %2154 = vmatmul.bf16.gmra.mxu0 %v1824
        %v2155 = vpop.f32.mrf.mxu0
        %v2156 = vadd.f32 0.0, %v2155
        %v2157 = vpop.f32.mrf.mxu0
        %2158 = vdwg.mxu0
        %2159 = vmatpush.bf16.msra.mxu0 %v2075
        %2160 = vmatpush.bf16.msra.mxu0 %v2067
        %2161 = vmatpush.bf16.msra.mxu0 %v2059
        %2162 = vmatpush.bf16.msra.mxu0 %v2051
        %2163 = vmatpush.bf16.msra.mxu0 %v2043
        %2164 = vmatpush.bf16.msra.mxu0 %v2035
        %2165 = vmatpush.bf16.msra.mxu0 %v2027
        %2166 = vmatpush.bf16.msra.mxu0 %v2019
        %2167 = vmatmul.bf16.gmra.mxu0 %v1824
        %v2168 = vpop.f32.mrf.mxu0
        %v2169 = vadd.f32 0.0, %v2168
        %v2170 = vpop.f32.mrf.mxu0
        %2171 = vdwg.mxu0
        %2172 = vmatpush.bf16.msra.mxu0 %v2076
        %2173 = vmatpush.bf16.msra.mxu0 %v2068
        %2174 = vmatpush.bf16.msra.mxu0 %v2060
        %2175 = vmatpush.bf16.msra.mxu0 %v2052
        %2176 = vmatpush.bf16.msra.mxu0 %v2044
        %2177 = vmatpush.bf16.msra.mxu0 %v2036
        %2178 = vmatpush.bf16.msra.mxu0 %v2028
        %2179 = vmatpush.bf16.msra.mxu0 %v2020
        %2180 = vmatmul.bf16.gmra.mxu0 %v1824
        %v2181 = vpop.f32.mrf.mxu0
        %v2182 = vadd.f32 0.0, %v2181
        %v2183 = vpop.f32.mrf.mxu0
        %2184 = vdwg.mxu0
        %2185 = vmatpush.bf16.msra.mxu0 %v2077
        %2186 = vmatpush.bf16.msra.mxu0 %v2069
        %2187 = vmatpush.bf16.msra.mxu0 %v2061
        %2188 = vmatpush.bf16.msra.mxu0 %v2053
        %2189 = vmatpush.bf16.msra.mxu0 %v2045
        %2190 = vmatpush.bf16.msra.mxu0 %v2037
        %2191 = vmatpush.bf16.msra.mxu0 %v2029
        %2192 = vmatpush.bf16.msra.mxu0 %v2021
        %2193 = vmatmul.bf16.gmra.mxu0 %v1824
        %v2194 = vpop.f32.mrf.mxu0
        %v2195 = vadd.f32 0.0, %v2194
        %v2196 = vpop.f32.mrf.mxu0
        %2197 = vdwg.mxu0
        %2198 = vmatpush.bf16.msra.mxu0 %v2078
        %2199 = vmatpush.bf16.msra.mxu0 %v2070
        %2200 = vmatpush.bf16.msra.mxu0 %v2062
        %2201 = vmatpush.bf16.msra.mxu0 %v2054
        %2202 = vmatpush.bf16.msra.mxu0 %v2046
        %2203 = vmatpush.bf16.msra.mxu0 %v2038
        %2204 = vmatpush.bf16.msra.mxu0 %v2030
        %2205 = vmatpush.bf16.msra.mxu0 %v2022
        %2206 = vmatmul.bf16.gmra.mxu0 %v1824
        %v2207 = vpop.f32.mrf.mxu0
        %v2208 = vadd.f32 0.0, %v2207
        %v2209 = vpop.f32.mrf.mxu0
        %2210 = vdwg.mxu0
        %2211 = vmatpush.bf16.msra.mxu0 %v2079
        %2212 = vmatpush.bf16.msra.mxu0 %v2071
        %2213 = vmatpush.bf16.msra.mxu0 %v2063
        %2214 = vmatpush.bf16.msra.mxu0 %v2055
        %2215 = vmatpush.bf16.msra.mxu0 %v2047
        %2216 = vmatpush.bf16.msra.mxu0 %v2039
        %2217 = vmatpush.bf16.msra.mxu0 %v2031
        %2218 = vmatpush.bf16.msra.mxu0 %v2023
        %2219 = vmatmul.bf16.gmra.mxu0 %v1824
        %v2220 = vpop.f32.mrf.mxu0
        %v2221 = vadd.f32 0.0, %v2220
        %v2222 = vpop.f32.mrf.mxu0
        %2223 = vdwg.mxu0
        %2224 = vmatpush.bf16.msra.mxu0 %v2080
        %2225 = vmatpush.bf16.msra.mxu0 %v2072
        %2226 = vmatpush.bf16.msra.mxu0 %v2064
        %2227 = vmatpush.bf16.msra.mxu0 %v2056
        %2228 = vmatpush.bf16.msra.mxu0 %v2048
        %2229 = vmatpush.bf16.msra.mxu0 %v2040
        %2230 = vmatpush.bf16.msra.mxu0 %v2032
        %2231 = vmatpush.bf16.msra.mxu0 %v2024
        %2232 = vmatmul.bf16.gmra.mxu0 %v1824
        %v2233 = vpop.f32.mrf.mxu0
        %v2234 = vadd.f32 0.0, %v2233
        %v2235 = vpop.f32.mrf.mxu0
        %2236 = vdwg.mxu0
        %2237 = vmatpush.bf16.msra.mxu0 %v2081
        %2238 = vmatpush.bf16.msra.mxu0 %v2073
        %2239 = vmatpush.bf16.msra.mxu0 %v2065
        %2240 = vmatpush.bf16.msra.mxu0 %v2057
        %2241 = vmatpush.bf16.msra.mxu0 %v2049
        %2242 = vmatpush.bf16.msra.mxu0 %v2041
        %2243 = vmatpush.bf16.msra.mxu0 %v2033
        %2244 = vmatpush.bf16.msra.mxu0 %v2025
        %2245 = vmatmul.bf16.gmra.mxu0 %v1824
        %v2246 = vpop.f32.mrf.mxu0
        %v2247 = vadd.f32 0.0, %v2246
        %v2248 = vpop.f32.mrf.mxu0
        %2249 = vdwg.mxu0
        %v2250 = vadd.f32 %v1751, %v2156
        %v2251 = vadd.f32 %v1752, %v2169
        %v2252 = vadd.f32 %v1753, %v2182
        %v2253 = vadd.f32 %v1754, %v2195
        %v2254 = vadd.f32 %v1755, %v2208
        %v2255 = vadd.f32 %v1756, %v2221
        %v2256 = vadd.f32 %v1757, %v2234
        %v2257 = vadd.f32 %v1758, %v2247
        %s2258 = scalar_lea.vmem %s207, 2048 [#allocation5]
        %v2259 = vld [vmem:[%s2258] sm:$0xff]
        %v2260 = vld [vmem:[%s2258 + $0x8] sm:$0xff]
        %v2261 = vld [vmem:[%s2258 + $0x10] sm:$0xff]
        %v2262 = vld [vmem:[%s2258 + $0x18] sm:$0xff]
        %v2263 = vld [vmem:[%s2258 + $0x20] sm:$0xff]
        %v2264 = vld [vmem:[%s2258 + $0x28] sm:$0xff]
        %v2265 = vld [vmem:[%s2258 + $0x30] sm:$0xff]
        %v2266 = vld [vmem:[%s2258 + $0x38] sm:$0xff]
        %v2267 = vld [vmem:[%s2258 + $0x40] sm:$0xff]
        %v2268 = vld [vmem:[%s2258 + $0x48] sm:$0xff]
        %v2269 = vld [vmem:[%s2258 + $0x50] sm:$0xff]
        %v2270 = vld [vmem:[%s2258 + $0x58] sm:$0xff]
        %v2271 = vld [vmem:[%s2258 + $0x60] sm:$0xff]
        %v2272 = vld [vmem:[%s2258 + $0x68] sm:$0xff]
        %v2273 = vld [vmem:[%s2258 + $0x70] sm:$0xff]
        %v2274 = vld [vmem:[%s2258 + $0x78] sm:$0xff]
        %v2275 = vld [vmem:[%s2258 + $0x80] sm:$0xff]
        %v2276 = vld [vmem:[%s2258 + $0x88] sm:$0xff]
        %v2277 = vld [vmem:[%s2258 + $0x90] sm:$0xff]
        %v2278 = vld [vmem:[%s2258 + $0x98] sm:$0xff]
        %v2279 = vld [vmem:[%s2258 + $0xa0] sm:$0xff]
        %v2280 = vld [vmem:[%s2258 + $0xa8] sm:$0xff]
        %v2281 = vld [vmem:[%s2258 + $0xb0] sm:$0xff]
        %v2282 = vld [vmem:[%s2258 + $0xb8] sm:$0xff]
        %v2283 = vld [vmem:[%s2258 + $0xc0] sm:$0xff]
        %v2284 = vld [vmem:[%s2258 + $0xc8] sm:$0xff]
        %v2285 = vld [vmem:[%s2258 + $0xd0] sm:$0xff]
        %v2286 = vld [vmem:[%s2258 + $0xd8] sm:$0xff]
        %v2287 = vld [vmem:[%s2258 + $0xe0] sm:$0xff]
        %v2288 = vld [vmem:[%s2258 + $0xe8] sm:$0xff]
        %v2289 = vld [vmem:[%s2258 + $0xf0] sm:$0xff]
        %v2290 = vld [vmem:[%s2258 + $0xf8] sm:$0xff]
        %v2291 = vld [vmem:[%s2258 + $0x100] sm:$0xff]
        %v2292 = vld [vmem:[%s2258 + $0x108] sm:$0xff]
        %v2293 = vld [vmem:[%s2258 + $0x110] sm:$0xff]
        %v2294 = vld [vmem:[%s2258 + $0x118] sm:$0xff]
        %v2295 = vld [vmem:[%s2258 + $0x120] sm:$0xff]
        %v2296 = vld [vmem:[%s2258 + $0x128] sm:$0xff]
        %v2297 = vld [vmem:[%s2258 + $0x130] sm:$0xff]
        %v2298 = vld [vmem:[%s2258 + $0x138] sm:$0xff]
        %v2299 = vld [vmem:[%s2258 + $0x140] sm:$0xff]
        %v2300 = vld [vmem:[%s2258 + $0x148] sm:$0xff]
        %v2301 = vld [vmem:[%s2258 + $0x150] sm:$0xff]
        %v2302 = vld [vmem:[%s2258 + $0x158] sm:$0xff]
        %v2303 = vld [vmem:[%s2258 + $0x160] sm:$0xff]
        %v2304 = vld [vmem:[%s2258 + $0x168] sm:$0xff]
        %v2305 = vld [vmem:[%s2258 + $0x170] sm:$0xff]
        %v2306 = vld [vmem:[%s2258 + $0x178] sm:$0xff]
        %v2307 = vld [vmem:[%s2258 + $0x180] sm:$0xff]
        %v2308 = vld [vmem:[%s2258 + $0x188] sm:$0xff]
        %v2309 = vld [vmem:[%s2258 + $0x190] sm:$0xff]
        %v2310 = vld [vmem:[%s2258 + $0x198] sm:$0xff]
        %v2311 = vld [vmem:[%s2258 + $0x1a0] sm:$0xff]
        %v2312 = vld [vmem:[%s2258 + $0x1a8] sm:$0xff]
        %v2313 = vld [vmem:[%s2258 + $0x1b0] sm:$0xff]
        %v2314 = vld [vmem:[%s2258 + $0x1b8] sm:$0xff]
        %v2315 = vld [vmem:[%s2258 + $0x1c0] sm:$0xff]
        %v2316 = vld [vmem:[%s2258 + $0x1c8] sm:$0xff]
        %v2317 = vld [vmem:[%s2258 + $0x1d0] sm:$0xff]
        %v2318 = vld [vmem:[%s2258 + $0x1d8] sm:$0xff]
        %v2319 = vld [vmem:[%s2258 + $0x1e0] sm:$0xff]
        %v2320 = vld [vmem:[%s2258 + $0x1e8] sm:$0xff]
        %v2321 = vld [vmem:[%s2258 + $0x1f0] sm:$0xff]
        %v2322 = vld [vmem:[%s2258 + $0x1f8] sm:$0xff]
        %v2323 = vrot.slane %v407, 2
        %v2389 = vunpack.c.l.b16 %v2259
        %v2390 = vunpack.c.h.b16 %v2259
        %v2391 = vunpack.c.l.b16 %v2260
        %v2392 = vunpack.c.h.b16 %v2260
        %v2393 = vunpack.c.l.b16 %v2261
        %v2394 = vunpack.c.h.b16 %v2261
        %v2395 = vunpack.c.l.b16 %v2262
        %v2396 = vunpack.c.h.b16 %v2262
        %v2397 = vunpack.c.l.b16 %v2263
        %v2398 = vunpack.c.h.b16 %v2263
        %v2399 = vunpack.c.l.b16 %v2264
        %v2400 = vunpack.c.h.b16 %v2264
        %v2401 = vunpack.c.l.b16 %v2265
        %v2402 = vunpack.c.h.b16 %v2265
        %v2403 = vunpack.c.l.b16 %v2266
        %v2404 = vunpack.c.h.b16 %v2266
        %v2405 = vunpack.c.l.b16 %v2267
        %v2406 = vunpack.c.h.b16 %v2267
        %v2407 = vunpack.c.l.b16 %v2268
        %v2408 = vunpack.c.h.b16 %v2268
        %v2409 = vunpack.c.l.b16 %v2269
        %v2410 = vunpack.c.h.b16 %v2269
        %v2411 = vunpack.c.l.b16 %v2270
        %v2412 = vunpack.c.h.b16 %v2270
        %v2413 = vunpack.c.l.b16 %v2271
        %v2414 = vunpack.c.h.b16 %v2271
        %v2415 = vunpack.c.l.b16 %v2272
        %v2416 = vunpack.c.h.b16 %v2272
        %v2417 = vunpack.c.l.b16 %v2273
        %v2418 = vunpack.c.h.b16 %v2273
        %v2419 = vunpack.c.l.b16 %v2274
        %v2420 = vunpack.c.h.b16 %v2274
        %v2421 = vunpack.c.l.b16 %v2275
        %v2422 = vunpack.c.h.b16 %v2275
        %v2423 = vunpack.c.l.b16 %v2276
        %v2424 = vunpack.c.h.b16 %v2276
        %v2425 = vunpack.c.l.b16 %v2277
        %v2426 = vunpack.c.h.b16 %v2277
        %v2427 = vunpack.c.l.b16 %v2278
        %v2428 = vunpack.c.h.b16 %v2278
        %v2429 = vunpack.c.l.b16 %v2279
        %v2430 = vunpack.c.h.b16 %v2279
        %v2431 = vunpack.c.l.b16 %v2280
        %v2432 = vunpack.c.h.b16 %v2280
        %v2433 = vunpack.c.l.b16 %v2281
        %v2434 = vunpack.c.h.b16 %v2281
        %v2435 = vunpack.c.l.b16 %v2282
        %v2436 = vunpack.c.h.b16 %v2282
        %v2437 = vunpack.c.l.b16 %v2283
        %v2438 = vunpack.c.h.b16 %v2283
        %v2439 = vunpack.c.l.b16 %v2284
        %v2440 = vunpack.c.h.b16 %v2284
        %v2441 = vunpack.c.l.b16 %v2285
        %v2442 = vunpack.c.h.b16 %v2285
        %v2443 = vunpack.c.l.b16 %v2286
        %v2444 = vunpack.c.h.b16 %v2286
        %v2445 = vunpack.c.l.b16 %v2287
        %v2446 = vunpack.c.h.b16 %v2287
        %v2447 = vunpack.c.l.b16 %v2288
        %v2448 = vunpack.c.h.b16 %v2288
        %v2449 = vunpack.c.l.b16 %v2289
        %v2450 = vunpack.c.h.b16 %v2289
        %v2451 = vunpack.c.l.b16 %v2290
        %v2452 = vunpack.c.h.b16 %v2290
        %v2453 = vunpack.c.l.b16 %v2291
        %v2454 = vunpack.c.h.b16 %v2291
        %v2455 = vunpack.c.l.b16 %v2292
        %v2456 = vunpack.c.h.b16 %v2292
        %v2457 = vunpack.c.l.b16 %v2293
        %v2458 = vunpack.c.h.b16 %v2293
        %v2459 = vunpack.c.l.b16 %v2294
        %v2460 = vunpack.c.h.b16 %v2294
        %v2461 = vunpack.c.l.b16 %v2295
        %v2462 = vunpack.c.h.b16 %v2295
        %v2463 = vunpack.c.l.b16 %v2296
        %v2464 = vunpack.c.h.b16 %v2296
        %v2465 = vunpack.c.l.b16 %v2297
        %v2466 = vunpack.c.h.b16 %v2297
        %v2467 = vunpack.c.l.b16 %v2298
        %v2468 = vunpack.c.h.b16 %v2298
        %v2469 = vunpack.c.l.b16 %v2299
        %v2470 = vunpack.c.h.b16 %v2299
        %v2471 = vunpack.c.l.b16 %v2300
        %v2472 = vunpack.c.h.b16 %v2300
        %v2473 = vunpack.c.l.b16 %v2301
        %v2474 = vunpack.c.h.b16 %v2301
        %v2475 = vunpack.c.l.b16 %v2302
        %v2476 = vunpack.c.h.b16 %v2302
        %v2477 = vunpack.c.l.b16 %v2303
        %v2478 = vunpack.c.h.b16 %v2303
        %v2479 = vunpack.c.l.b16 %v2304
        %v2480 = vunpack.c.h.b16 %v2304
        %v2481 = vunpack.c.l.b16 %v2305
        %v2482 = vunpack.c.h.b16 %v2305
        %v2483 = vunpack.c.l.b16 %v2306
        %v2484 = vunpack.c.h.b16 %v2306
        %v2485 = vunpack.c.l.b16 %v2307
        %v2486 = vunpack.c.h.b16 %v2307
        %v2487 = vunpack.c.l.b16 %v2308
        %v2488 = vunpack.c.h.b16 %v2308
        %v2489 = vunpack.c.l.b16 %v2309
        %v2490 = vunpack.c.h.b16 %v2309
        %v2491 = vunpack.c.l.b16 %v2310
        %v2492 = vunpack.c.h.b16 %v2310
        %v2493 = vunpack.c.l.b16 %v2311
        %v2494 = vunpack.c.h.b16 %v2311
        %v2495 = vunpack.c.l.b16 %v2312
        %v2496 = vunpack.c.h.b16 %v2312
        %v2497 = vunpack.c.l.b16 %v2313
        %v2498 = vunpack.c.h.b16 %v2313
        %v2499 = vunpack.c.l.b16 %v2314
        %v2500 = vunpack.c.h.b16 %v2314
        %v2501 = vunpack.c.l.b16 %v2315
        %v2502 = vunpack.c.h.b16 %v2315
        %v2503 = vunpack.c.l.b16 %v2316
        %v2504 = vunpack.c.h.b16 %v2316
        %v2505 = vunpack.c.l.b16 %v2317
        %v2506 = vunpack.c.h.b16 %v2317
        %v2507 = vunpack.c.l.b16 %v2318
        %v2508 = vunpack.c.h.b16 %v2318
        %v2509 = vunpack.c.l.b16 %v2319
        %v2510 = vunpack.c.h.b16 %v2319
        %v2511 = vunpack.c.l.b16 %v2320
        %v2512 = vunpack.c.h.b16 %v2320
        %v2513 = vunpack.c.l.b16 %v2321
        %v2514 = vunpack.c.h.b16 %v2321
        %v2515 = vunpack.c.l.b16 %v2322
        %v2516 = vunpack.c.h.b16 %v2322
        %v2517 = vpack.c.b16 %v2397, %v2389
        %v2518 = vpack.c.b16 %v2398, %v2390
        %v2519 = vpack.c.b16 %v2399, %v2391
        %v2520 = vpack.c.b16 %v2400, %v2392
        %v2521 = vpack.c.b16 %v2401, %v2393
        %v2522 = vpack.c.b16 %v2402, %v2394
        %v2523 = vpack.c.b16 %v2403, %v2395
        %v2524 = vpack.c.b16 %v2404, %v2396
        %v2525 = vpack.c.b16 %v2413, %v2405
        %v2526 = vpack.c.b16 %v2414, %v2406
        %v2527 = vpack.c.b16 %v2415, %v2407
        %v2528 = vpack.c.b16 %v2416, %v2408
        %v2529 = vpack.c.b16 %v2417, %v2409
        %v2530 = vpack.c.b16 %v2418, %v2410
        %v2531 = vpack.c.b16 %v2419, %v2411
        %v2532 = vpack.c.b16 %v2420, %v2412
        %v2533 = vpack.c.b16 %v2429, %v2421
        %v2534 = vpack.c.b16 %v2430, %v2422
        %v2535 = vpack.c.b16 %v2431, %v2423
        %v2536 = vpack.c.b16 %v2432, %v2424
        %v2537 = vpack.c.b16 %v2433, %v2425
        %v2538 = vpack.c.b16 %v2434, %v2426
        %v2539 = vpack.c.b16 %v2435, %v2427
        %v2540 = vpack.c.b16 %v2436, %v2428
        %v2541 = vpack.c.b16 %v2445, %v2437
        %v2542 = vpack.c.b16 %v2446, %v2438
        %v2543 = vpack.c.b16 %v2447, %v2439
        %v2544 = vpack.c.b16 %v2448, %v2440
        %v2545 = vpack.c.b16 %v2449, %v2441
        %v2546 = vpack.c.b16 %v2450, %v2442
        %v2547 = vpack.c.b16 %v2451, %v2443
        %v2548 = vpack.c.b16 %v2452, %v2444
        %v2549 = vpack.c.b16 %v2461, %v2453
        %v2550 = vpack.c.b16 %v2462, %v2454
        %v2551 = vpack.c.b16 %v2463, %v2455
        %v2552 = vpack.c.b16 %v2464, %v2456
        %v2553 = vpack.c.b16 %v2465, %v2457
        %v2554 = vpack.c.b16 %v2466, %v2458
        %v2555 = vpack.c.b16 %v2467, %v2459
        %v2556 = vpack.c.b16 %v2468, %v2460
        %v2557 = vpack.c.b16 %v2477, %v2469
        %v2558 = vpack.c.b16 %v2478, %v2470
        %v2559 = vpack.c.b16 %v2479, %v2471
        %v2560 = vpack.c.b16 %v2480, %v2472
        %v2561 = vpack.c.b16 %v2481, %v2473
        %v2562 = vpack.c.b16 %v2482, %v2474
        %v2563 = vpack.c.b16 %v2483, %v2475
        %v2564 = vpack.c.b16 %v2484, %v2476
        %v2565 = vpack.c.b16 %v2493, %v2485
        %v2566 = vpack.c.b16 %v2494, %v2486
        %v2567 = vpack.c.b16 %v2495, %v2487
        %v2568 = vpack.c.b16 %v2496, %v2488
        %v2569 = vpack.c.b16 %v2497, %v2489
        %v2570 = vpack.c.b16 %v2498, %v2490
        %v2571 = vpack.c.b16 %v2499, %v2491
        %v2572 = vpack.c.b16 %v2500, %v2492
        %v2573 = vpack.c.b16 %v2509, %v2501
        %v2574 = vpack.c.b16 %v2510, %v2502
        %v2575 = vpack.c.b16 %v2511, %v2503
        %v2576 = vpack.c.b16 %v2512, %v2504
        %v2577 = vpack.c.b16 %v2513, %v2505
        %v2578 = vpack.c.b16 %v2514, %v2506
        %v2579 = vpack.c.b16 %v2515, %v2507
        %v2580 = vpack.c.b16 %v2516, %v2508
        %2645 = vmatpush.bf16.msra.mxu0 %v2573
        %2646 = vmatpush.bf16.msra.mxu0 %v2565
        %2647 = vmatpush.bf16.msra.mxu0 %v2557
        %2648 = vmatpush.bf16.msra.mxu0 %v2549
        %2649 = vmatpush.bf16.msra.mxu0 %v2541
        %2650 = vmatpush.bf16.msra.mxu0 %v2533
        %2651 = vmatpush.bf16.msra.mxu0 %v2525
        %2652 = vmatpush.bf16.msra.mxu0 %v2517
        %2653 = vmatmul.bf16.gmra.mxu0 %v2323
        %v2654 = vpop.f32.mrf.mxu0
        %v2655 = vadd.f32 0.0, %v2654
        %v2656 = vpop.f32.mrf.mxu0
        %2657 = vdwg.mxu0
        %2658 = vmatpush.bf16.msra.mxu0 %v2574
        %2659 = vmatpush.bf16.msra.mxu0 %v2566
        %2660 = vmatpush.bf16.msra.mxu0 %v2558
        %2661 = vmatpush.bf16.msra.mxu0 %v2550
        %2662 = vmatpush.bf16.msra.mxu0 %v2542
        %2663 = vmatpush.bf16.msra.mxu0 %v2534
        %2664 = vmatpush.bf16.msra.mxu0 %v2526
        %2665 = vmatpush.bf16.msra.mxu0 %v2518
        %2666 = vmatmul.bf16.gmra.mxu0 %v2323
        %v2667 = vpop.f32.mrf.mxu0
        %v2668 = vadd.f32 0.0, %v2667
        %v2669 = vpop.f32.mrf.mxu0
        %2670 = vdwg.mxu0
        %2671 = vmatpush.bf16.msra.mxu0 %v2575
        %2672 = vmatpush.bf16.msra.mxu0 %v2567
        %2673 = vmatpush.bf16.msra.mxu0 %v2559
        %2674 = vmatpush.bf16.msra.mxu0 %v2551
        %2675 = vmatpush.bf16.msra.mxu0 %v2543
        %2676 = vmatpush.bf16.msra.mxu0 %v2535
        %2677 = vmatpush.bf16.msra.mxu0 %v2527
        %2678 = vmatpush.bf16.msra.mxu0 %v2519
        %2679 = vmatmul.bf16.gmra.mxu0 %v2323
        %v2680 = vpop.f32.mrf.mxu0
        %v2681 = vadd.f32 0.0, %v2680
        %v2682 = vpop.f32.mrf.mxu0
        %2683 = vdwg.mxu0
        %2684 = vmatpush.bf16.msra.mxu0 %v2576
        %2685 = vmatpush.bf16.msra.mxu0 %v2568
        %2686 = vmatpush.bf16.msra.mxu0 %v2560
        %2687 = vmatpush.bf16.msra.mxu0 %v2552
        %2688 = vmatpush.bf16.msra.mxu0 %v2544
        %2689 = vmatpush.bf16.msra.mxu0 %v2536
        %2690 = vmatpush.bf16.msra.mxu0 %v2528
        %2691 = vmatpush.bf16.msra.mxu0 %v2520
        %2692 = vmatmul.bf16.gmra.mxu0 %v2323
        %v2693 = vpop.f32.mrf.mxu0
        %v2694 = vadd.f32 0.0, %v2693
        %v2695 = vpop.f32.mrf.mxu0
        %2696 = vdwg.mxu0
        %2697 = vmatpush.bf16.msra.mxu0 %v2577
        %2698 = vmatpush.bf16.msra.mxu0 %v2569
        %2699 = vmatpush.bf16.msra.mxu0 %v2561
        %2700 = vmatpush.bf16.msra.mxu0 %v2553
        %2701 = vmatpush.bf16.msra.mxu0 %v2545
        %2702 = vmatpush.bf16.msra.mxu0 %v2537
        %2703 = vmatpush.bf16.msra.mxu0 %v2529
        %2704 = vmatpush.bf16.msra.mxu0 %v2521
        %2705 = vmatmul.bf16.gmra.mxu0 %v2323
        %v2706 = vpop.f32.mrf.mxu0
        %v2707 = vadd.f32 0.0, %v2706
        %v2708 = vpop.f32.mrf.mxu0
        %2709 = vdwg.mxu0
        %2710 = vmatpush.bf16.msra.mxu0 %v2578
        %2711 = vmatpush.bf16.msra.mxu0 %v2570
        %2712 = vmatpush.bf16.msra.mxu0 %v2562
        %2713 = vmatpush.bf16.msra.mxu0 %v2554
        %2714 = vmatpush.bf16.msra.mxu0 %v2546
        %2715 = vmatpush.bf16.msra.mxu0 %v2538
        %2716 = vmatpush.bf16.msra.mxu0 %v2530
        %2717 = vmatpush.bf16.msra.mxu0 %v2522
        %2718 = vmatmul.bf16.gmra.mxu0 %v2323
        %v2719 = vpop.f32.mrf.mxu0
        %v2720 = vadd.f32 0.0, %v2719
        %v2721 = vpop.f32.mrf.mxu0
        %2722 = vdwg.mxu0
        %2723 = vmatpush.bf16.msra.mxu0 %v2579
        %2724 = vmatpush.bf16.msra.mxu0 %v2571
        %2725 = vmatpush.bf16.msra.mxu0 %v2563
        %2726 = vmatpush.bf16.msra.mxu0 %v2555
        %2727 = vmatpush.bf16.msra.mxu0 %v2547
        %2728 = vmatpush.bf16.msra.mxu0 %v2539
        %2729 = vmatpush.bf16.msra.mxu0 %v2531
        %2730 = vmatpush.bf16.msra.mxu0 %v2523
        %2731 = vmatmul.bf16.gmra.mxu0 %v2323
        %v2732 = vpop.f32.mrf.mxu0
        %v2733 = vadd.f32 0.0, %v2732
        %v2734 = vpop.f32.mrf.mxu0
        %2735 = vdwg.mxu0
        %2736 = vmatpush.bf16.msra.mxu0 %v2580
        %2737 = vmatpush.bf16.msra.mxu0 %v2572
        %2738 = vmatpush.bf16.msra.mxu0 %v2564
        %2739 = vmatpush.bf16.msra.mxu0 %v2556
        %2740 = vmatpush.bf16.msra.mxu0 %v2548
        %2741 = vmatpush.bf16.msra.mxu0 %v2540
        %2742 = vmatpush.bf16.msra.mxu0 %v2532
        %2743 = vmatpush.bf16.msra.mxu0 %v2524
        %2744 = vmatmul.bf16.gmra.mxu0 %v2323
        %v2745 = vpop.f32.mrf.mxu0
        %v2746 = vadd.f32 0.0, %v2745
        %v2747 = vpop.f32.mrf.mxu0
        %2748 = vdwg.mxu0
        %v2749 = vadd.f32 %v2250, %v2655
        %v2750 = vadd.f32 %v2251, %v2668
        %v2751 = vadd.f32 %v2252, %v2681
        %v2752 = vadd.f32 %v2253, %v2694
        %v2753 = vadd.f32 %v2254, %v2707
        %v2754 = vadd.f32 %v2255, %v2720
        %v2755 = vadd.f32 %v2256, %v2733
        %v2756 = vadd.f32 %v2257, %v2746
        %s2757 = scalar_lea.vmem %s207, 2560 [#allocation5]
        %v2758 = vld [vmem:[%s2757] sm:$0xff]
        %v2759 = vld [vmem:[%s2757 + $0x8] sm:$0xff]
        %v2760 = vld [vmem:[%s2757 + $0x10] sm:$0xff]
        %v2761 = vld [vmem:[%s2757 + $0x18] sm:$0xff]
        %v2762 = vld [vmem:[%s2757 + $0x20] sm:$0xff]
        %v2763 = vld [vmem:[%s2757 + $0x28] sm:$0xff]
        %v2764 = vld [vmem:[%s2757 + $0x30] sm:$0xff]
        %v2765 = vld [vmem:[%s2757 + $0x38] sm:$0xff]
        %v2766 = vld [vmem:[%s2757 + $0x40] sm:$0xff]
        %v2767 = vld [vmem:[%s2757 + $0x48] sm:$0xff]
        %v2768 = vld [vmem:[%s2757 + $0x50] sm:$0xff]
        %v2769 = vld [vmem:[%s2757 + $0x58] sm:$0xff]
        %v2770 = vld [vmem:[%s2757 + $0x60] sm:$0xff]
        %v2771 = vld [vmem:[%s2757 + $0x68] sm:$0xff]
        %v2772 = vld [vmem:[%s2757 + $0x70] sm:$0xff]
        %v2773 = vld [vmem:[%s2757 + $0x78] sm:$0xff]
        %v2774 = vld [vmem:[%s2757 + $0x80] sm:$0xff]
        %v2775 = vld [vmem:[%s2757 + $0x88] sm:$0xff]
        %v2776 = vld [vmem:[%s2757 + $0x90] sm:$0xff]
        %v2777 = vld [vmem:[%s2757 + $0x98] sm:$0xff]
        %v2778 = vld [vmem:[%s2757 + $0xa0] sm:$0xff]
        %v2779 = vld [vmem:[%s2757 + $0xa8] sm:$0xff]
        %v2780 = vld [vmem:[%s2757 + $0xb0] sm:$0xff]
        %v2781 = vld [vmem:[%s2757 + $0xb8] sm:$0xff]
        %v2782 = vld [vmem:[%s2757 + $0xc0] sm:$0xff]
        %v2783 = vld [vmem:[%s2757 + $0xc8] sm:$0xff]
        %v2784 = vld [vmem:[%s2757 + $0xd0] sm:$0xff]
        %v2785 = vld [vmem:[%s2757 + $0xd8] sm:$0xff]
        %v2786 = vld [vmem:[%s2757 + $0xe0] sm:$0xff]
        %v2787 = vld [vmem:[%s2757 + $0xe8] sm:$0xff]
        %v2788 = vld [vmem:[%s2757 + $0xf0] sm:$0xff]
        %v2789 = vld [vmem:[%s2757 + $0xf8] sm:$0xff]
        %v2790 = vld [vmem:[%s2757 + $0x100] sm:$0xff]
        %v2791 = vld [vmem:[%s2757 + $0x108] sm:$0xff]
        %v2792 = vld [vmem:[%s2757 + $0x110] sm:$0xff]
        %v2793 = vld [vmem:[%s2757 + $0x118] sm:$0xff]
        %v2794 = vld [vmem:[%s2757 + $0x120] sm:$0xff]
        %v2795 = vld [vmem:[%s2757 + $0x128] sm:$0xff]
        %v2796 = vld [vmem:[%s2757 + $0x130] sm:$0xff]
        %v2797 = vld [vmem:[%s2757 + $0x138] sm:$0xff]
        %v2798 = vld [vmem:[%s2757 + $0x140] sm:$0xff]
        %v2799 = vld [vmem:[%s2757 + $0x148] sm:$0xff]
        %v2800 = vld [vmem:[%s2757 + $0x150] sm:$0xff]
        %v2801 = vld [vmem:[%s2757 + $0x158] sm:$0xff]
        %v2802 = vld [vmem:[%s2757 + $0x160] sm:$0xff]
        %v2803 = vld [vmem:[%s2757 + $0x168] sm:$0xff]
        %v2804 = vld [vmem:[%s2757 + $0x170] sm:$0xff]
        %v2805 = vld [vmem:[%s2757 + $0x178] sm:$0xff]
        %v2806 = vld [vmem:[%s2757 + $0x180] sm:$0xff]
        %v2807 = vld [vmem:[%s2757 + $0x188] sm:$0xff]
        %v2808 = vld [vmem:[%s2757 + $0x190] sm:$0xff]
        %v2809 = vld [vmem:[%s2757 + $0x198] sm:$0xff]
        %v2810 = vld [vmem:[%s2757 + $0x1a0] sm:$0xff]
        %v2811 = vld [vmem:[%s2757 + $0x1a8] sm:$0xff]
        %v2812 = vld [vmem:[%s2757 + $0x1b0] sm:$0xff]
        %v2813 = vld [vmem:[%s2757 + $0x1b8] sm:$0xff]
        %v2814 = vld [vmem:[%s2757 + $0x1c0] sm:$0xff]
        %v2815 = vld [vmem:[%s2757 + $0x1c8] sm:$0xff]
        %v2816 = vld [vmem:[%s2757 + $0x1d0] sm:$0xff]
        %v2817 = vld [vmem:[%s2757 + $0x1d8] sm:$0xff]
        %v2818 = vld [vmem:[%s2757 + $0x1e0] sm:$0xff]
        %v2819 = vld [vmem:[%s2757 + $0x1e8] sm:$0xff]
        %v2820 = vld [vmem:[%s2757 + $0x1f0] sm:$0xff]
        %v2821 = vld [vmem:[%s2757 + $0x1f8] sm:$0xff]
        %v2822 = vrot.slane %v409, 2
        %v2888 = vunpack.c.l.b16 %v2758
        %v2889 = vunpack.c.h.b16 %v2758
        %v2890 = vunpack.c.l.b16 %v2759
        %v2891 = vunpack.c.h.b16 %v2759
        %v2892 = vunpack.c.l.b16 %v2760
        %v2893 = vunpack.c.h.b16 %v2760
        %v2894 = vunpack.c.l.b16 %v2761
        %v2895 = vunpack.c.h.b16 %v2761
        %v2896 = vunpack.c.l.b16 %v2762
        %v2897 = vunpack.c.h.b16 %v2762
        %v2898 = vunpack.c.l.b16 %v2763
        %v2899 = vunpack.c.h.b16 %v2763
        %v2900 = vunpack.c.l.b16 %v2764
        %v2901 = vunpack.c.h.b16 %v2764
        %v2902 = vunpack.c.l.b16 %v2765
        %v2903 = vunpack.c.h.b16 %v2765
        %v2904 = vunpack.c.l.b16 %v2766
        %v2905 = vunpack.c.h.b16 %v2766
        %v2906 = vunpack.c.l.b16 %v2767
        %v2907 = vunpack.c.h.b16 %v2767
        %v2908 = vunpack.c.l.b16 %v2768
        %v2909 = vunpack.c.h.b16 %v2768
        %v2910 = vunpack.c.l.b16 %v2769
        %v2911 = vunpack.c.h.b16 %v2769
        %v2912 = vunpack.c.l.b16 %v2770
        %v2913 = vunpack.c.h.b16 %v2770
        %v2914 = vunpack.c.l.b16 %v2771
        %v2915 = vunpack.c.h.b16 %v2771
        %v2916 = vunpack.c.l.b16 %v2772
        %v2917 = vunpack.c.h.b16 %v2772
        %v2918 = vunpack.c.l.b16 %v2773
        %v2919 = vunpack.c.h.b16 %v2773
        %v2920 = vunpack.c.l.b16 %v2774
        %v2921 = vunpack.c.h.b16 %v2774
        %v2922 = vunpack.c.l.b16 %v2775
        %v2923 = vunpack.c.h.b16 %v2775
        %v2924 = vunpack.c.l.b16 %v2776
        %v2925 = vunpack.c.h.b16 %v2776
        %v2926 = vunpack.c.l.b16 %v2777
        %v2927 = vunpack.c.h.b16 %v2777
        %v2928 = vunpack.c.l.b16 %v2778
        %v2929 = vunpack.c.h.b16 %v2778
        %v2930 = vunpack.c.l.b16 %v2779
        %v2931 = vunpack.c.h.b16 %v2779
        %v2932 = vunpack.c.l.b16 %v2780
        %v2933 = vunpack.c.h.b16 %v2780
        %v2934 = vunpack.c.l.b16 %v2781
        %v2935 = vunpack.c.h.b16 %v2781
        %v2936 = vunpack.c.l.b16 %v2782
        %v2937 = vunpack.c.h.b16 %v2782
        %v2938 = vunpack.c.l.b16 %v2783
        %v2939 = vunpack.c.h.b16 %v2783
        %v2940 = vunpack.c.l.b16 %v2784
        %v2941 = vunpack.c.h.b16 %v2784
        %v2942 = vunpack.c.l.b16 %v2785
        %v2943 = vunpack.c.h.b16 %v2785
        %v2944 = vunpack.c.l.b16 %v2786
        %v2945 = vunpack.c.h.b16 %v2786
        %v2946 = vunpack.c.l.b16 %v2787
        %v2947 = vunpack.c.h.b16 %v2787
        %v2948 = vunpack.c.l.b16 %v2788
        %v2949 = vunpack.c.h.b16 %v2788
        %v2950 = vunpack.c.l.b16 %v2789
        %v2951 = vunpack.c.h.b16 %v2789
        %v2952 = vunpack.c.l.b16 %v2790
        %v2953 = vunpack.c.h.b16 %v2790
        %v2954 = vunpack.c.l.b16 %v2791
        %v2955 = vunpack.c.h.b16 %v2791
        %v2956 = vunpack.c.l.b16 %v2792
        %v2957 = vunpack.c.h.b16 %v2792
        %v2958 = vunpack.c.l.b16 %v2793
        %v2959 = vunpack.c.h.b16 %v2793
        %v2960 = vunpack.c.l.b16 %v2794
        %v2961 = vunpack.c.h.b16 %v2794
        %v2962 = vunpack.c.l.b16 %v2795
        %v2963 = vunpack.c.h.b16 %v2795
        %v2964 = vunpack.c.l.b16 %v2796
        %v2965 = vunpack.c.h.b16 %v2796
        %v2966 = vunpack.c.l.b16 %v2797
        %v2967 = vunpack.c.h.b16 %v2797
        %v2968 = vunpack.c.l.b16 %v2798
        %v2969 = vunpack.c.h.b16 %v2798
        %v2970 = vunpack.c.l.b16 %v2799
        %v2971 = vunpack.c.h.b16 %v2799
        %v2972 = vunpack.c.l.b16 %v2800
        %v2973 = vunpack.c.h.b16 %v2800
        %v2974 = vunpack.c.l.b16 %v2801
        %v2975 = vunpack.c.h.b16 %v2801
        %v2976 = vunpack.c.l.b16 %v2802
        %v2977 = vunpack.c.h.b16 %v2802
        %v2978 = vunpack.c.l.b16 %v2803
        %v2979 = vunpack.c.h.b16 %v2803
        %v2980 = vunpack.c.l.b16 %v2804
        %v2981 = vunpack.c.h.b16 %v2804
        %v2982 = vunpack.c.l.b16 %v2805
        %v2983 = vunpack.c.h.b16 %v2805
        %v2984 = vunpack.c.l.b16 %v2806
        %v2985 = vunpack.c.h.b16 %v2806
        %v2986 = vunpack.c.l.b16 %v2807
        %v2987 = vunpack.c.h.b16 %v2807
        %v2988 = vunpack.c.l.b16 %v2808
        %v2989 = vunpack.c.h.b16 %v2808
        %v2990 = vunpack.c.l.b16 %v2809
        %v2991 = vunpack.c.h.b16 %v2809
        %v2992 = vunpack.c.l.b16 %v2810
        %v2993 = vunpack.c.h.b16 %v2810
        %v2994 = vunpack.c.l.b16 %v2811
        %v2995 = vunpack.c.h.b16 %v2811
        %v2996 = vunpack.c.l.b16 %v2812
        %v2997 = vunpack.c.h.b16 %v2812
        %v2998 = vunpack.c.l.b16 %v2813
        %v2999 = vunpack.c.h.b16 %v2813
        %v3000 = vunpack.c.l.b16 %v2814
        %v3001 = vunpack.c.h.b16 %v2814
        %v3002 = vunpack.c.l.b16 %v2815
        %v3003 = vunpack.c.h.b16 %v2815
        %v3004 = vunpack.c.l.b16 %v2816
        %v3005 = vunpack.c.h.b16 %v2816
        %v3006 = vunpack.c.l.b16 %v2817
        %v3007 = vunpack.c.h.b16 %v2817
        %v3008 = vunpack.c.l.b16 %v2818
        %v3009 = vunpack.c.h.b16 %v2818
        %v3010 = vunpack.c.l.b16 %v2819
        %v3011 = vunpack.c.h.b16 %v2819
        %v3012 = vunpack.c.l.b16 %v2820
        %v3013 = vunpack.c.h.b16 %v2820
        %v3014 = vunpack.c.l.b16 %v2821
        %v3015 = vunpack.c.h.b16 %v2821
        %v3016 = vpack.c.b16 %v2896, %v2888
        %v3017 = vpack.c.b16 %v2897, %v2889
        %v3018 = vpack.c.b16 %v2898, %v2890
        %v3019 = vpack.c.b16 %v2899, %v2891
        %v3020 = vpack.c.b16 %v2900, %v2892
        %v3021 = vpack.c.b16 %v2901, %v2893
        %v3022 = vpack.c.b16 %v2902, %v2894
        %v3023 = vpack.c.b16 %v2903, %v2895
        %v3024 = vpack.c.b16 %v2912, %v2904
        %v3025 = vpack.c.b16 %v2913, %v2905
        %v3026 = vpack.c.b16 %v2914, %v2906
        %v3027 = vpack.c.b16 %v2915, %v2907
        %v3028 = vpack.c.b16 %v2916, %v2908
        %v3029 = vpack.c.b16 %v2917, %v2909
        %v3030 = vpack.c.b16 %v2918, %v2910
        %v3031 = vpack.c.b16 %v2919, %v2911
        %v3032 = vpack.c.b16 %v2928, %v2920
        %v3033 = vpack.c.b16 %v2929, %v2921
        %v3034 = vpack.c.b16 %v2930, %v2922
        %v3035 = vpack.c.b16 %v2931, %v2923
        %v3036 = vpack.c.b16 %v2932, %v2924
        %v3037 = vpack.c.b16 %v2933, %v2925
        %v3038 = vpack.c.b16 %v2934, %v2926
        %v3039 = vpack.c.b16 %v2935, %v2927
        %v3040 = vpack.c.b16 %v2944, %v2936
        %v3041 = vpack.c.b16 %v2945, %v2937
        %v3042 = vpack.c.b16 %v2946, %v2938
        %v3043 = vpack.c.b16 %v2947, %v2939
        %v3044 = vpack.c.b16 %v2948, %v2940
        %v3045 = vpack.c.b16 %v2949, %v2941
        %v3046 = vpack.c.b16 %v2950, %v2942
        %v3047 = vpack.c.b16 %v2951, %v2943
        %v3048 = vpack.c.b16 %v2960, %v2952
        %v3049 = vpack.c.b16 %v2961, %v2953
        %v3050 = vpack.c.b16 %v2962, %v2954
        %v3051 = vpack.c.b16 %v2963, %v2955
        %v3052 = vpack.c.b16 %v2964, %v2956
        %v3053 = vpack.c.b16 %v2965, %v2957
        %v3054 = vpack.c.b16 %v2966, %v2958
        %v3055 = vpack.c.b16 %v2967, %v2959
        %v3056 = vpack.c.b16 %v2976, %v2968
        %v3057 = vpack.c.b16 %v2977, %v2969
        %v3058 = vpack.c.b16 %v2978, %v2970
        %v3059 = vpack.c.b16 %v2979, %v2971
        %v3060 = vpack.c.b16 %v2980, %v2972
        %v3061 = vpack.c.b16 %v2981, %v2973
        %v3062 = vpack.c.b16 %v2982, %v2974
        %v3063 = vpack.c.b16 %v2983, %v2975
        %v3064 = vpack.c.b16 %v2992, %v2984
        %v3065 = vpack.c.b16 %v2993, %v2985
        %v3066 = vpack.c.b16 %v2994, %v2986
        %v3067 = vpack.c.b16 %v2995, %v2987
        %v3068 = vpack.c.b16 %v2996, %v2988
        %v3069 = vpack.c.b16 %v2997, %v2989
        %v3070 = vpack.c.b16 %v2998, %v2990
        %v3071 = vpack.c.b16 %v2999, %v2991
        %v3072 = vpack.c.b16 %v3008, %v3000
        %v3073 = vpack.c.b16 %v3009, %v3001
        %v3074 = vpack.c.b16 %v3010, %v3002
        %v3075 = vpack.c.b16 %v3011, %v3003
        %v3076 = vpack.c.b16 %v3012, %v3004
        %v3077 = vpack.c.b16 %v3013, %v3005
        %v3078 = vpack.c.b16 %v3014, %v3006
        %v3079 = vpack.c.b16 %v3015, %v3007
        %3144 = vmatpush.bf16.msra.mxu0 %v3072
        %3145 = vmatpush.bf16.msra.mxu0 %v3064
        %3146 = vmatpush.bf16.msra.mxu0 %v3056
        %3147 = vmatpush.bf16.msra.mxu0 %v3048
        %3148 = vmatpush.bf16.msra.mxu0 %v3040
        %3149 = vmatpush.bf16.msra.mxu0 %v3032
        %3150 = vmatpush.bf16.msra.mxu0 %v3024
        %3151 = vmatpush.bf16.msra.mxu0 %v3016
        %3152 = vmatmul.bf16.gmra.mxu0 %v2822
        %v3153 = vpop.f32.mrf.mxu0
        %v3154 = vadd.f32 0.0, %v3153
        %v3155 = vpop.f32.mrf.mxu0
        %3156 = vdwg.mxu0
        %3157 = vmatpush.bf16.msra.mxu0 %v3073
        %3158 = vmatpush.bf16.msra.mxu0 %v3065
        %3159 = vmatpush.bf16.msra.mxu0 %v3057
        %3160 = vmatpush.bf16.msra.mxu0 %v3049
        %3161 = vmatpush.bf16.msra.mxu0 %v3041
        %3162 = vmatpush.bf16.msra.mxu0 %v3033
        %3163 = vmatpush.bf16.msra.mxu0 %v3025
        %3164 = vmatpush.bf16.msra.mxu0 %v3017
        %3165 = vmatmul.bf16.gmra.mxu0 %v2822
        %v3166 = vpop.f32.mrf.mxu0
        %v3167 = vadd.f32 0.0, %v3166
        %v3168 = vpop.f32.mrf.mxu0
        %3169 = vdwg.mxu0
        %3170 = vmatpush.bf16.msra.mxu0 %v3074
        %3171 = vmatpush.bf16.msra.mxu0 %v3066
        %3172 = vmatpush.bf16.msra.mxu0 %v3058
        %3173 = vmatpush.bf16.msra.mxu0 %v3050
        %3174 = vmatpush.bf16.msra.mxu0 %v3042
        %3175 = vmatpush.bf16.msra.mxu0 %v3034
        %3176 = vmatpush.bf16.msra.mxu0 %v3026
        %3177 = vmatpush.bf16.msra.mxu0 %v3018
        %3178 = vmatmul.bf16.gmra.mxu0 %v2822
        %v3179 = vpop.f32.mrf.mxu0
        %v3180 = vadd.f32 0.0, %v3179
        %v3181 = vpop.f32.mrf.mxu0
        %3182 = vdwg.mxu0
        %3183 = vmatpush.bf16.msra.mxu0 %v3075
        %3184 = vmatpush.bf16.msra.mxu0 %v3067
        %3185 = vmatpush.bf16.msra.mxu0 %v3059
        %3186 = vmatpush.bf16.msra.mxu0 %v3051
        %3187 = vmatpush.bf16.msra.mxu0 %v3043
        %3188 = vmatpush.bf16.msra.mxu0 %v3035
        %3189 = vmatpush.bf16.msra.mxu0 %v3027
        %3190 = vmatpush.bf16.msra.mxu0 %v3019
        %3191 = vmatmul.bf16.gmra.mxu0 %v2822
        %v3192 = vpop.f32.mrf.mxu0
        %v3193 = vadd.f32 0.0, %v3192
        %v3194 = vpop.f32.mrf.mxu0
        %3195 = vdwg.mxu0
        %3196 = vmatpush.bf16.msra.mxu0 %v3076
        %3197 = vmatpush.bf16.msra.mxu0 %v3068
        %3198 = vmatpush.bf16.msra.mxu0 %v3060
        %3199 = vmatpush.bf16.msra.mxu0 %v3052
        %3200 = vmatpush.bf16.msra.mxu0 %v3044
        %3201 = vmatpush.bf16.msra.mxu0 %v3036
        %3202 = vmatpush.bf16.msra.mxu0 %v3028
        %3203 = vmatpush.bf16.msra.mxu0 %v3020
        %3204 = vmatmul.bf16.gmra.mxu0 %v2822
        %v3205 = vpop.f32.mrf.mxu0
        %v3206 = vadd.f32 0.0, %v3205
        %v3207 = vpop.f32.mrf.mxu0
        %3208 = vdwg.mxu0
        %3209 = vmatpush.bf16.msra.mxu0 %v3077
        %3210 = vmatpush.bf16.msra.mxu0 %v3069
        %3211 = vmatpush.bf16.msra.mxu0 %v3061
        %3212 = vmatpush.bf16.msra.mxu0 %v3053
        %3213 = vmatpush.bf16.msra.mxu0 %v3045
        %3214 = vmatpush.bf16.msra.mxu0 %v3037
        %3215 = vmatpush.bf16.msra.mxu0 %v3029
        %3216 = vmatpush.bf16.msra.mxu0 %v3021
        %3217 = vmatmul.bf16.gmra.mxu0 %v2822
        %v3218 = vpop.f32.mrf.mxu0
        %v3219 = vadd.f32 0.0, %v3218
        %v3220 = vpop.f32.mrf.mxu0
        %3221 = vdwg.mxu0
        %3222 = vmatpush.bf16.msra.mxu0 %v3078
        %3223 = vmatpush.bf16.msra.mxu0 %v3070
        %3224 = vmatpush.bf16.msra.mxu0 %v3062
        %3225 = vmatpush.bf16.msra.mxu0 %v3054
        %3226 = vmatpush.bf16.msra.mxu0 %v3046
        %3227 = vmatpush.bf16.msra.mxu0 %v3038
        %3228 = vmatpush.bf16.msra.mxu0 %v3030
        %3229 = vmatpush.bf16.msra.mxu0 %v3022
        %3230 = vmatmul.bf16.gmra.mxu0 %v2822
        %v3231 = vpop.f32.mrf.mxu0
        %v3232 = vadd.f32 0.0, %v3231
        %v3233 = vpop.f32.mrf.mxu0
        %3234 = vdwg.mxu0
        %3235 = vmatpush.bf16.msra.mxu0 %v3079
        %3236 = vmatpush.bf16.msra.mxu0 %v3071
        %3237 = vmatpush.bf16.msra.mxu0 %v3063
        %3238 = vmatpush.bf16.msra.mxu0 %v3055
        %3239 = vmatpush.bf16.msra.mxu0 %v3047
        %3240 = vmatpush.bf16.msra.mxu0 %v3039
        %3241 = vmatpush.bf16.msra.mxu0 %v3031
        %3242 = vmatpush.bf16.msra.mxu0 %v3023
        %3243 = vmatmul.bf16.gmra.mxu0 %v2822
        %v3244 = vpop.f32.mrf.mxu0
        %v3245 = vadd.f32 0.0, %v3244
        %v3246 = vpop.f32.mrf.mxu0
        %3247 = vdwg.mxu0
        %v3248 = vadd.f32 %v2749, %v3154
        %v3249 = vadd.f32 %v2750, %v3167
        %v3250 = vadd.f32 %v2751, %v3180
        %v3251 = vadd.f32 %v2752, %v3193
        %v3252 = vadd.f32 %v2753, %v3206
        %v3253 = vadd.f32 %v2754, %v3219
        %v3254 = vadd.f32 %v2755, %v3232
        %v3255 = vadd.f32 %v2756, %v3245
        %s3256 = scalar_lea.vmem %s207, 3072 [#allocation5]
        %v3257 = vld [vmem:[%s3256] sm:$0xff]
        %v3258 = vld [vmem:[%s3256 + $0x8] sm:$0xff]
        %v3259 = vld [vmem:[%s3256 + $0x10] sm:$0xff]
        %v3260 = vld [vmem:[%s3256 + $0x18] sm:$0xff]
        %v3261 = vld [vmem:[%s3256 + $0x20] sm:$0xff]
        %v3262 = vld [vmem:[%s3256 + $0x28] sm:$0xff]
        %v3263 = vld [vmem:[%s3256 + $0x30] sm:$0xff]
        %v3264 = vld [vmem:[%s3256 + $0x38] sm:$0xff]
        %v3265 = vld [vmem:[%s3256 + $0x40] sm:$0xff]
        %v3266 = vld [vmem:[%s3256 + $0x48] sm:$0xff]
        %v3267 = vld [vmem:[%s3256 + $0x50] sm:$0xff]
        %v3268 = vld [vmem:[%s3256 + $0x58] sm:$0xff]
        %v3269 = vld [vmem:[%s3256 + $0x60] sm:$0xff]
        %v3270 = vld [vmem:[%s3256 + $0x68] sm:$0xff]
        %v3271 = vld [vmem:[%s3256 + $0x70] sm:$0xff]
        %v3272 = vld [vmem:[%s3256 + $0x78] sm:$0xff]
        %v3273 = vld [vmem:[%s3256 + $0x80] sm:$0xff]
        %v3274 = vld [vmem:[%s3256 + $0x88] sm:$0xff]
        %v3275 = vld [vmem:[%s3256 + $0x90] sm:$0xff]
        %v3276 = vld [vmem:[%s3256 + $0x98] sm:$0xff]
        %v3277 = vld [vmem:[%s3256 + $0xa0] sm:$0xff]
        %v3278 = vld [vmem:[%s3256 + $0xa8] sm:$0xff]
        %v3279 = vld [vmem:[%s3256 + $0xb0] sm:$0xff]
        %v3280 = vld [vmem:[%s3256 + $0xb8] sm:$0xff]
        %v3281 = vld [vmem:[%s3256 + $0xc0] sm:$0xff]
        %v3282 = vld [vmem:[%s3256 + $0xc8] sm:$0xff]
        %v3283 = vld [vmem:[%s3256 + $0xd0] sm:$0xff]
        %v3284 = vld [vmem:[%s3256 + $0xd8] sm:$0xff]
        %v3285 = vld [vmem:[%s3256 + $0xe0] sm:$0xff]
        %v3286 = vld [vmem:[%s3256 + $0xe8] sm:$0xff]
        %v3287 = vld [vmem:[%s3256 + $0xf0] sm:$0xff]
        %v3288 = vld [vmem:[%s3256 + $0xf8] sm:$0xff]
        %v3289 = vld [vmem:[%s3256 + $0x100] sm:$0xff]
        %v3290 = vld [vmem:[%s3256 + $0x108] sm:$0xff]
        %v3291 = vld [vmem:[%s3256 + $0x110] sm:$0xff]
        %v3292 = vld [vmem:[%s3256 + $0x118] sm:$0xff]
        %v3293 = vld [vmem:[%s3256 + $0x120] sm:$0xff]
        %v3294 = vld [vmem:[%s3256 + $0x128] sm:$0xff]
        %v3295 = vld [vmem:[%s3256 + $0x130] sm:$0xff]
        %v3296 = vld [vmem:[%s3256 + $0x138] sm:$0xff]
        %v3297 = vld [vmem:[%s3256 + $0x140] sm:$0xff]
        %v3298 = vld [vmem:[%s3256 + $0x148] sm:$0xff]
        %v3299 = vld [vmem:[%s3256 + $0x150] sm:$0xff]
        %v3300 = vld [vmem:[%s3256 + $0x158] sm:$0xff]
        %v3301 = vld [vmem:[%s3256 + $0x160] sm:$0xff]
        %v3302 = vld [vmem:[%s3256 + $0x168] sm:$0xff]
        %v3303 = vld [vmem:[%s3256 + $0x170] sm:$0xff]
        %v3304 = vld [vmem:[%s3256 + $0x178] sm:$0xff]
        %v3305 = vld [vmem:[%s3256 + $0x180] sm:$0xff]
        %v3306 = vld [vmem:[%s3256 + $0x188] sm:$0xff]
        %v3307 = vld [vmem:[%s3256 + $0x190] sm:$0xff]
        %v3308 = vld [vmem:[%s3256 + $0x198] sm:$0xff]
        %v3309 = vld [vmem:[%s3256 + $0x1a0] sm:$0xff]
        %v3310 = vld [vmem:[%s3256 + $0x1a8] sm:$0xff]
        %v3311 = vld [vmem:[%s3256 + $0x1b0] sm:$0xff]
        %v3312 = vld [vmem:[%s3256 + $0x1b8] sm:$0xff]
        %v3313 = vld [vmem:[%s3256 + $0x1c0] sm:$0xff]
        %v3314 = vld [vmem:[%s3256 + $0x1c8] sm:$0xff]
        %v3315 = vld [vmem:[%s3256 + $0x1d0] sm:$0xff]
        %v3316 = vld [vmem:[%s3256 + $0x1d8] sm:$0xff]
        %v3317 = vld [vmem:[%s3256 + $0x1e0] sm:$0xff]
        %v3318 = vld [vmem:[%s3256 + $0x1e8] sm:$0xff]
        %v3319 = vld [vmem:[%s3256 + $0x1f0] sm:$0xff]
        %v3320 = vld [vmem:[%s3256 + $0x1f8] sm:$0xff]
        %v3321 = vrot.slane %v407, 3
        %v3387 = vunpack.c.l.b16 %v3257
        %v3388 = vunpack.c.h.b16 %v3257
        %v3389 = vunpack.c.l.b16 %v3258
        %v3390 = vunpack.c.h.b16 %v3258
        %v3391 = vunpack.c.l.b16 %v3259
        %v3392 = vunpack.c.h.b16 %v3259
        %v3393 = vunpack.c.l.b16 %v3260
        %v3394 = vunpack.c.h.b16 %v3260
        %v3395 = vunpack.c.l.b16 %v3261
        %v3396 = vunpack.c.h.b16 %v3261
        %v3397 = vunpack.c.l.b16 %v3262
        %v3398 = vunpack.c.h.b16 %v3262
        %v3399 = vunpack.c.l.b16 %v3263
        %v3400 = vunpack.c.h.b16 %v3263
        %v3401 = vunpack.c.l.b16 %v3264
        %v3402 = vunpack.c.h.b16 %v3264
        %v3403 = vunpack.c.l.b16 %v3265
        %v3404 = vunpack.c.h.b16 %v3265
        %v3405 = vunpack.c.l.b16 %v3266
        %v3406 = vunpack.c.h.b16 %v3266
        %v3407 = vunpack.c.l.b16 %v3267
        %v3408 = vunpack.c.h.b16 %v3267
        %v3409 = vunpack.c.l.b16 %v3268
        %v3410 = vunpack.c.h.b16 %v3268
        %v3411 = vunpack.c.l.b16 %v3269
        %v3412 = vunpack.c.h.b16 %v3269
        %v3413 = vunpack.c.l.b16 %v3270
        %v3414 = vunpack.c.h.b16 %v3270
        %v3415 = vunpack.c.l.b16 %v3271
        %v3416 = vunpack.c.h.b16 %v3271
        %v3417 = vunpack.c.l.b16 %v3272
        %v3418 = vunpack.c.h.b16 %v3272
        %v3419 = vunpack.c.l.b16 %v3273
        %v3420 = vunpack.c.h.b16 %v3273
        %v3421 = vunpack.c.l.b16 %v3274
        %v3422 = vunpack.c.h.b16 %v3274
        %v3423 = vunpack.c.l.b16 %v3275
        %v3424 = vunpack.c.h.b16 %v3275
        %v3425 = vunpack.c.l.b16 %v3276
        %v3426 = vunpack.c.h.b16 %v3276
        %v3427 = vunpack.c.l.b16 %v3277
        %v3428 = vunpack.c.h.b16 %v3277
        %v3429 = vunpack.c.l.b16 %v3278
        %v3430 = vunpack.c.h.b16 %v3278
        %v3431 = vunpack.c.l.b16 %v3279
        %v3432 = vunpack.c.h.b16 %v3279
        %v3433 = vunpack.c.l.b16 %v3280
        %v3434 = vunpack.c.h.b16 %v3280
        %v3435 = vunpack.c.l.b16 %v3281
        %v3436 = vunpack.c.h.b16 %v3281
        %v3437 = vunpack.c.l.b16 %v3282
        %v3438 = vunpack.c.h.b16 %v3282
        %v3439 = vunpack.c.l.b16 %v3283
        %v3440 = vunpack.c.h.b16 %v3283
        %v3441 = vunpack.c.l.b16 %v3284
        %v3442 = vunpack.c.h.b16 %v3284
        %v3443 = vunpack.c.l.b16 %v3285
        %v3444 = vunpack.c.h.b16 %v3285
        %v3445 = vunpack.c.l.b16 %v3286
        %v3446 = vunpack.c.h.b16 %v3286
        %v3447 = vunpack.c.l.b16 %v3287
        %v3448 = vunpack.c.h.b16 %v3287
        %v3449 = vunpack.c.l.b16 %v3288
        %v3450 = vunpack.c.h.b16 %v3288
        %v3451 = vunpack.c.l.b16 %v3289
        %v3452 = vunpack.c.h.b16 %v3289
        %v3453 = vunpack.c.l.b16 %v3290
        %v3454 = vunpack.c.h.b16 %v3290
        %v3455 = vunpack.c.l.b16 %v3291
        %v3456 = vunpack.c.h.b16 %v3291
        %v3457 = vunpack.c.l.b16 %v3292
        %v3458 = vunpack.c.h.b16 %v3292
        %v3459 = vunpack.c.l.b16 %v3293
        %v3460 = vunpack.c.h.b16 %v3293
        %v3461 = vunpack.c.l.b16 %v3294
        %v3462 = vunpack.c.h.b16 %v3294
        %v3463 = vunpack.c.l.b16 %v3295
        %v3464 = vunpack.c.h.b16 %v3295
        %v3465 = vunpack.c.l.b16 %v3296
        %v3466 = vunpack.c.h.b16 %v3296
        %v3467 = vunpack.c.l.b16 %v3297
        %v3468 = vunpack.c.h.b16 %v3297
        %v3469 = vunpack.c.l.b16 %v3298
        %v3470 = vunpack.c.h.b16 %v3298
        %v3471 = vunpack.c.l.b16 %v3299
        %v3472 = vunpack.c.h.b16 %v3299
        %v3473 = vunpack.c.l.b16 %v3300
        %v3474 = vunpack.c.h.b16 %v3300
        %v3475 = vunpack.c.l.b16 %v3301
        %v3476 = vunpack.c.h.b16 %v3301
        %v3477 = vunpack.c.l.b16 %v3302
        %v3478 = vunpack.c.h.b16 %v3302
        %v3479 = vunpack.c.l.b16 %v3303
        %v3480 = vunpack.c.h.b16 %v3303
        %v3481 = vunpack.c.l.b16 %v3304
        %v3482 = vunpack.c.h.b16 %v3304
        %v3483 = vunpack.c.l.b16 %v3305
        %v3484 = vunpack.c.h.b16 %v3305
        %v3485 = vunpack.c.l.b16 %v3306
        %v3486 = vunpack.c.h.b16 %v3306
        %v3487 = vunpack.c.l.b16 %v3307
        %v3488 = vunpack.c.h.b16 %v3307
        %v3489 = vunpack.c.l.b16 %v3308
        %v3490 = vunpack.c.h.b16 %v3308
        %v3491 = vunpack.c.l.b16 %v3309
        %v3492 = vunpack.c.h.b16 %v3309
        %v3493 = vunpack.c.l.b16 %v3310
        %v3494 = vunpack.c.h.b16 %v3310
        %v3495 = vunpack.c.l.b16 %v3311
        %v3496 = vunpack.c.h.b16 %v3311
        %v3497 = vunpack.c.l.b16 %v3312
        %v3498 = vunpack.c.h.b16 %v3312
        %v3499 = vunpack.c.l.b16 %v3313
        %v3500 = vunpack.c.h.b16 %v3313
        %v3501 = vunpack.c.l.b16 %v3314
        %v3502 = vunpack.c.h.b16 %v3314
        %v3503 = vunpack.c.l.b16 %v3315
        %v3504 = vunpack.c.h.b16 %v3315
        %v3505 = vunpack.c.l.b16 %v3316
        %v3506 = vunpack.c.h.b16 %v3316
        %v3507 = vunpack.c.l.b16 %v3317
        %v3508 = vunpack.c.h.b16 %v3317
        %v3509 = vunpack.c.l.b16 %v3318
        %v3510 = vunpack.c.h.b16 %v3318
        %v3511 = vunpack.c.l.b16 %v3319
        %v3512 = vunpack.c.h.b16 %v3319
        %v3513 = vunpack.c.l.b16 %v3320
        %v3514 = vunpack.c.h.b16 %v3320
        %v3515 = vpack.c.b16 %v3395, %v3387
        %v3516 = vpack.c.b16 %v3396, %v3388
        %v3517 = vpack.c.b16 %v3397, %v3389
        %v3518 = vpack.c.b16 %v3398, %v3390
        %v3519 = vpack.c.b16 %v3399, %v3391
        %v3520 = vpack.c.b16 %v3400, %v3392
        %v3521 = vpack.c.b16 %v3401, %v3393
        %v3522 = vpack.c.b16 %v3402, %v3394
        %v3523 = vpack.c.b16 %v3411, %v3403
        %v3524 = vpack.c.b16 %v3412, %v3404
        %v3525 = vpack.c.b16 %v3413, %v3405
        %v3526 = vpack.c.b16 %v3414, %v3406
        %v3527 = vpack.c.b16 %v3415, %v3407
        %v3528 = vpack.c.b16 %v3416, %v3408
        %v3529 = vpack.c.b16 %v3417, %v3409
        %v3530 = vpack.c.b16 %v3418, %v3410
        %v3531 = vpack.c.b16 %v3427, %v3419
        %v3532 = vpack.c.b16 %v3428, %v3420
        %v3533 = vpack.c.b16 %v3429, %v3421
        %v3534 = vpack.c.b16 %v3430, %v3422
        %v3535 = vpack.c.b16 %v3431, %v3423
        %v3536 = vpack.c.b16 %v3432, %v3424
        %v3537 = vpack.c.b16 %v3433, %v3425
        %v3538 = vpack.c.b16 %v3434, %v3426
        %v3539 = vpack.c.b16 %v3443, %v3435
        %v3540 = vpack.c.b16 %v3444, %v3436
        %v3541 = vpack.c.b16 %v3445, %v3437
        %v3542 = vpack.c.b16 %v3446, %v3438
        %v3543 = vpack.c.b16 %v3447, %v3439
        %v3544 = vpack.c.b16 %v3448, %v3440
        %v3545 = vpack.c.b16 %v3449, %v3441
        %v3546 = vpack.c.b16 %v3450, %v3442
        %v3547 = vpack.c.b16 %v3459, %v3451
        %v3548 = vpack.c.b16 %v3460, %v3452
        %v3549 = vpack.c.b16 %v3461, %v3453
        %v3550 = vpack.c.b16 %v3462, %v3454
        %v3551 = vpack.c.b16 %v3463, %v3455
        %v3552 = vpack.c.b16 %v3464, %v3456
        %v3553 = vpack.c.b16 %v3465, %v3457
        %v3554 = vpack.c.b16 %v3466, %v3458
        %v3555 = vpack.c.b16 %v3475, %v3467
        %v3556 = vpack.c.b16 %v3476, %v3468
        %v3557 = vpack.c.b16 %v3477, %v3469
        %v3558 = vpack.c.b16 %v3478, %v3470
        %v3559 = vpack.c.b16 %v3479, %v3471
        %v3560 = vpack.c.b16 %v3480, %v3472
        %v3561 = vpack.c.b16 %v3481, %v3473
        %v3562 = vpack.c.b16 %v3482, %v3474
        %v3563 = vpack.c.b16 %v3491, %v3483
        %v3564 = vpack.c.b16 %v3492, %v3484
        %v3565 = vpack.c.b16 %v3493, %v3485
        %v3566 = vpack.c.b16 %v3494, %v3486
        %v3567 = vpack.c.b16 %v3495, %v3487
        %v3568 = vpack.c.b16 %v3496, %v3488
        %v3569 = vpack.c.b16 %v3497, %v3489
        %v3570 = vpack.c.b16 %v3498, %v3490
        %v3571 = vpack.c.b16 %v3507, %v3499
        %v3572 = vpack.c.b16 %v3508, %v3500
        %v3573 = vpack.c.b16 %v3509, %v3501
        %v3574 = vpack.c.b16 %v3510, %v3502
        %v3575 = vpack.c.b16 %v3511, %v3503
        %v3576 = vpack.c.b16 %v3512, %v3504
        %v3577 = vpack.c.b16 %v3513, %v3505
        %v3578 = vpack.c.b16 %v3514, %v3506
        %3643 = vmatpush.bf16.msra.mxu0 %v3571
        %3644 = vmatpush.bf16.msra.mxu0 %v3563
        %3645 = vmatpush.bf16.msra.mxu0 %v3555
        %3646 = vmatpush.bf16.msra.mxu0 %v3547
        %3647 = vmatpush.bf16.msra.mxu0 %v3539
        %3648 = vmatpush.bf16.msra.mxu0 %v3531
        %3649 = vmatpush.bf16.msra.mxu0 %v3523
        %3650 = vmatpush.bf16.msra.mxu0 %v3515
        %3651 = vmatmul.bf16.gmra.mxu0 %v3321
        %v3652 = vpop.f32.mrf.mxu0
        %v3653 = vadd.f32 0.0, %v3652
        %v3654 = vpop.f32.mrf.mxu0
        %3655 = vdwg.mxu0
        %3656 = vmatpush.bf16.msra.mxu0 %v3572
        %3657 = vmatpush.bf16.msra.mxu0 %v3564
        %3658 = vmatpush.bf16.msra.mxu0 %v3556
        %3659 = vmatpush.bf16.msra.mxu0 %v3548
        %3660 = vmatpush.bf16.msra.mxu0 %v3540
        %3661 = vmatpush.bf16.msra.mxu0 %v3532
        %3662 = vmatpush.bf16.msra.mxu0 %v3524
        %3663 = vmatpush.bf16.msra.mxu0 %v3516
        %3664 = vmatmul.bf16.gmra.mxu0 %v3321
        %v3665 = vpop.f32.mrf.mxu0
        %v3666 = vadd.f32 0.0, %v3665
        %v3667 = vpop.f32.mrf.mxu0
        %3668 = vdwg.mxu0
        %3669 = vmatpush.bf16.msra.mxu0 %v3573
        %3670 = vmatpush.bf16.msra.mxu0 %v3565
        %3671 = vmatpush.bf16.msra.mxu0 %v3557
        %3672 = vmatpush.bf16.msra.mxu0 %v3549
        %3673 = vmatpush.bf16.msra.mxu0 %v3541
        %3674 = vmatpush.bf16.msra.mxu0 %v3533
        %3675 = vmatpush.bf16.msra.mxu0 %v3525
        %3676 = vmatpush.bf16.msra.mxu0 %v3517
        %3677 = vmatmul.bf16.gmra.mxu0 %v3321
        %v3678 = vpop.f32.mrf.mxu0
        %v3679 = vadd.f32 0.0, %v3678
        %v3680 = vpop.f32.mrf.mxu0
        %3681 = vdwg.mxu0
        %3682 = vmatpush.bf16.msra.mxu0 %v3574
        %3683 = vmatpush.bf16.msra.mxu0 %v3566
        %3684 = vmatpush.bf16.msra.mxu0 %v3558
        %3685 = vmatpush.bf16.msra.mxu0 %v3550
        %3686 = vmatpush.bf16.msra.mxu0 %v3542
        %3687 = vmatpush.bf16.msra.mxu0 %v3534
        %3688 = vmatpush.bf16.msra.mxu0 %v3526
        %3689 = vmatpush.bf16.msra.mxu0 %v3518
        %3690 = vmatmul.bf16.gmra.mxu0 %v3321
        %v3691 = vpop.f32.mrf.mxu0
        %v3692 = vadd.f32 0.0, %v3691
        %v3693 = vpop.f32.mrf.mxu0
        %3694 = vdwg.mxu0
        %3695 = vmatpush.bf16.msra.mxu0 %v3575
        %3696 = vmatpush.bf16.msra.mxu0 %v3567
        %3697 = vmatpush.bf16.msra.mxu0 %v3559
        %3698 = vmatpush.bf16.msra.mxu0 %v3551
        %3699 = vmatpush.bf16.msra.mxu0 %v3543
        %3700 = vmatpush.bf16.msra.mxu0 %v3535
        %3701 = vmatpush.bf16.msra.mxu0 %v3527
        %3702 = vmatpush.bf16.msra.mxu0 %v3519
        %3703 = vmatmul.bf16.gmra.mxu0 %v3321
        %v3704 = vpop.f32.mrf.mxu0
        %v3705 = vadd.f32 0.0, %v3704
        %v3706 = vpop.f32.mrf.mxu0
        %3707 = vdwg.mxu0
        %3708 = vmatpush.bf16.msra.mxu0 %v3576
        %3709 = vmatpush.bf16.msra.mxu0 %v3568
        %3710 = vmatpush.bf16.msra.mxu0 %v3560
        %3711 = vmatpush.bf16.msra.mxu0 %v3552
        %3712 = vmatpush.bf16.msra.mxu0 %v3544
        %3713 = vmatpush.bf16.msra.mxu0 %v3536
        %3714 = vmatpush.bf16.msra.mxu0 %v3528
        %3715 = vmatpush.bf16.msra.mxu0 %v3520
        %3716 = vmatmul.bf16.gmra.mxu0 %v3321
        %v3717 = vpop.f32.mrf.mxu0
        %v3718 = vadd.f32 0.0, %v3717
        %v3719 = vpop.f32.mrf.mxu0
        %3720 = vdwg.mxu0
        %3721 = vmatpush.bf16.msra.mxu0 %v3577
        %3722 = vmatpush.bf16.msra.mxu0 %v3569
        %3723 = vmatpush.bf16.msra.mxu0 %v3561
        %3724 = vmatpush.bf16.msra.mxu0 %v3553
        %3725 = vmatpush.bf16.msra.mxu0 %v3545
        %3726 = vmatpush.bf16.msra.mxu0 %v3537
        %3727 = vmatpush.bf16.msra.mxu0 %v3529
        %3728 = vmatpush.bf16.msra.mxu0 %v3521
        %3729 = vmatmul.bf16.gmra.mxu0 %v3321
        %v3730 = vpop.f32.mrf.mxu0
        %v3731 = vadd.f32 0.0, %v3730
        %v3732 = vpop.f32.mrf.mxu0
        %3733 = vdwg.mxu0
        %3734 = vmatpush.bf16.msra.mxu0 %v3578
        %3735 = vmatpush.bf16.msra.mxu0 %v3570
        %3736 = vmatpush.bf16.msra.mxu0 %v3562
        %3737 = vmatpush.bf16.msra.mxu0 %v3554
        %3738 = vmatpush.bf16.msra.mxu0 %v3546
        %3739 = vmatpush.bf16.msra.mxu0 %v3538
        %3740 = vmatpush.bf16.msra.mxu0 %v3530
        %3741 = vmatpush.bf16.msra.mxu0 %v3522
        %3742 = vmatmul.bf16.gmra.mxu0 %v3321
        %v3743 = vpop.f32.mrf.mxu0
        %v3744 = vadd.f32 0.0, %v3743
        %v3745 = vpop.f32.mrf.mxu0
        %3746 = vdwg.mxu0
        %v3747 = vadd.f32 %v3248, %v3653
        %v3748 = vadd.f32 %v3249, %v3666
        %v3749 = vadd.f32 %v3250, %v3679
        %v3750 = vadd.f32 %v3251, %v3692
        %v3751 = vadd.f32 %v3252, %v3705
        %v3752 = vadd.f32 %v3253, %v3718
        %v3753 = vadd.f32 %v3254, %v3731
        %v3754 = vadd.f32 %v3255, %v3744
        %s3755 = scalar_lea.vmem %s207, 3584 [#allocation5]
        %v3756 = vld [vmem:[%s3755] sm:$0xff]
        %v3757 = vld [vmem:[%s3755 + $0x8] sm:$0xff]
        %v3758 = vld [vmem:[%s3755 + $0x10] sm:$0xff]
        %v3759 = vld [vmem:[%s3755 + $0x18] sm:$0xff]
        %v3760 = vld [vmem:[%s3755 + $0x20] sm:$0xff]
        %v3761 = vld [vmem:[%s3755 + $0x28] sm:$0xff]
        %v3762 = vld [vmem:[%s3755 + $0x30] sm:$0xff]
        %v3763 = vld [vmem:[%s3755 + $0x38] sm:$0xff]
        %v3764 = vld [vmem:[%s3755 + $0x40] sm:$0xff]
        %v3765 = vld [vmem:[%s3755 + $0x48] sm:$0xff]
        %v3766 = vld [vmem:[%s3755 + $0x50] sm:$0xff]
        %v3767 = vld [vmem:[%s3755 + $0x58] sm:$0xff]
        %v3768 = vld [vmem:[%s3755 + $0x60] sm:$0xff]
        %v3769 = vld [vmem:[%s3755 + $0x68] sm:$0xff]
        %v3770 = vld [vmem:[%s3755 + $0x70] sm:$0xff]
        %v3771 = vld [vmem:[%s3755 + $0x78] sm:$0xff]
        %v3772 = vld [vmem:[%s3755 + $0x80] sm:$0xff]
        %v3773 = vld [vmem:[%s3755 + $0x88] sm:$0xff]
        %v3774 = vld [vmem:[%s3755 + $0x90] sm:$0xff]
        %v3775 = vld [vmem:[%s3755 + $0x98] sm:$0xff]
        %v3776 = vld [vmem:[%s3755 + $0xa0] sm:$0xff]
        %v3777 = vld [vmem:[%s3755 + $0xa8] sm:$0xff]
        %v3778 = vld [vmem:[%s3755 + $0xb0] sm:$0xff]
        %v3779 = vld [vmem:[%s3755 + $0xb8] sm:$0xff]
        %v3780 = vld [vmem:[%s3755 + $0xc0] sm:$0xff]
        %v3781 = vld [vmem:[%s3755 + $0xc8] sm:$0xff]
        %v3782 = vld [vmem:[%s3755 + $0xd0] sm:$0xff]
        %v3783 = vld [vmem:[%s3755 + $0xd8] sm:$0xff]
        %v3784 = vld [vmem:[%s3755 + $0xe0] sm:$0xff]
        %v3785 = vld [vmem:[%s3755 + $0xe8] sm:$0xff]
        %v3786 = vld [vmem:[%s3755 + $0xf0] sm:$0xff]
        %v3787 = vld [vmem:[%s3755 + $0xf8] sm:$0xff]
        %v3788 = vld [vmem:[%s3755 + $0x100] sm:$0xff]
        %v3789 = vld [vmem:[%s3755 + $0x108] sm:$0xff]
        %v3790 = vld [vmem:[%s3755 + $0x110] sm:$0xff]
        %v3791 = vld [vmem:[%s3755 + $0x118] sm:$0xff]
        %v3792 = vld [vmem:[%s3755 + $0x120] sm:$0xff]
        %v3793 = vld [vmem:[%s3755 + $0x128] sm:$0xff]
        %v3794 = vld [vmem:[%s3755 + $0x130] sm:$0xff]
        %v3795 = vld [vmem:[%s3755 + $0x138] sm:$0xff]
        %v3796 = vld [vmem:[%s3755 + $0x140] sm:$0xff]
        %v3797 = vld [vmem:[%s3755 + $0x148] sm:$0xff]
        %v3798 = vld [vmem:[%s3755 + $0x150] sm:$0xff]
        %v3799 = vld [vmem:[%s3755 + $0x158] sm:$0xff]
        %v3800 = vld [vmem:[%s3755 + $0x160] sm:$0xff]
        %v3801 = vld [vmem:[%s3755 + $0x168] sm:$0xff]
        %v3802 = vld [vmem:[%s3755 + $0x170] sm:$0xff]
        %v3803 = vld [vmem:[%s3755 + $0x178] sm:$0xff]
        %v3804 = vld [vmem:[%s3755 + $0x180] sm:$0xff]
        %v3805 = vld [vmem:[%s3755 + $0x188] sm:$0xff]
        %v3806 = vld [vmem:[%s3755 + $0x190] sm:$0xff]
        %v3807 = vld [vmem:[%s3755 + $0x198] sm:$0xff]
        %v3808 = vld [vmem:[%s3755 + $0x1a0] sm:$0xff]
        %v3809 = vld [vmem:[%s3755 + $0x1a8] sm:$0xff]
        %v3810 = vld [vmem:[%s3755 + $0x1b0] sm:$0xff]
        %v3811 = vld [vmem:[%s3755 + $0x1b8] sm:$0xff]
        %v3812 = vld [vmem:[%s3755 + $0x1c0] sm:$0xff]
        %v3813 = vld [vmem:[%s3755 + $0x1c8] sm:$0xff]
        %v3814 = vld [vmem:[%s3755 + $0x1d0] sm:$0xff]
        %v3815 = vld [vmem:[%s3755 + $0x1d8] sm:$0xff]
        %v3816 = vld [vmem:[%s3755 + $0x1e0] sm:$0xff]
        %v3817 = vld [vmem:[%s3755 + $0x1e8] sm:$0xff]
        %v3818 = vld [vmem:[%s3755 + $0x1f0] sm:$0xff]
        %v3819 = vld [vmem:[%s3755 + $0x1f8] sm:$0xff]
        %v3820 = vrot.slane %v409, 3
        %v3886 = vunpack.c.l.b16 %v3756
        %v3887 = vunpack.c.h.b16 %v3756
        %v3888 = vunpack.c.l.b16 %v3757
        %v3889 = vunpack.c.h.b16 %v3757
        %v3890 = vunpack.c.l.b16 %v3758
        %v3891 = vunpack.c.h.b16 %v3758
        %v3892 = vunpack.c.l.b16 %v3759
        %v3893 = vunpack.c.h.b16 %v3759
        %v3894 = vunpack.c.l.b16 %v3760
        %v3895 = vunpack.c.h.b16 %v3760
        %v3896 = vunpack.c.l.b16 %v3761
        %v3897 = vunpack.c.h.b16 %v3761
        %v3898 = vunpack.c.l.b16 %v3762
        %v3899 = vunpack.c.h.b16 %v3762
        %v3900 = vunpack.c.l.b16 %v3763
        %v3901 = vunpack.c.h.b16 %v3763
        %v3902 = vunpack.c.l.b16 %v3764
        %v3903 = vunpack.c.h.b16 %v3764
        %v3904 = vunpack.c.l.b16 %v3765
        %v3905 = vunpack.c.h.b16 %v3765
        %v3906 = vunpack.c.l.b16 %v3766
        %v3907 = vunpack.c.h.b16 %v3766
        %v3908 = vunpack.c.l.b16 %v3767
        %v3909 = vunpack.c.h.b16 %v3767
        %v3910 = vunpack.c.l.b16 %v3768
        %v3911 = vunpack.c.h.b16 %v3768
        %v3912 = vunpack.c.l.b16 %v3769
        %v3913 = vunpack.c.h.b16 %v3769
        %v3914 = vunpack.c.l.b16 %v3770
        %v3915 = vunpack.c.h.b16 %v3770
        %v3916 = vunpack.c.l.b16 %v3771
        %v3917 = vunpack.c.h.b16 %v3771
        %v3918 = vunpack.c.l.b16 %v3772
        %v3919 = vunpack.c.h.b16 %v3772
        %v3920 = vunpack.c.l.b16 %v3773
        %v3921 = vunpack.c.h.b16 %v3773
        %v3922 = vunpack.c.l.b16 %v3774
        %v3923 = vunpack.c.h.b16 %v3774
        %v3924 = vunpack.c.l.b16 %v3775
        %v3925 = vunpack.c.h.b16 %v3775
        %v3926 = vunpack.c.l.b16 %v3776
        %v3927 = vunpack.c.h.b16 %v3776
        %v3928 = vunpack.c.l.b16 %v3777
        %v3929 = vunpack.c.h.b16 %v3777
        %v3930 = vunpack.c.l.b16 %v3778
        %v3931 = vunpack.c.h.b16 %v3778
        %v3932 = vunpack.c.l.b16 %v3779
        %v3933 = vunpack.c.h.b16 %v3779
        %v3934 = vunpack.c.l.b16 %v3780
        %v3935 = vunpack.c.h.b16 %v3780
        %v3936 = vunpack.c.l.b16 %v3781
        %v3937 = vunpack.c.h.b16 %v3781
        %v3938 = vunpack.c.l.b16 %v3782
        %v3939 = vunpack.c.h.b16 %v3782
        %v3940 = vunpack.c.l.b16 %v3783
        %v3941 = vunpack.c.h.b16 %v3783
        %v3942 = vunpack.c.l.b16 %v3784
        %v3943 = vunpack.c.h.b16 %v3784
        %v3944 = vunpack.c.l.b16 %v3785
        %v3945 = vunpack.c.h.b16 %v3785
        %v3946 = vunpack.c.l.b16 %v3786
        %v3947 = vunpack.c.h.b16 %v3786
        %v3948 = vunpack.c.l.b16 %v3787
        %v3949 = vunpack.c.h.b16 %v3787
        %v3950 = vunpack.c.l.b16 %v3788
        %v3951 = vunpack.c.h.b16 %v3788
        %v3952 = vunpack.c.l.b16 %v3789
        %v3953 = vunpack.c.h.b16 %v3789
        %v3954 = vunpack.c.l.b16 %v3790
        %v3955 = vunpack.c.h.b16 %v3790
        %v3956 = vunpack.c.l.b16 %v3791
        %v3957 = vunpack.c.h.b16 %v3791
        %v3958 = vunpack.c.l.b16 %v3792
        %v3959 = vunpack.c.h.b16 %v3792
        %v3960 = vunpack.c.l.b16 %v3793
        %v3961 = vunpack.c.h.b16 %v3793
        %v3962 = vunpack.c.l.b16 %v3794
        %v3963 = vunpack.c.h.b16 %v3794
        %v3964 = vunpack.c.l.b16 %v3795
        %v3965 = vunpack.c.h.b16 %v3795
        %v3966 = vunpack.c.l.b16 %v3796
        %v3967 = vunpack.c.h.b16 %v3796
        %v3968 = vunpack.c.l.b16 %v3797
        %v3969 = vunpack.c.h.b16 %v3797
        %v3970 = vunpack.c.l.b16 %v3798
        %v3971 = vunpack.c.h.b16 %v3798
        %v3972 = vunpack.c.l.b16 %v3799
        %v3973 = vunpack.c.h.b16 %v3799
        %v3974 = vunpack.c.l.b16 %v3800
        %v3975 = vunpack.c.h.b16 %v3800
        %v3976 = vunpack.c.l.b16 %v3801
        %v3977 = vunpack.c.h.b16 %v3801
        %v3978 = vunpack.c.l.b16 %v3802
        %v3979 = vunpack.c.h.b16 %v3802
        %v3980 = vunpack.c.l.b16 %v3803
        %v3981 = vunpack.c.h.b16 %v3803
        %v3982 = vunpack.c.l.b16 %v3804
        %v3983 = vunpack.c.h.b16 %v3804
        %v3984 = vunpack.c.l.b16 %v3805
        %v3985 = vunpack.c.h.b16 %v3805
        %v3986 = vunpack.c.l.b16 %v3806
        %v3987 = vunpack.c.h.b16 %v3806
        %v3988 = vunpack.c.l.b16 %v3807
        %v3989 = vunpack.c.h.b16 %v3807
        %v3990 = vunpack.c.l.b16 %v3808
        %v3991 = vunpack.c.h.b16 %v3808
        %v3992 = vunpack.c.l.b16 %v3809
        %v3993 = vunpack.c.h.b16 %v3809
        %v3994 = vunpack.c.l.b16 %v3810
        %v3995 = vunpack.c.h.b16 %v3810
        %v3996 = vunpack.c.l.b16 %v3811
        %v3997 = vunpack.c.h.b16 %v3811
        %v3998 = vunpack.c.l.b16 %v3812
        %v3999 = vunpack.c.h.b16 %v3812
        %v4000 = vunpack.c.l.b16 %v3813
        %v4001 = vunpack.c.h.b16 %v3813
        %v4002 = vunpack.c.l.b16 %v3814
        %v4003 = vunpack.c.h.b16 %v3814
        %v4004 = vunpack.c.l.b16 %v3815
        %v4005 = vunpack.c.h.b16 %v3815
        %v4006 = vunpack.c.l.b16 %v3816
        %v4007 = vunpack.c.h.b16 %v3816
        %v4008 = vunpack.c.l.b16 %v3817
        %v4009 = vunpack.c.h.b16 %v3817
        %v4010 = vunpack.c.l.b16 %v3818
        %v4011 = vunpack.c.h.b16 %v3818
        %v4012 = vunpack.c.l.b16 %v3819
        %v4013 = vunpack.c.h.b16 %v3819
        %v4014 = vpack.c.b16 %v3894, %v3886
        %v4015 = vpack.c.b16 %v3895, %v3887
        %v4016 = vpack.c.b16 %v3896, %v3888
        %v4017 = vpack.c.b16 %v3897, %v3889
        %v4018 = vpack.c.b16 %v3898, %v3890
        %v4019 = vpack.c.b16 %v3899, %v3891
        %v4020 = vpack.c.b16 %v3900, %v3892
        %v4021 = vpack.c.b16 %v3901, %v3893
        %v4022 = vpack.c.b16 %v3910, %v3902
        %v4023 = vpack.c.b16 %v3911, %v3903
        %v4024 = vpack.c.b16 %v3912, %v3904
        %v4025 = vpack.c.b16 %v3913, %v3905
        %v4026 = vpack.c.b16 %v3914, %v3906
        %v4027 = vpack.c.b16 %v3915, %v3907
        %v4028 = vpack.c.b16 %v3916, %v3908
        %v4029 = vpack.c.b16 %v3917, %v3909
        %v4030 = vpack.c.b16 %v3926, %v3918
        %v4031 = vpack.c.b16 %v3927, %v3919
        %v4032 = vpack.c.b16 %v3928, %v3920
        %v4033 = vpack.c.b16 %v3929, %v3921
        %v4034 = vpack.c.b16 %v3930, %v3922
        %v4035 = vpack.c.b16 %v3931, %v3923
        %v4036 = vpack.c.b16 %v3932, %v3924
        %v4037 = vpack.c.b16 %v3933, %v3925
        %v4038 = vpack.c.b16 %v3942, %v3934
        %v4039 = vpack.c.b16 %v3943, %v3935
        %v4040 = vpack.c.b16 %v3944, %v3936
        %v4041 = vpack.c.b16 %v3945, %v3937
        %v4042 = vpack.c.b16 %v3946, %v3938
        %v4043 = vpack.c.b16 %v3947, %v3939
        %v4044 = vpack.c.b16 %v3948, %v3940
        %v4045 = vpack.c.b16 %v3949, %v3941
        %v4046 = vpack.c.b16 %v3958, %v3950
        %v4047 = vpack.c.b16 %v3959, %v3951
        %v4048 = vpack.c.b16 %v3960, %v3952
        %v4049 = vpack.c.b16 %v3961, %v3953
        %v4050 = vpack.c.b16 %v3962, %v3954
        %v4051 = vpack.c.b16 %v3963, %v3955
        %v4052 = vpack.c.b16 %v3964, %v3956
        %v4053 = vpack.c.b16 %v3965, %v3957
        %v4054 = vpack.c.b16 %v3974, %v3966
        %v4055 = vpack.c.b16 %v3975, %v3967
        %v4056 = vpack.c.b16 %v3976, %v3968
        %v4057 = vpack.c.b16 %v3977, %v3969
        %v4058 = vpack.c.b16 %v3978, %v3970
        %v4059 = vpack.c.b16 %v3979, %v3971
        %v4060 = vpack.c.b16 %v3980, %v3972
        %v4061 = vpack.c.b16 %v3981, %v3973
        %v4062 = vpack.c.b16 %v3990, %v3982
        %v4063 = vpack.c.b16 %v3991, %v3983
        %v4064 = vpack.c.b16 %v3992, %v3984
        %v4065 = vpack.c.b16 %v3993, %v3985
        %v4066 = vpack.c.b16 %v3994, %v3986
        %v4067 = vpack.c.b16 %v3995, %v3987
        %v4068 = vpack.c.b16 %v3996, %v3988
        %v4069 = vpack.c.b16 %v3997, %v3989
        %v4070 = vpack.c.b16 %v4006, %v3998
        %v4071 = vpack.c.b16 %v4007, %v3999
        %v4072 = vpack.c.b16 %v4008, %v4000
        %v4073 = vpack.c.b16 %v4009, %v4001
        %v4074 = vpack.c.b16 %v4010, %v4002
        %v4075 = vpack.c.b16 %v4011, %v4003
        %v4076 = vpack.c.b16 %v4012, %v4004
        %v4077 = vpack.c.b16 %v4013, %v4005
        %4142 = vmatpush.bf16.msra.mxu0 %v4070
        %4143 = vmatpush.bf16.msra.mxu0 %v4062
        %4144 = vmatpush.bf16.msra.mxu0 %v4054
        %4145 = vmatpush.bf16.msra.mxu0 %v4046
        %4146 = vmatpush.bf16.msra.mxu0 %v4038
        %4147 = vmatpush.bf16.msra.mxu0 %v4030
        %4148 = vmatpush.bf16.msra.mxu0 %v4022
        %4149 = vmatpush.bf16.msra.mxu0 %v4014
        %4150 = vmatmul.bf16.gmra.mxu0 %v3820
        %v4151 = vpop.f32.mrf.mxu0
        %v4152 = vadd.f32 0.0, %v4151
        %v4153 = vpop.f32.mrf.mxu0
        %4154 = vdwg.mxu0
        %4155 = vmatpush.bf16.msra.mxu0 %v4071
        %4156 = vmatpush.bf16.msra.mxu0 %v4063
        %4157 = vmatpush.bf16.msra.mxu0 %v4055
        %4158 = vmatpush.bf16.msra.mxu0 %v4047
        %4159 = vmatpush.bf16.msra.mxu0 %v4039
        %4160 = vmatpush.bf16.msra.mxu0 %v4031
        %4161 = vmatpush.bf16.msra.mxu0 %v4023
        %4162 = vmatpush.bf16.msra.mxu0 %v4015
        %4163 = vmatmul.bf16.gmra.mxu0 %v3820
        %v4164 = vpop.f32.mrf.mxu0
        %v4165 = vadd.f32 0.0, %v4164
        %v4166 = vpop.f32.mrf.mxu0
        %4167 = vdwg.mxu0
        %4168 = vmatpush.bf16.msra.mxu0 %v4072
        %4169 = vmatpush.bf16.msra.mxu0 %v4064
        %4170 = vmatpush.bf16.msra.mxu0 %v4056
        %4171 = vmatpush.bf16.msra.mxu0 %v4048
        %4172 = vmatpush.bf16.msra.mxu0 %v4040
        %4173 = vmatpush.bf16.msra.mxu0 %v4032
        %4174 = vmatpush.bf16.msra.mxu0 %v4024
        %4175 = vmatpush.bf16.msra.mxu0 %v4016
        %4176 = vmatmul.bf16.gmra.mxu0 %v3820
        %v4177 = vpop.f32.mrf.mxu0
        %v4178 = vadd.f32 0.0, %v4177
        %v4179 = vpop.f32.mrf.mxu0
        %4180 = vdwg.mxu0
        %4181 = vmatpush.bf16.msra.mxu0 %v4073
        %4182 = vmatpush.bf16.msra.mxu0 %v4065
        %4183 = vmatpush.bf16.msra.mxu0 %v4057
        %4184 = vmatpush.bf16.msra.mxu0 %v4049
        %4185 = vmatpush.bf16.msra.mxu0 %v4041
        %4186 = vmatpush.bf16.msra.mxu0 %v4033
        %4187 = vmatpush.bf16.msra.mxu0 %v4025
        %4188 = vmatpush.bf16.msra.mxu0 %v4017
        %4189 = vmatmul.bf16.gmra.mxu0 %v3820
        %v4190 = vpop.f32.mrf.mxu0
        %v4191 = vadd.f32 0.0, %v4190
        %v4192 = vpop.f32.mrf.mxu0
        %4193 = vdwg.mxu0
        %4194 = vmatpush.bf16.msra.mxu0 %v4074
        %4195 = vmatpush.bf16.msra.mxu0 %v4066
        %4196 = vmatpush.bf16.msra.mxu0 %v4058
        %4197 = vmatpush.bf16.msra.mxu0 %v4050
        %4198 = vmatpush.bf16.msra.mxu0 %v4042
        %4199 = vmatpush.bf16.msra.mxu0 %v4034
        %4200 = vmatpush.bf16.msra.mxu0 %v4026
        %4201 = vmatpush.bf16.msra.mxu0 %v4018
        %4202 = vmatmul.bf16.gmra.mxu0 %v3820
        %v4203 = vpop.f32.mrf.mxu0
        %v4204 = vadd.f32 0.0, %v4203
        %v4205 = vpop.f32.mrf.mxu0
        %4206 = vdwg.mxu0
        %4207 = vmatpush.bf16.msra.mxu0 %v4075
        %4208 = vmatpush.bf16.msra.mxu0 %v4067
        %4209 = vmatpush.bf16.msra.mxu0 %v4059
        %4210 = vmatpush.bf16.msra.mxu0 %v4051
        %4211 = vmatpush.bf16.msra.mxu0 %v4043
        %4212 = vmatpush.bf16.msra.mxu0 %v4035
        %4213 = vmatpush.bf16.msra.mxu0 %v4027
        %4214 = vmatpush.bf16.msra.mxu0 %v4019
        %4215 = vmatmul.bf16.gmra.mxu0 %v3820
        %v4216 = vpop.f32.mrf.mxu0
        %v4217 = vadd.f32 0.0, %v4216
        %v4218 = vpop.f32.mrf.mxu0
        %4219 = vdwg.mxu0
        %4220 = vmatpush.bf16.msra.mxu0 %v4076
        %4221 = vmatpush.bf16.msra.mxu0 %v4068
        %4222 = vmatpush.bf16.msra.mxu0 %v4060
        %4223 = vmatpush.bf16.msra.mxu0 %v4052
        %4224 = vmatpush.bf16.msra.mxu0 %v4044
        %4225 = vmatpush.bf16.msra.mxu0 %v4036
        %4226 = vmatpush.bf16.msra.mxu0 %v4028
        %4227 = vmatpush.bf16.msra.mxu0 %v4020
        %4228 = vmatmul.bf16.gmra.mxu0 %v3820
        %v4229 = vpop.f32.mrf.mxu0
        %v4230 = vadd.f32 0.0, %v4229
        %v4231 = vpop.f32.mrf.mxu0
        %4232 = vdwg.mxu0
        %4233 = vmatpush.bf16.msra.mxu0 %v4077
        %4234 = vmatpush.bf16.msra.mxu0 %v4069
        %4235 = vmatpush.bf16.msra.mxu0 %v4061
        %4236 = vmatpush.bf16.msra.mxu0 %v4053
        %4237 = vmatpush.bf16.msra.mxu0 %v4045
        %4238 = vmatpush.bf16.msra.mxu0 %v4037
        %4239 = vmatpush.bf16.msra.mxu0 %v4029
        %4240 = vmatpush.bf16.msra.mxu0 %v4021
        %4241 = vmatmul.bf16.gmra.mxu0 %v3820
        %v4242 = vpop.f32.mrf.mxu0
        %v4243 = vadd.f32 0.0, %v4242
        %v4244 = vpop.f32.mrf.mxu0
        %4245 = vdwg.mxu0
        %v4246 = vadd.f32 %v3747, %v4152
        %v4247 = vadd.f32 %v3748, %v4165
        %v4248 = vadd.f32 %v3749, %v4178
        %v4249 = vadd.f32 %v3750, %v4191
        %v4250 = vadd.f32 %v3751, %v4204
        %v4251 = vadd.f32 %v3752, %v4217
        %v4252 = vadd.f32 %v3753, %v4230
        %v4253 = vadd.f32 %v3754, %v4243
        %s4254 = sld [smem:[#allocation2]]
        %v4255 = vstv %s4254
        %v4256 = vmul.f32 %v4255, %v4246
        %v4257 = vmul.f32 %v4255, %v4247
        %v4258 = vmul.f32 %v4255, %v4248
        %v4259 = vmul.f32 %v4255, %v4249
        %v4260 = vmul.f32 %v4255, %v4250
        %v4261 = vmul.f32 %v4255, %v4251
        %v4262 = vmul.f32 %v4255, %v4252
        %v4263 = vmul.f32 %v4255, %v4253
        %v4272 = vrot.slane %v4257, 7
        %v4273 = vrot.slane %v4258, 6
        %v4274 = vrot.slane %v4259, 5
        %v4275 = vrot.slane %v4260, 4
        %v4276 = vrot.slane %v4261, 3
        %v4277 = vrot.slane %v4262, 2
        %v4278 = vrot.slane %v4263, 1
        %vm4279 = vcmask 1040384
        %v4280 = vsel %vm4279, %v4256, %v4272
        %vm4281 = vcmask 1042434
        %v4282 = vsel %vm4281, %v4273, %v4274
        %vm4283 = vcmask 1041408
        %v4284 = vsel %vm4283, %v4280, %v4282
        %vm4285 = vcmask 1044484
        %v4286 = vsel %vm4285, %v4275, %v4276
        %vm4287 = vcmask 1046534
        %v4288 = vsel %vm4287, %v4277, %v4278
        %vm4289 = vcmask 1045508
        %v4290 = vsel %vm4289, %v4286, %v4288
        %vm4291 = vcmask 1043456
        %v4292 = vsel %vm4291, %v4284, %v4290
        %4294 = vst [vmem:[%s236] sm:$0xff] %v4292
        %s4295 = smul.u32 8, %s20
        %p4296 = scmp.lt.s32.totalorder %s4295, 15
        %s4297 = scalar_select %p4296, %s4295, 15
        %s4298 = scalar_lea.vmem %s4, %s4297
        // Predicated region
        $region45: #{beijing_geometry_with_fbp_forward.1} parent=35 // pred_check
          %p4299 = pneg %p127
        $region46: #{beijing_geometry_with_fbp_forward.1} parent=35 // pred_check_branch
          %4301 = sbr.rel (%p4299) target = $region48
        $region47: #{beijing_geometry_with_fbp_forward.1} parent=35 // pred_region
          %s4302 = smul.u32 8, %s20
        $region48: #{beijing_geometry_with_fbp_forward.1} parent=35 // pred_fallthru
          _
      $region36: #{beijing_geometry_with_fbp_forward.1} parent=5 // pred_fallthru
        _
      %p4303 = scmp.le.s32.totalorder 2, %s15
      // Predicated region
      $region49: #{beijing_geometry_with_fbp_forward.1} parent=5 // pred_check
        %p4304 = pneg %p4303
      $region50: #{beijing_geometry_with_fbp_forward.1} parent=5 // pred_check_branch
        %4306 = sbr.rel (%p4304) target = $region52
      $region51: #{beijing_geometry_with_fbp_forward.1} parent=5 // pred_region
        %s4307 = ssub.s32 %s15, 2
        // Predicated region
        $region53: #{beijing_geometry_with_fbp_forward.1} parent=51 // pred_check
          %p4308 = pneg %p133
        $region54: #{beijing_geometry_with_fbp_forward.1} parent=51 // pred_check_branch
          %4310 = sbr.rel (%p4308) target = $region56
        $region55: #{beijing_geometry_with_fbp_forward.1} parent=51 // pred_region
          %s4311 = smul.u32 8, %s21
          %p4312 = scmp.lt.s32.totalorder %s4311, 15
          %s4313 = scalar_select %p4312, %s4311, 15
          %s4314 = scalar_lea.vmem %s4, %s4313
        $region56: #{beijing_geometry_with_fbp_forward.1} parent=51 // pred_fallthru
          _
      $region52: #{beijing_geometry_with_fbp_forward.1} parent=5 // pred_fallthru
        _
    $region6: #{beijing_geometry_with_fbp_forward.1} parent=1 // loop_footer
      %s19 = sadd.s32 1, %s15
    $region7: #{beijing_geometry_with_fbp_forward.1} parent=1 // loop_footer_branch
      %14 = sbr.rel target = $region3
    $region8: #{beijing_geometry_with_fbp_forward.1} parent=1 // loop_exit
      _
    %4315 = vsyncpa [#allocation4], 1
    %s4316 = scalar_lea.sflag [#allocation4], 1
    %4317 = vsyncpa %s4316, 1
    %4318 = vsyncpa [#allocation6], 1
    %s4319 = scalar_lea.sflag [#allocation6], 1
    %4320 = vsyncpa %s4319, 1

</llo_original>
